<compile_context>
chip_gen: v7x
topology: tpu7x:2x2x1
jax: 0.10.0
libtpu: 0.0.40
codegen_flags: <defaults>
</compile_context>

<pallas_src>
import jax
import jax.numpy as jnp
from jax import lax
from jax.experimental import pallas as pl
from jax.experimental.pallas import tpu as pltpu


def _time_chunk(T, target=8):
    """Largest divisor of T that is <= target (keeps the chunked grid exact)."""
    for c in range(min(T, target), 0, -1):
        if T % c == 0:
            return c
    return T


def _make_lstm_kernel(TC, B, H):
    unroll = min(TC, 8)

    def kernel(gih0_ref,              # (TC, B, 4H)  streamed chunk of x @ W_ih0 + b0
               whh0_ref,              # (H, 4H)      layer-0 recurrent weights
               w1i_ref, w1h_ref,      # (H, 4H) x2   layer-1 input / recurrent weights
               b1_ref,                # (1, 4H)
               wfc_ref, bfc_ref,      # (H, 1), (1, 1)
               out_ref, hn_ref, cn_ref,          # (B, 1), (2, B, H), (2, B, H)
               h0_s, c0_s, h1_s, c1_s):          # persistent (B, H) f32 carries
        t_chunk = pl.program_id(0)

        # Zero the carries only on the first time chunk (matches init_hidden()).
        @pl.when(t_chunk == 0)
        def _():
            h0_s[...] = jnp.zeros_like(h0_s)
            c0_s[...] = jnp.zeros_like(c0_s)
            h1_s[...] = jnp.zeros_like(h1_s)
            c1_s[...] = jnp.zeros_like(c1_s)

        # Weights are VMEM-resident (constant index_map); load once per chunk.
        whh0 = whh0_ref[...]
        w1i = w1i_ref[...]
        w1h = w1h_ref[...]
        b1 = b1_ref[...]
        mxu_dtype = whh0.dtype          # bf16 on the fast path, f32 for validation

        def activations(gates):
            # gate order [i, f, o, g]: one sigmoid over 3H lanes, one tanh over H.
            sg = jax.nn.sigmoid(gates[:, :3 * H])
            g = jnp.tanh(gates[:, 3 * H:])
            return sg[:, 0 * H:1 * H], sg[:, 1 * H:2 * H], sg[:, 2 * H:3 * H], g

        def step(t, carry):
            h0, c0, h1, c1 = carry
            # ---- layer 0: input projection hoisted; only the recurrent dot remains.
            g0 = gih0_ref[t] + jnp.dot(h0.astype(mxu_dtype), whh0,
                                       preferred_element_type=jnp.float32)
            i0, f0, o0, gg0 = activations(g0)
            c0 = f0 * c0 + i0 * gg0
            h0 = o0 * jnp.tanh(c0)
            # ---- layer 1: two pipelined dots (no per-step concatenate).
            g1 = (jnp.dot(h0.astype(mxu_dtype), w1i, preferred_element_type=jnp.float32)
                  + jnp.dot(h1.astype(mxu_dtype), w1h, preferred_element_type=jnp.float32)
                  + b1)
            i1, f1, o1, gg1 = activations(g1)
            c1 = f1 * c1 + i1 * gg1
            h1 = o1 * jnp.tanh(c1)
            return h0, c0, h1, c1

        carry0 = (h0_s[...], c0_s[...], h1_s[...], c1_s[...])
        h0, c0, h1, c1 = lax.fori_loop(0, TC, step, carry0, unroll=unroll)

        h0_s[...] = h0
        c0_s[...] = c0
        h1_s[...] = h1
        c1_s[...] = c1

        # out = fc(relu(out[:, -1])); only meaningful after the final chunk.
        @pl.when(t_chunk == pl.num_programs(0) - 1)
        def _():
            y = jnp.dot(jnp.maximum(h1, 0.0), wfc_ref[...],
                        preferred_element_type=jnp.float32) + bfc_ref[...]
            out_ref[...] = y.astype(out_ref.dtype)
            hn_ref[0] = h0.astype(hn_ref.dtype)
            hn_ref[1] = h1.astype(hn_ref.dtype)
            cn_ref[0] = c0.astype(cn_ref.dtype)
            cn_ref[1] = c1.astype(cn_ref.dtype)

    return kernel


def lstm_net_forward(x_btd, kp):
    """x_btd: (B, T, D) float32, batch_first like the PyTorch module.
    kp: kernel-layout params from prepare_kernel_params().
    Returns (out (B, 1), (h_n (2, B, H), c_n (2, B, H)))."""
    B, T, D = x_btd.shape
    H = kp["whh0"].shape[0]
    TC = _time_chunk(T)
    n_chunks = T // TC

    # Hoisted layer-0 input projection: one big MXU matmul outside the recurrence.
    # (Kept f32 so the accumulate into the recurrent dot is exact; store in bf16 to
    #  halve streamed DMA bytes if HBM traffic ever matters.)
    x_tbd = jnp.transpose(x_btd, (1, 0, 2))                        # (T, B, D)
    gih0 = (x_tbd.reshape(T * B, D) @ kp["wih0"] + kp["b0"]).reshape(T, B, 4 * H)

    out_shapes = (
        jax.ShapeDtypeStruct((B, 1), jnp.float32),
        jax.ShapeDtypeStruct((2, B, H), jnp.float32),
        jax.ShapeDtypeStruct((2, B, H), jnp.float32),
    )

    grid_spec = pltpu.PrefetchScalarGridSpec(
        num_scalar_prefetch=0,
        grid=(n_chunks,),
        in_specs=[
            # Streamed time chunks: chunk k+1 prefetched behind the recurrence on k.
            pl.BlockSpec((TC, B, 4 * H), lambda t: (t, 0, 0)),
            # Weights: constant index_map -> fetched once, VMEM-resident.
            pl.BlockSpec((H, 4 * H), lambda t: (0, 0)),      # whh0
            pl.BlockSpec((H, 4 * H), lambda t: (0, 0)),      # w1_ih
            pl.BlockSpec((H, 4 * H), lambda t: (0, 0)),      # w1_hh
            pl.BlockSpec((1, 4 * H), lambda t: (0, 0)),      # b1
            pl.BlockSpec((H, 1), lambda t: (0, 0)),          # wfc
            pl.BlockSpec((1, 1), lambda t: (0, 0)),          # bfc
        ],
        out_specs=[
            pl.BlockSpec((B, 1), lambda t: (0, 0)),
            pl.BlockSpec((2, B, H), lambda t: (0, 0, 0)),
            pl.BlockSpec((2, B, H), lambda t: (0, 0, 0)),
        ],
        scratch_shapes=[pltpu.VMEM((B, H), jnp.float32)] * 4,   # h0, c0, h1, c1
    )

    out, hn, cn = pl.pallas_call(
        _make_lstm_kernel(TC, B, H),
        out_shape=out_shapes,
        grid_spec=grid_spec,
        compiler_params=pltpu.CompilerParams(
            dimension_semantics=("arbitrary",),        # serial recurrence over chunks
            vmem_limit_bytes=64 * 1024 * 1024,
        ),
    )(gih0, kp["whh0"], kp["w1i"], kp["w1h"], kp["b1"], kp["wfc"], kp["bfc"])
    return out, (hn, cn)


def init_params(key, input_dim, hidden_dim, output_dim):
    """PyTorch-style parameters: gate order (i, f, g, o), U(-1/sqrt(H), 1/sqrt(H))."""
    H, D = hidden_dim, input_dim
    bound = 1.0 / jnp.sqrt(jnp.float32(H))
    ks = jax.random.split(key, 10)
    u = lambda k, s: jax.random.uniform(k, s, jnp.float32, -bound, bound)  # noqa: E731
    return {
        "w_ih_l0": u(ks[0], (4 * H, D)), "w_hh_l0": u(ks[1], (4 * H, H)),
        "b_ih_l0": u(ks[2], (4 * H,)),   "b_hh_l0": u(ks[3], (4 * H,)),
        "w_ih_l1": u(ks[4], (4 * H, H)), "w_hh_l1": u(ks[5], (4 * H, H)),
        "b_ih_l1": u(ks[6], (4 * H,)),   "b_hh_l1": u(ks[7], (4 * H,)),
        "w_fc": u(ks[8], (output_dim, H)), "b_fc": u(ks[9], (output_dim,)),
    }


def prepare_kernel_params(p, compute_dtype=jnp.bfloat16):
    """PyTorch-style params -> kernel layout:
    gate order permuted (i,f,g,o) -> (i,f,o,g), weights transposed to (K, 4H),
    b_ih + b_hh folded, layer-1 weights kept split (no in-kernel concat),
    recurrent weights stored in compute_dtype (bf16 for the MXU fast path)."""
    def permute_gates(a):            # permute blocks along the 4H axis (axis 0)
        i, f, g, o = jnp.split(a, 4, axis=0)
        return jnp.concatenate([i, f, o, g], axis=0)

    wih0 = permute_gates(p["w_ih_l0"]).T                                   # (D, 4H) f32
    whh0 = permute_gates(p["w_hh_l0"]).T.astype(compute_dtype)             # (H, 4H)
    b0 = permute_gates(p["b_ih_l0"] + p["b_hh_l0"])[None, :]               # (1, 4H)
    w1i = permute_gates(p["w_ih_l1"]).T.astype(compute_dtype)              # (H, 4H)
    w1h = permute_gates(p["w_hh_l1"]).T.astype(compute_dtype)              # (H, 4H)
    b1 = permute_gates(p["b_ih_l1"] + p["b_hh_l1"])[None, :]               # (1, 4H)
    return {"wih0": wih0, "b0": b0, "whh0": whh0,
            "w1i": w1i, "w1h": w1h, "b1": b1,
            "wfc": p["w_fc"].T, "bfc": p["b_fc"][None, :]}


def _reference(x_btd, p, H):
    """Pure-JAX reference with PyTorch semantics (gate order i, f, g, o)."""
    B, T, D = x_btd.shape

    def cell(x, h, c, wih, whh, b):
        g = x @ wih.T + h @ whh.T + b
        i = jax.nn.sigmoid(g[:, 0 * H:1 * H])
        f = jax.nn.sigmoid(g[:, 1 * H:2 * H])
        gg = jnp.tanh(g[:, 2 * H:3 * H])
        o = jax.nn.sigmoid(g[:, 3 * H:4 * H])
        c = f * c + i * gg
        h = o * jnp.tanh(c)
        return h, c

    b0 = p["b_ih_l0"] + p["b_hh_l0"]
    b1 = p["b_ih_l1"] + p["b_hh_l1"]
    h0 = c0 = h1 = c1 = jnp.zeros((B, H), jnp.float32)
    for t in range(T):
        h0, c0 = cell(x_btd[:, t], h0, c0, p["w_ih_l0"], p["w_hh_l0"], b0)
        h1, c1 = cell(h0, h1, c1, p["w_ih_l1"], p["w_hh_l1"], b1)
    out = jnp.maximum(h1, 0.0) @ p["w_fc"].T + p["b_fc"]
    return out, (jnp.stack([h0, h1]), jnp.stack([c0, c1]))


if __name__ == "__main__":
    # B=8 fills vreg sublanes, H=128 makes all gate slices lane-aligned,
    # T=16 exercises the 2-chunk streamed grid (TC=8).
    B, T, D, H, O = 8, 16, 4, 128, 1
    key = jax.random.PRNGKey(0)
    k_x, k_p = jax.random.split(key)
    x = jax.random.normal(k_x, (B, T, D), jnp.float32)
    raw_params = init_params(k_p, D, H, O)

    fwd = jax.jit(lstm_net_forward)
    ref_out, (ref_hn, ref_cn) = _reference(x, raw_params, H)

    # f32 validation path: strict tolerance.
    kp_f32 = prepare_kernel_params(raw_params, compute_dtype=jnp.float32)
    out32, (hn32, cn32) = fwd(x, kp_f32)
    jax.block_until_ready((out32, hn32, cn32))
    assert jnp.allclose(out32, ref_out, atol=1e-4, rtol=1e-4)
    assert jnp.allclose(hn32, ref_hn, atol=1e-4, rtol=1e-4)
    assert jnp.allclose(cn32, ref_cn, atol=1e-4, rtol=1e-4)

    # bf16 MXU fast path: looser tolerance (bf16 dot operands).
    kp_bf16 = prepare_kernel_params(raw_params, compute_dtype=jnp.bfloat16)
    out16, (hn16, cn16) = fwd(x, kp_bf16)
    jax.block_until_ready((out16, hn16, cn16))
    assert jnp.allclose(out16, ref_out, atol=5e-2, rtol=5e-2)
    assert jnp.allclose(hn16, ref_hn, atol=5e-2, rtol=5e-2)
    assert jnp.allclose(cn16, ref_cn, atol=5e-2, rtol=5e-2)

    print("KERNEL_OK")
</pallas_src>

<mosaic_0001>
module attributes {stable_mosaic.version = 11 : i64} {
  func.func @kernel(%arg0: i32, %arg1: memref<8x8x512xf32, #tpu.memory_space<vmem>>, %arg2: memref<128x512xf32, #tpu.memory_space<vmem>>, %arg3: memref<128x512xf32, #tpu.memory_space<vmem>>, %arg4: memref<128x512xf32, #tpu.memory_space<vmem>>, %arg5: memref<1x512xf32, #tpu.memory_space<vmem>>, %arg6: memref<128x1xf32, #tpu.memory_space<vmem>>, %arg7: memref<1x1xf32, #tpu.memory_space<vmem>>, %arg8: memref<8x1xf32, #tpu.memory_space<vmem>>, %arg9: memref<2x8x128xf32, #tpu.memory_space<vmem>>, %arg10: memref<2x8x128xf32, #tpu.memory_space<vmem>>, %arg11: memref<8x128xf32, #tpu.memory_space<vmem>>, %arg12: memref<8x128xf32, #tpu.memory_space<vmem>>, %arg13: memref<8x128xf32, #tpu.memory_space<vmem>>, %arg14: memref<8x128xf32, #tpu.memory_space<vmem>>) attributes {dimension_semantics = [#tpu.dimension_semantics<arbitrary>], iteration_bounds = array<i64: 2>, scalar_prefetch = 0 : i64, scratch_operands = 4 : i64, tpu.core_type = #tpu.core_type<tc>, window_params = [{transform_indices = @transform_0, window_bounds = array<i64: 8, 8, 512>}, {pipeline_mode = #tpu.pipeline_mode<synchronous>, transform_indices = @transform_1, window_bounds = array<i64: 128, 512>}, {pipeline_mode = #tpu.pipeline_mode<synchronous>, transform_indices = @transform_2, window_bounds = array<i64: 128, 512>}, {pipeline_mode = #tpu.pipeline_mode<synchronous>, transform_indices = @transform_3, window_bounds = array<i64: 128, 512>}, {pipeline_mode = #tpu.pipeline_mode<synchronous>, transform_indices = @transform_4, window_bounds = array<i64: 1, 512>}, {pipeline_mode = #tpu.pipeline_mode<synchronous>, transform_indices = @transform_5, window_bounds = array<i64: 128, 1>}, {pipeline_mode = #tpu.pipeline_mode<synchronous>, transform_indices = @transform_6, window_bounds = array<i64: 1, 1>}, {pipeline_mode = #tpu.pipeline_mode<synchronous>, transform_indices = @transform_7, window_bounds = array<i64: 8, 1>}, {pipeline_mode = #tpu.pipeline_mode<synchronous>, transform_indices = @transform_8, window_bounds = array<i64: 2, 8, 128>}, {pipeline_mode = #tpu.pipeline_mode<synchronous>, transform_indices = @transform_9, window_bounds = array<i64: 2, 8, 128>}]} {
    %c0_i32 = arith.constant 0 : i32
    %0 = arith.cmpi eq, %arg0, %c0_i32 : i32
    %1 = arith.extui %0 : i1 to i32
    %c0_i32_0 = arith.constant 0 : i32
    %2 = arith.cmpi ne, %1, %c0_i32_0 : i32
    scf.if %2 {
      %cst_82 = arith.constant 0.000000e+00 : f32
      %354 = vector.broadcast %cst_82 : f32 to vector<8x128xf32>
      %c0_83 = arith.constant 0 : index
      %c0_84 = arith.constant 0 : index
      %355 = vector.load %arg11[%c0_83, %c0_84] : memref<8x128xf32, #tpu.memory_space<vmem>>, vector<8x128xf32>
      tpu.vector_store %arg11[%c0_83, %c0_84], %354 {strides = array<i32>} : memref<8x128xf32, #tpu.memory_space<vmem>>, vector<8x128xf32>,
      %cst_85 = arith.constant 0.000000e+00 : f32
      %356 = vector.broadcast %cst_85 : f32 to vector<8x128xf32>
      %c0_86 = arith.constant 0 : index
      %c0_87 = arith.constant 0 : index
      %357 = vector.load %arg12[%c0_86, %c0_87] : memref<8x128xf32, #tpu.memory_space<vmem>>, vector<8x128xf32>
      tpu.vector_store %arg12[%c0_86, %c0_87], %356 {strides = array<i32>} : memref<8x128xf32, #tpu.memory_space<vmem>>, vector<8x128xf32>,
      %cst_88 = arith.constant 0.000000e+00 : f32
      %358 = vector.broadcast %cst_88 : f32 to vector<8x128xf32>
      %c0_89 = arith.constant 0 : index
      %c0_90 = arith.constant 0 : index
      %359 = vector.load %arg13[%c0_89, %c0_90] : memref<8x128xf32, #tpu.memory_space<vmem>>, vector<8x128xf32>
      tpu.vector_store %arg13[%c0_89, %c0_90], %358 {strides = array<i32>} : memref<8x128xf32, #tpu.memory_space<vmem>>, vector<8x128xf32>,
      %cst_91 = arith.constant 0.000000e+00 : f32
      %360 = vector.broadcast %cst_91 : f32 to vector<8x128xf32>
      %c0_92 = arith.constant 0 : index
      %c0_93 = arith.constant 0 : index
      %361 = vector.load %arg14[%c0_92, %c0_93] : memref<8x128xf32, #tpu.memory_space<vmem>>, vector<8x128xf32>
      tpu.vector_store %arg14[%c0_92, %c0_93], %360 {strides = array<i32>} : memref<8x128xf32, #tpu.memory_space<vmem>>, vector<8x128xf32>,
    } else {
    }
    %c0 = arith.constant 0 : index
    %c0_1 = arith.constant 0 : index
    %3 = vector.load %arg2[%c0, %c0_1] : memref<128x512xf32, #tpu.memory_space<vmem>>, vector<128x512xf32>
    %c0_2 = arith.constant 0 : index
    %c0_3 = arith.constant 0 : index
    %4 = vector.load %arg3[%c0_2, %c0_3] : memref<128x512xf32, #tpu.memory_space<vmem>>, vector<128x512xf32>
    %c0_4 = arith.constant 0 : index
    %c0_5 = arith.constant 0 : index
    %5 = vector.load %arg4[%c0_4, %c0_5] : memref<128x512xf32, #tpu.memory_space<vmem>>, vector<128x512xf32>
    %c0_6 = arith.constant 0 : index
    %c0_7 = arith.constant 0 : index
    %6 = vector.load %arg5[%c0_6, %c0_7] : memref<1x512xf32, #tpu.memory_space<vmem>>, vector<1x512xf32>
    %c0_8 = arith.constant 0 : index
    %c0_9 = arith.constant 0 : index
    %7 = vector.load %arg11[%c0_8, %c0_9] : memref<8x128xf32, #tpu.memory_space<vmem>>, vector<8x128xf32>
    %c0_10 = arith.constant 0 : index
    %c0_11 = arith.constant 0 : index
    %8 = vector.load %arg12[%c0_10, %c0_11] : memref<8x128xf32, #tpu.memory_space<vmem>>, vector<8x128xf32>
    %c0_12 = arith.constant 0 : index
    %c0_13 = arith.constant 0 : index
    %9 = vector.load %arg13[%c0_12, %c0_13] : memref<8x128xf32, #tpu.memory_space<vmem>>, vector<8x128xf32>
    %c0_14 = arith.constant 0 : index
    %c0_15 = arith.constant 0 : index
    %10 = vector.load %arg14[%c0_14, %c0_15] : memref<8x128xf32, #tpu.memory_space<vmem>>, vector<8x128xf32>
    %c0_i32_16 = arith.constant 0 : i32
    %11 = arith.index_cast %c0_i32_16 : i32 to index
    %c0_17 = arith.constant 0 : index
    %c0_18 = arith.constant 0 : index
    %12 = vector.load %arg1[%11, %c0_17, %c0_18] : memref<8x8x512xf32, #tpu.memory_space<vmem>>, vector<1x8x512xf32>
    %13 = vector.shape_cast %12 : vector<1x8x512xf32> to vector<8x512xf32>
    %cst = arith.constant dense<0.000000e+00> : vector<8x512xf32>
    %14 = tpu.matmul %7, %3, %cst {dimension_numbers = #tpu.dot_dimension_numbers<[1], [0], [0], [1], [0, 0, 1, 1], [], []>} : vector<8x128xf32>, vector<128x512xf32>, vector<8x512xf32> -> vector<8x512xf32>
    %15 = arith.addf %13, %14 : vector<8x512xf32>
    %16 = vector.extract_strided_slice %15 {offsets = [0, 0], sizes = [8, 384], strides = [1, 1]} : vector<8x512xf32> to vector<8x384xf32>
    %17 = arith.negf %16 : vector<8x384xf32>
    %18 = math.exp %17 : vector<8x384xf32>
    %cst_19 = arith.constant 1.000000e+00 : f32
    %19 = vector.broadcast %cst_19 : f32 to vector<8x384xf32>
    %20 = arith.addf %19, %18 : vector<8x384xf32>
    %21 = arith.divf %19, %20 : vector<8x384xf32>
    %22 = vector.extract_strided_slice %15 {offsets = [0, 384], sizes = [8, 128], strides = [1, 1]} : vector<8x512xf32> to vector<8x128xf32>
    %23 = math.tanh %22 : vector<8x128xf32>
    %24 = vector.extract_strided_slice %21 {offsets = [0, 0], sizes = [8, 128], strides = [1, 1]} : vector<8x384xf32> to vector<8x128xf32>
    %25 = vector.extract_strided_slice %21 {offsets = [0, 128], sizes = [8, 128], strides = [1, 1]} : vector<8x384xf32> to vector<8x128xf32>
    %26 = vector.extract_strided_slice %21 {offsets = [0, 256], sizes = [8, 128], strides = [1, 1]} : vector<8x384xf32> to vector<8x128xf32>
    %27 = arith.mulf %25, %8 : vector<8x128xf32>
    %28 = arith.mulf %24, %23 : vector<8x128xf32>
    %29 = arith.addf %27, %28 : vector<8x128xf32>
    %30 = math.tanh %29 : vector<8x128xf32>
    %31 = arith.mulf %26, %30 : vector<8x128xf32>
    %cst_20 = arith.constant dense<0.000000e+00> : vector<8x512xf32>
    %32 = tpu.matmul %31, %4, %cst_20 {dimension_numbers = #tpu.dot_dimension_numbers<[1], [0], [0], [1], [0, 0, 1, 1], [], []>} : vector<8x128xf32>, vector<128x512xf32>, vector<8x512xf32> -> vector<8x512xf32>
    %cst_21 = arith.constant dense<0.000000e+00> : vector<8x512xf32>
    %33 = tpu.matmul %9, %5, %cst_21 {dimension_numbers = #tpu.dot_dimension_numbers<[1], [0], [0], [1], [0, 0, 1, 1], [], []>} : vector<8x128xf32>, vector<128x512xf32>, vector<8x512xf32> -> vector<8x512xf32>
    %34 = arith.addf %32, %33 : vector<8x512xf32>
    %35 = vector.broadcast %6 : vector<1x512xf32> to vector<8x512xf32>
    %36 = arith.addf %34, %35 : vector<8x512xf32>
    %37 = vector.extract_strided_slice %36 {offsets = [0, 0], sizes = [8, 384], strides = [1, 1]} : vector<8x512xf32> to vector<8x384xf32>
    %38 = arith.negf %37 : vector<8x384xf32>
    %39 = math.exp %38 : vector<8x384xf32>
    %cst_22 = arith.constant 1.000000e+00 : f32
    %40 = vector.broadcast %cst_22 : f32 to vector<8x384xf32>
    %41 = arith.addf %40, %39 : vector<8x384xf32>
    %42 = arith.divf %40, %41 : vector<8x384xf32>
    %43 = vector.extract_strided_slice %36 {offsets = [0, 384], sizes = [8, 128], strides = [1, 1]} : vector<8x512xf32> to vector<8x128xf32>
    %44 = math.tanh %43 : vector<8x128xf32>
    %45 = vector.extract_strided_slice %42 {offsets = [0, 0], sizes = [8, 128], strides = [1, 1]} : vector<8x384xf32> to vector<8x128xf32>
    %46 = vector.extract_strided_slice %42 {offsets = [0, 128], sizes = [8, 128], strides = [1, 1]} : vector<8x384xf32> to vector<8x128xf32>
    %47 = vector.extract_strided_slice %42 {offsets = [0, 256], sizes = [8, 128], strides = [1, 1]} : vector<8x384xf32> to vector<8x128xf32>
    %48 = arith.mulf %46, %10 : vector<8x128xf32>
    %49 = arith.mulf %45, %44 : vector<8x128xf32>
    %50 = arith.addf %48, %49 : vector<8x128xf32>
    %51 = math.tanh %50 : vector<8x128xf32>
    %52 = arith.mulf %47, %51 : vector<8x128xf32>
    %c1_i32 = arith.constant 1 : i32
    %53 = arith.index_cast %c1_i32 : i32 to index
    %c0_23 = arith.constant 0 : index
    %c0_24 = arith.constant 0 : index
    %54 = vector.load %arg1[%53, %c0_23, %c0_24] : memref<8x8x512xf32, #tpu.memory_space<vmem>>, vector<1x8x512xf32>
    %55 = vector.shape_cast %54 : vector<1x8x512xf32> to vector<8x512xf32>
    %cst_25 = arith.constant dense<0.000000e+00> : vector<8x512xf32>
    %56 = tpu.matmul %31, %3, %cst_25 {dimension_numbers = #tpu.dot_dimension_numbers<[1], [0], [0], [1], [0, 0, 1, 1], [], []>} : vector<8x128xf32>, vector<128x512xf32>, vector<8x512xf32> -> vector<8x512xf32>
    %57 = arith.addf %55, %56 : vector<8x512xf32>
    %58 = vector.extract_strided_slice %57 {offsets = [0, 0], sizes = [8, 384], strides = [1, 1]} : vector<8x512xf32> to vector<8x384xf32>
    %59 = arith.negf %58 : vector<8x384xf32>
    %60 = math.exp %59 : vector<8x384xf32>
    %cst_26 = arith.constant 1.000000e+00 : f32
    %61 = vector.broadcast %cst_26 : f32 to vector<8x384xf32>
    %62 = arith.addf %61, %60 : vector<8x384xf32>
    %63 = arith.divf %61, %62 : vector<8x384xf32>
    %64 = vector.extract_strided_slice %57 {offsets = [0, 384], sizes = [8, 128], strides = [1, 1]} : vector<8x512xf32> to vector<8x128xf32>
    %65 = math.tanh %64 : vector<8x128xf32>
    %66 = vector.extract_strided_slice %63 {offsets = [0, 0], sizes = [8, 128], strides = [1, 1]} : vector<8x384xf32> to vector<8x128xf32>
    %67 = vector.extract_strided_slice %63 {offsets = [0, 128], sizes = [8, 128], strides = [1, 1]} : vector<8x384xf32> to vector<8x128xf32>
    %68 = vector.extract_strided_slice %63 {offsets = [0, 256], sizes = [8, 128], strides = [1, 1]} : vector<8x384xf32> to vector<8x128xf32>
    %69 = arith.mulf %67, %29 : vector<8x128xf32>
    %70 = arith.mulf %66, %65 : vector<8x128xf32>
    %71 = arith.addf %69, %70 : vector<8x128xf32>
    %72 = math.tanh %71 : vector<8x128xf32>
    %73 = arith.mulf %68, %72 : vector<8x128xf32>
    %cst_27 = arith.constant dense<0.000000e+00> : vector<8x512xf32>
    %74 = tpu.matmul %73, %4, %cst_27 {dimension_numbers = #tpu.dot_dimension_numbers<[1], [0], [0], [1], [0, 0, 1, 1], [], []>} : vector<8x128xf32>, vector<128x512xf32>, vector<8x512xf32> -> vector<8x512xf32>
    %cst_28 = arith.constant dense<0.000000e+00> : vector<8x512xf32>
    %75 = tpu.matmul %52, %5, %cst_28 {dimension_numbers = #tpu.dot_dimension_numbers<[1], [0], [0], [1], [0, 0, 1, 1], [], []>} : vector<8x128xf32>, vector<128x512xf32>, vector<8x512xf32> -> vector<8x512xf32>
    %76 = arith.addf %74, %75 : vector<8x512xf32>
    %77 = vector.broadcast %6 : vector<1x512xf32> to vector<8x512xf32>
    %78 = arith.addf %76, %77 : vector<8x512xf32>
    %79 = vector.extract_strided_slice %78 {offsets = [0, 0], sizes = [8, 384], strides = [1, 1]} : vector<8x512xf32> to vector<8x384xf32>
    %80 = arith.negf %79 : vector<8x384xf32>
    %81 = math.exp %80 : vector<8x384xf32>
    %cst_29 = arith.constant 1.000000e+00 : f32
    %82 = vector.broadcast %cst_29 : f32 to vector<8x384xf32>
    %83 = arith.addf %82, %81 : vector<8x384xf32>
    %84 = arith.divf %82, %83 : vector<8x384xf32>
    %85 = vector.extract_strided_slice %78 {offsets = [0, 384], sizes = [8, 128], strides = [1, 1]} : vector<8x512xf32> to vector<8x128xf32>
    %86 = math.tanh %85 : vector<8x128xf32>
    %87 = vector.extract_strided_slice %84 {offsets = [0, 0], sizes = [8, 128], strides = [1, 1]} : vector<8x384xf32> to vector<8x128xf32>
    %88 = vector.extract_strided_slice %84 {offsets = [0, 128], sizes = [8, 128], strides = [1, 1]} : vector<8x384xf32> to vector<8x128xf32>
    %89 = vector.extract_strided_slice %84 {offsets = [0, 256], sizes = [8, 128], strides = [1, 1]} : vector<8x384xf32> to vector<8x128xf32>
    %90 = arith.mulf %88, %50 : vector<8x128xf32>
    %91 = arith.mulf %87, %86 : vector<8x128xf32>
    %92 = arith.addf %90, %91 : vector<8x128xf32>
    %93 = math.tanh %92 : vector<8x128xf32>
    %94 = arith.mulf %89, %93 : vector<8x128xf32>
    %c2_i32 = arith.constant 2 : i32
    %95 = arith.index_cast %c2_i32 : i32 to index
    %c0_30 = arith.constant 0 : index
    %c0_31 = arith.constant 0 : index
    %96 = vector.load %arg1[%95, %c0_30, %c0_31] : memref<8x8x512xf32, #tpu.memory_space<vmem>>, vector<1x8x512xf32>
    %97 = vector.shape_cast %96 : vector<1x8x512xf32> to vector<8x512xf32>
    %cst_32 = arith.constant dense<0.000000e+00> : vector<8x512xf32>
    %98 = tpu.matmul %73, %3, %cst_32 {dimension_numbers = #tpu.dot_dimension_numbers<[1], [0], [0], [1], [0, 0, 1, 1], [], []>} : vector<8x128xf32>, vector<128x512xf32>, vector<8x512xf32> -> vector<8x512xf32>
    %99 = arith.addf %97, %98 : vector<8x512xf32>
    %100 = vector.extract_strided_slice %99 {offsets = [0, 0], sizes = [8, 384], strides = [1, 1]} : vector<8x512xf32> to vector<8x384xf32>
    %101 = arith.negf %100 : vector<8x384xf32>
    %102 = math.exp %101 : vector<8x384xf32>
    %cst_33 = arith.constant 1.000000e+00 : f32
    %103 = vector.broadcast %cst_33 : f32 to vector<8x384xf32>
    %104 = arith.addf %103, %102 : vector<8x384xf32>
    %105 = arith.divf %103, %104 : vector<8x384xf32>
    %106 = vector.extract_strided_slice %99 {offsets = [0, 384], sizes = [8, 128], strides = [1, 1]} : vector<8x512xf32> to vector<8x128xf32>
    %107 = math.tanh %106 : vector<8x128xf32>
    %108 = vector.extract_strided_slice %105 {offsets = [0, 0], sizes = [8, 128], strides = [1, 1]} : vector<8x384xf32> to vector<8x128xf32>
    %109 = vector.extract_strided_slice %105 {offsets = [0, 128], sizes = [8, 128], strides = [1, 1]} : vector<8x384xf32> to vector<8x128xf32>
    %110 = vector.extract_strided_slice %105 {offsets = [0, 256], sizes = [8, 128], strides = [1, 1]} : vector<8x384xf32> to vector<8x128xf32>
    %111 = arith.mulf %109, %71 : vector<8x128xf32>
    %112 = arith.mulf %108, %107 : vector<8x128xf32>
    %113 = arith.addf %111, %112 : vector<8x128xf32>
    %114 = math.tanh %113 : vector<8x128xf32>
    %115 = arith.mulf %110, %114 : vector<8x128xf32>
    %cst_34 = arith.constant dense<0.000000e+00> : vector<8x512xf32>
    %116 = tpu.matmul %115, %4, %cst_34 {dimension_numbers = #tpu.dot_dimension_numbers<[1], [0], [0], [1], [0, 0, 1, 1], [], []>} : vector<8x128xf32>, vector<128x512xf32>, vector<8x512xf32> -> vector<8x512xf32>
    %cst_35 = arith.constant dense<0.000000e+00> : vector<8x512xf32>
    %117 = tpu.matmul %94, %5, %cst_35 {dimension_numbers = #tpu.dot_dimension_numbers<[1], [0], [0], [1], [0, 0, 1, 1], [], []>} : vector<8x128xf32>, vector<128x512xf32>, vector<8x512xf32> -> vector<8x512xf32>
    %118 = arith.addf %116, %117 : vector<8x512xf32>
    %119 = vector.broadcast %6 : vector<1x512xf32> to vector<8x512xf32>
    %120 = arith.addf %118, %119 : vector<8x512xf32>
    %121 = vector.extract_strided_slice %120 {offsets = [0, 0], sizes = [8, 384], strides = [1, 1]} : vector<8x512xf32> to vector<8x384xf32>
    %122 = arith.negf %121 : vector<8x384xf32>
    %123 = math.exp %122 : vector<8x384xf32>
    %cst_36 = arith.constant 1.000000e+00 : f32
    %124 = vector.broadcast %cst_36 : f32 to vector<8x384xf32>
    %125 = arith.addf %124, %123 : vector<8x384xf32>
    %126 = arith.divf %124, %125 : vector<8x384xf32>
    %127 = vector.extract_strided_slice %120 {offsets = [0, 384], sizes = [8, 128], strides = [1, 1]} : vector<8x512xf32> to vector<8x128xf32>
    %128 = math.tanh %127 : vector<8x128xf32>
    %129 = vector.extract_strided_slice %126 {offsets = [0, 0], sizes = [8, 128], strides = [1, 1]} : vector<8x384xf32> to vector<8x128xf32>
    %130 = vector.extract_strided_slice %126 {offsets = [0, 128], sizes = [8, 128], strides = [1, 1]} : vector<8x384xf32> to vector<8x128xf32>
    %131 = vector.extract_strided_slice %126 {offsets = [0, 256], sizes = [8, 128], strides = [1, 1]} : vector<8x384xf32> to vector<8x128xf32>
    %132 = arith.mulf %130, %92 : vector<8x128xf32>
    %133 = arith.mulf %129, %128 : vector<8x128xf32>
    %134 = arith.addf %132, %133 : vector<8x128xf32>
    %135 = math.tanh %134 : vector<8x128xf32>
    %136 = arith.mulf %131, %135 : vector<8x128xf32>
    %c3_i32 = arith.constant 3 : i32
    %137 = arith.index_cast %c3_i32 : i32 to index
    %c0_37 = arith.constant 0 : index
    %c0_38 = arith.constant 0 : index
    %138 = vector.load %arg1[%137, %c0_37, %c0_38] : memref<8x8x512xf32, #tpu.memory_space<vmem>>, vector<1x8x512xf32>
    %139 = vector.shape_cast %138 : vector<1x8x512xf32> to vector<8x512xf32>
    %cst_39 = arith.constant dense<0.000000e+00> : vector<8x512xf32>
    %140 = tpu.matmul %115, %3, %cst_39 {dimension_numbers = #tpu.dot_dimension_numbers<[1], [0], [0], [1], [0, 0, 1, 1], [], []>} : vector<8x128xf32>, vector<128x512xf32>, vector<8x512xf32> -> vector<8x512xf32>
    %141 = arith.addf %139, %140 : vector<8x512xf32>
    %142 = vector.extract_strided_slice %141 {offsets = [0, 0], sizes = [8, 384], strides = [1, 1]} : vector<8x512xf32> to vector<8x384xf32>
    %143 = arith.negf %142 : vector<8x384xf32>
    %144 = math.exp %143 : vector<8x384xf32>
    %cst_40 = arith.constant 1.000000e+00 : f32
    %145 = vector.broadcast %cst_40 : f32 to vector<8x384xf32>
    %146 = arith.addf %145, %144 : vector<8x384xf32>
    %147 = arith.divf %145, %146 : vector<8x384xf32>
    %148 = vector.extract_strided_slice %141 {offsets = [0, 384], sizes = [8, 128], strides = [1, 1]} : vector<8x512xf32> to vector<8x128xf32>
    %149 = math.tanh %148 : vector<8x128xf32>
    %150 = vector.extract_strided_slice %147 {offsets = [0, 0], sizes = [8, 128], strides = [1, 1]} : vector<8x384xf32> to vector<8x128xf32>
    %151 = vector.extract_strided_slice %147 {offsets = [0, 128], sizes = [8, 128], strides = [1, 1]} : vector<8x384xf32> to vector<8x128xf32>
    %152 = vector.extract_strided_slice %147 {offsets = [0, 256], sizes = [8, 128], strides = [1, 1]} : vector<8x384xf32> to vector<8x128xf32>
    %153 = arith.mulf %151, %113 : vector<8x128xf32>
    %154 = arith.mulf %150, %149 : vector<8x128xf32>
    %155 = arith.addf %153, %154 : vector<8x128xf32>
    %156 = math.tanh %155 : vector<8x128xf32>
    %157 = arith.mulf %152, %156 : vector<8x128xf32>
    %cst_41 = arith.constant dense<0.000000e+00> : vector<8x512xf32>
    %158 = tpu.matmul %157, %4, %cst_41 {dimension_numbers = #tpu.dot_dimension_numbers<[1], [0], [0], [1], [0, 0, 1, 1], [], []>} : vector<8x128xf32>, vector<128x512xf32>, vector<8x512xf32> -> vector<8x512xf32>
    %cst_42 = arith.constant dense<0.000000e+00> : vector<8x512xf32>
    %159 = tpu.matmul %136, %5, %cst_42 {dimension_numbers = #tpu.dot_dimension_numbers<[1], [0], [0], [1], [0, 0, 1, 1], [], []>} : vector<8x128xf32>, vector<128x512xf32>, vector<8x512xf32> -> vector<8x512xf32>
    %160 = arith.addf %158, %159 : vector<8x512xf32>
    %161 = vector.broadcast %6 : vector<1x512xf32> to vector<8x512xf32>
    %162 = arith.addf %160, %161 : vector<8x512xf32>
    %163 = vector.extract_strided_slice %162 {offsets = [0, 0], sizes = [8, 384], strides = [1, 1]} : vector<8x512xf32> to vector<8x384xf32>
    %164 = arith.negf %163 : vector<8x384xf32>
    %165 = math.exp %164 : vector<8x384xf32>
    %cst_43 = arith.constant 1.000000e+00 : f32
    %166 = vector.broadcast %cst_43 : f32 to vector<8x384xf32>
    %167 = arith.addf %166, %165 : vector<8x384xf32>
    %168 = arith.divf %166, %167 : vector<8x384xf32>
    %169 = vector.extract_strided_slice %162 {offsets = [0, 384], sizes = [8, 128], strides = [1, 1]} : vector<8x512xf32> to vector<8x128xf32>
    %170 = math.tanh %169 : vector<8x128xf32>
    %171 = vector.extract_strided_slice %168 {offsets = [0, 0], sizes = [8, 128], strides = [1, 1]} : vector<8x384xf32> to vector<8x128xf32>
    %172 = vector.extract_strided_slice %168 {offsets = [0, 128], sizes = [8, 128], strides = [1, 1]} : vector<8x384xf32> to vector<8x128xf32>
    %173 = vector.extract_strided_slice %168 {offsets = [0, 256], sizes = [8, 128], strides = [1, 1]} : vector<8x384xf32> to vector<8x128xf32>
    %174 = arith.mulf %172, %134 : vector<8x128xf32>
    %175 = arith.mulf %171, %170 : vector<8x128xf32>
    %176 = arith.addf %174, %175 : vector<8x128xf32>
    %177 = math.tanh %176 : vector<8x128xf32>
    %178 = arith.mulf %173, %177 : vector<8x128xf32>
    %c4_i32 = arith.constant 4 : i32
    %179 = arith.index_cast %c4_i32 : i32 to index
    %c0_44 = arith.constant 0 : index
    %c0_45 = arith.constant 0 : index
    %180 = vector.load %arg1[%179, %c0_44, %c0_45] : memref<8x8x512xf32, #tpu.memory_space<vmem>>, vector<1x8x512xf32>
    %181 = vector.shape_cast %180 : vector<1x8x512xf32> to vector<8x512xf32>
    %cst_46 = arith.constant dense<0.000000e+00> : vector<8x512xf32>
    %182 = tpu.matmul %157, %3, %cst_46 {dimension_numbers = #tpu.dot_dimension_numbers<[1], [0], [0], [1], [0, 0, 1, 1], [], []>} : vector<8x128xf32>, vector<128x512xf32>, vector<8x512xf32> -> vector<8x512xf32>
    %183 = arith.addf %181, %182 : vector<8x512xf32>
    %184 = vector.extract_strided_slice %183 {offsets = [0, 0], sizes = [8, 384], strides = [1, 1]} : vector<8x512xf32> to vector<8x384xf32>
    %185 = arith.negf %184 : vector<8x384xf32>
    %186 = math.exp %185 : vector<8x384xf32>
    %cst_47 = arith.constant 1.000000e+00 : f32
    %187 = vector.broadcast %cst_47 : f32 to vector<8x384xf32>
    %188 = arith.addf %187, %186 : vector<8x384xf32>
    %189 = arith.divf %187, %188 : vector<8x384xf32>
    %190 = vector.extract_strided_slice %183 {offsets = [0, 384], sizes = [8, 128], strides = [1, 1]} : vector<8x512xf32> to vector<8x128xf32>
    %191 = math.tanh %190 : vector<8x128xf32>
    %192 = vector.extract_strided_slice %189 {offsets = [0, 0], sizes = [8, 128], strides = [1, 1]} : vector<8x384xf32> to vector<8x128xf32>
    %193 = vector.extract_strided_slice %189 {offsets = [0, 128], sizes = [8, 128], strides = [1, 1]} : vector<8x384xf32> to vector<8x128xf32>
    %194 = vector.extract_strided_slice %189 {offsets = [0, 256], sizes = [8, 128], strides = [1, 1]} : vector<8x384xf32> to vector<8x128xf32>
    %195 = arith.mulf %193, %155 : vector<8x128xf32>
    %196 = arith.mulf %192, %191 : vector<8x128xf32>
    %197 = arith.addf %195, %196 : vector<8x128xf32>
    %198 = math.tanh %197 : vector<8x128xf32>
    %199 = arith.mulf %194, %198 : vector<8x128xf32>
    %cst_48 = arith.constant dense<0.000000e+00> : vector<8x512xf32>
    %200 = tpu.matmul %199, %4, %cst_48 {dimension_numbers = #tpu.dot_dimension_numbers<[1], [0], [0], [1], [0, 0, 1, 1], [], []>} : vector<8x128xf32>, vector<128x512xf32>, vector<8x512xf32> -> vector<8x512xf32>
    %cst_49 = arith.constant dense<0.000000e+00> : vector<8x512xf32>
    %201 = tpu.matmul %178, %5, %cst_49 {dimension_numbers = #tpu.dot_dimension_numbers<[1], [0], [0], [1], [0, 0, 1, 1], [], []>} : vector<8x128xf32>, vector<128x512xf32>, vector<8x512xf32> -> vector<8x512xf32>
    %202 = arith.addf %200, %201 : vector<8x512xf32>
    %203 = vector.broadcast %6 : vector<1x512xf32> to vector<8x512xf32>
    %204 = arith.addf %202, %203 : vector<8x512xf32>
    %205 = vector.extract_strided_slice %204 {offsets = [0, 0], sizes = [8, 384], strides = [1, 1]} : vector<8x512xf32> to vector<8x384xf32>
    %206 = arith.negf %205 : vector<8x384xf32>
    %207 = math.exp %206 : vector<8x384xf32>
    %cst_50 = arith.constant 1.000000e+00 : f32
    %208 = vector.broadcast %cst_50 : f32 to vector<8x384xf32>
    %209 = arith.addf %208, %207 : vector<8x384xf32>
    %210 = arith.divf %208, %209 : vector<8x384xf32>
    %211 = vector.extract_strided_slice %204 {offsets = [0, 384], sizes = [8, 128], strides = [1, 1]} : vector<8x512xf32> to vector<8x128xf32>
    %212 = math.tanh %211 : vector<8x128xf32>
    %213 = vector.extract_strided_slice %210 {offsets = [0, 0], sizes = [8, 128], strides = [1, 1]} : vector<8x384xf32> to vector<8x128xf32>
    %214 = vector.extract_strided_slice %210 {offsets = [0, 128], sizes = [8, 128], strides = [1, 1]} : vector<8x384xf32> to vector<8x128xf32>
    %215 = vector.extract_strided_slice %210 {offsets = [0, 256], sizes = [8, 128], strides = [1, 1]} : vector<8x384xf32> to vector<8x128xf32>
    %216 = arith.mulf %214, %176 : vector<8x128xf32>
    %217 = arith.mulf %213, %212 : vector<8x128xf32>
    %218 = arith.addf %216, %217 : vector<8x128xf32>
    %219 = math.tanh %218 : vector<8x128xf32>
    %220 = arith.mulf %215, %219 : vector<8x128xf32>
    %c5_i32 = arith.constant 5 : i32
    %221 = arith.index_cast %c5_i32 : i32 to index
    %c0_51 = arith.constant 0 : index
    %c0_52 = arith.constant 0 : index
    %222 = vector.load %arg1[%221, %c0_51, %c0_52] : memref<8x8x512xf32, #tpu.memory_space<vmem>>, vector<1x8x512xf32>
    %223 = vector.shape_cast %222 : vector<1x8x512xf32> to vector<8x512xf32>
    %cst_53 = arith.constant dense<0.000000e+00> : vector<8x512xf32>
    %224 = tpu.matmul %199, %3, %cst_53 {dimension_numbers = #tpu.dot_dimension_numbers<[1], [0], [0], [1], [0, 0, 1, 1], [], []>} : vector<8x128xf32>, vector<128x512xf32>, vector<8x512xf32> -> vector<8x512xf32>
    %225 = arith.addf %223, %224 : vector<8x512xf32>
    %226 = vector.extract_strided_slice %225 {offsets = [0, 0], sizes = [8, 384], strides = [1, 1]} : vector<8x512xf32> to vector<8x384xf32>
    %227 = arith.negf %226 : vector<8x384xf32>
    %228 = math.exp %227 : vector<8x384xf32>
    %cst_54 = arith.constant 1.000000e+00 : f32
    %229 = vector.broadcast %cst_54 : f32 to vector<8x384xf32>
    %230 = arith.addf %229, %228 : vector<8x384xf32>
    %231 = arith.divf %229, %230 : vector<8x384xf32>
    %232 = vector.extract_strided_slice %225 {offsets = [0, 384], sizes = [8, 128], strides = [1, 1]} : vector<8x512xf32> to vector<8x128xf32>
    %233 = math.tanh %232 : vector<8x128xf32>
    %234 = vector.extract_strided_slice %231 {offsets = [0, 0], sizes = [8, 128], strides = [1, 1]} : vector<8x384xf32> to vector<8x128xf32>
    %235 = vector.extract_strided_slice %231 {offsets = [0, 128], sizes = [8, 128], strides = [1, 1]} : vector<8x384xf32> to vector<8x128xf32>
    %236 = vector.extract_strided_slice %231 {offsets = [0, 256], sizes = [8, 128], strides = [1, 1]} : vector<8x384xf32> to vector<8x128xf32>
    %237 = arith.mulf %235, %197 : vector<8x128xf32>
    %238 = arith.mulf %234, %233 : vector<8x128xf32>
    %239 = arith.addf %237, %238 : vector<8x128xf32>
    %240 = math.tanh %239 : vector<8x128xf32>
    %241 = arith.mulf %236, %240 : vector<8x128xf32>
    %cst_55 = arith.constant dense<0.000000e+00> : vector<8x512xf32>
    %242 = tpu.matmul %241, %4, %cst_55 {dimension_numbers = #tpu.dot_dimension_numbers<[1], [0], [0], [1], [0, 0, 1, 1], [], []>} : vector<8x128xf32>, vector<128x512xf32>, vector<8x512xf32> -> vector<8x512xf32>
    %cst_56 = arith.constant dense<0.000000e+00> : vector<8x512xf32>
    %243 = tpu.matmul %220, %5, %cst_56 {dimension_numbers = #tpu.dot_dimension_numbers<[1], [0], [0], [1], [0, 0, 1, 1], [], []>} : vector<8x128xf32>, vector<128x512xf32>, vector<8x512xf32> -> vector<8x512xf32>
    %244 = arith.addf %242, %243 : vector<8x512xf32>
    %245 = vector.broadcast %6 : vector<1x512xf32> to vector<8x512xf32>
    %246 = arith.addf %244, %245 : vector<8x512xf32>
    %247 = vector.extract_strided_slice %246 {offsets = [0, 0], sizes = [8, 384], strides = [1, 1]} : vector<8x512xf32> to vector<8x384xf32>
    %248 = arith.negf %247 : vector<8x384xf32>
    %249 = math.exp %248 : vector<8x384xf32>
    %cst_57 = arith.constant 1.000000e+00 : f32
    %250 = vector.broadcast %cst_57 : f32 to vector<8x384xf32>
    %251 = arith.addf %250, %249 : vector<8x384xf32>
    %252 = arith.divf %250, %251 : vector<8x384xf32>
    %253 = vector.extract_strided_slice %246 {offsets = [0, 384], sizes = [8, 128], strides = [1, 1]} : vector<8x512xf32> to vector<8x128xf32>
    %254 = math.tanh %253 : vector<8x128xf32>
    %255 = vector.extract_strided_slice %252 {offsets = [0, 0], sizes = [8, 128], strides = [1, 1]} : vector<8x384xf32> to vector<8x128xf32>
    %256 = vector.extract_strided_slice %252 {offsets = [0, 128], sizes = [8, 128], strides = [1, 1]} : vector<8x384xf32> to vector<8x128xf32>
    %257 = vector.extract_strided_slice %252 {offsets = [0, 256], sizes = [8, 128], strides = [1, 1]} : vector<8x384xf32> to vector<8x128xf32>
    %258 = arith.mulf %256, %218 : vector<8x128xf32>
    %259 = arith.mulf %255, %254 : vector<8x128xf32>
    %260 = arith.addf %258, %259 : vector<8x128xf32>
    %261 = math.tanh %260 : vector<8x128xf32>
    %262 = arith.mulf %257, %261 : vector<8x128xf32>
    %c6_i32 = arith.constant 6 : i32
    %263 = arith.index_cast %c6_i32 : i32 to index
    %c0_58 = arith.constant 0 : index
    %c0_59 = arith.constant 0 : index
    %264 = vector.load %arg1[%263, %c0_58, %c0_59] : memref<8x8x512xf32, #tpu.memory_space<vmem>>, vector<1x8x512xf32>
    %265 = vector.shape_cast %264 : vector<1x8x512xf32> to vector<8x512xf32>
    %cst_60 = arith.constant dense<0.000000e+00> : vector<8x512xf32>
    %266 = tpu.matmul %241, %3, %cst_60 {dimension_numbers = #tpu.dot_dimension_numbers<[1], [0], [0], [1], [0, 0, 1, 1], [], []>} : vector<8x128xf32>, vector<128x512xf32>, vector<8x512xf32> -> vector<8x512xf32>
    %267 = arith.addf %265, %266 : vector<8x512xf32>
    %268 = vector.extract_strided_slice %267 {offsets = [0, 0], sizes = [8, 384], strides = [1, 1]} : vector<8x512xf32> to vector<8x384xf32>
    %269 = arith.negf %268 : vector<8x384xf32>
    %270 = math.exp %269 : vector<8x384xf32>
    %cst_61 = arith.constant 1.000000e+00 : f32
    %271 = vector.broadcast %cst_61 : f32 to vector<8x384xf32>
    %272 = arith.addf %271, %270 : vector<8x384xf32>
    %273 = arith.divf %271, %272 : vector<8x384xf32>
    %274 = vector.extract_strided_slice %267 {offsets = [0, 384], sizes = [8, 128], strides = [1, 1]} : vector<8x512xf32> to vector<8x128xf32>
    %275 = math.tanh %274 : vector<8x128xf32>
    %276 = vector.extract_strided_slice %273 {offsets = [0, 0], sizes = [8, 128], strides = [1, 1]} : vector<8x384xf32> to vector<8x128xf32>
    %277 = vector.extract_strided_slice %273 {offsets = [0, 128], sizes = [8, 128], strides = [1, 1]} : vector<8x384xf32> to vector<8x128xf32>
    %278 = vector.extract_strided_slice %273 {offsets = [0, 256], sizes = [8, 128], strides = [1, 1]} : vector<8x384xf32> to vector<8x128xf32>
    %279 = arith.mulf %277, %239 : vector<8x128xf32>
    %280 = arith.mulf %276, %275 : vector<8x128xf32>
    %281 = arith.addf %279, %280 : vector<8x128xf32>
    %282 = math.tanh %281 : vector<8x128xf32>
    %283 = arith.mulf %278, %282 : vector<8x128xf32>
    %cst_62 = arith.constant dense<0.000000e+00> : vector<8x512xf32>
    %284 = tpu.matmul %283, %4, %cst_62 {dimension_numbers = #tpu.dot_dimension_numbers<[1], [0], [0], [1], [0, 0, 1, 1], [], []>} : vector<8x128xf32>, vector<128x512xf32>, vector<8x512xf32> -> vector<8x512xf32>
    %cst_63 = arith.constant dense<0.000000e+00> : vector<8x512xf32>
    %285 = tpu.matmul %262, %5, %cst_63 {dimension_numbers = #tpu.dot_dimension_numbers<[1], [0], [0], [1], [0, 0, 1, 1], [], []>} : vector<8x128xf32>, vector<128x512xf32>, vector<8x512xf32> -> vector<8x512xf32>
    %286 = arith.addf %284, %285 : vector<8x512xf32>
    %287 = vector.broadcast %6 : vector<1x512xf32> to vector<8x512xf32>
    %288 = arith.addf %286, %287 : vector<8x512xf32>
    %289 = vector.extract_strided_slice %288 {offsets = [0, 0], sizes = [8, 384], strides = [1, 1]} : vector<8x512xf32> to vector<8x384xf32>
    %290 = arith.negf %289 : vector<8x384xf32>
    %291 = math.exp %290 : vector<8x384xf32>
    %cst_64 = arith.constant 1.000000e+00 : f32
    %292 = vector.broadcast %cst_64 : f32 to vector<8x384xf32>
    %293 = arith.addf %292, %291 : vector<8x384xf32>
    %294 = arith.divf %292, %293 : vector<8x384xf32>
    %295 = vector.extract_strided_slice %288 {offsets = [0, 384], sizes = [8, 128], strides = [1, 1]} : vector<8x512xf32> to vector<8x128xf32>
    %296 = math.tanh %295 : vector<8x128xf32>
    %297 = vector.extract_strided_slice %294 {offsets = [0, 0], sizes = [8, 128], strides = [1, 1]} : vector<8x384xf32> to vector<8x128xf32>
    %298 = vector.extract_strided_slice %294 {offsets = [0, 128], sizes = [8, 128], strides = [1, 1]} : vector<8x384xf32> to vector<8x128xf32>
    %299 = vector.extract_strided_slice %294 {offsets = [0, 256], sizes = [8, 128], strides = [1, 1]} : vector<8x384xf32> to vector<8x128xf32>
    %300 = arith.mulf %298, %260 : vector<8x128xf32>
    %301 = arith.mulf %297, %296 : vector<8x128xf32>
    %302 = arith.addf %300, %301 : vector<8x128xf32>
    %303 = math.tanh %302 : vector<8x128xf32>
    %304 = arith.mulf %299, %303 : vector<8x128xf32>
    %c7_i32 = arith.constant 7 : i32
    %305 = arith.index_cast %c7_i32 : i32 to index
    %c0_65 = arith.constant 0 : index
    %c0_66 = arith.constant 0 : index
    %306 = vector.load %arg1[%305, %c0_65, %c0_66] : memref<8x8x512xf32, #tpu.memory_space<vmem>>, vector<1x8x512xf32>
    %307 = vector.shape_cast %306 : vector<1x8x512xf32> to vector<8x512xf32>
    %cst_67 = arith.constant dense<0.000000e+00> : vector<8x512xf32>
    %308 = tpu.matmul %283, %3, %cst_67 {dimension_numbers = #tpu.dot_dimension_numbers<[1], [0], [0], [1], [0, 0, 1, 1], [], []>} : vector<8x128xf32>, vector<128x512xf32>, vector<8x512xf32> -> vector<8x512xf32>
    %309 = arith.addf %307, %308 : vector<8x512xf32>
    %310 = vector.extract_strided_slice %309 {offsets = [0, 0], sizes = [8, 384], strides = [1, 1]} : vector<8x512xf32> to vector<8x384xf32>
    %311 = arith.negf %310 : vector<8x384xf32>
    %312 = math.exp %311 : vector<8x384xf32>
    %cst_68 = arith.constant 1.000000e+00 : f32
    %313 = vector.broadcast %cst_68 : f32 to vector<8x384xf32>
    %314 = arith.addf %313, %312 : vector<8x384xf32>
    %315 = arith.divf %313, %314 : vector<8x384xf32>
    %316 = vector.extract_strided_slice %309 {offsets = [0, 384], sizes = [8, 128], strides = [1, 1]} : vector<8x512xf32> to vector<8x128xf32>
    %317 = math.tanh %316 : vector<8x128xf32>
    %318 = vector.extract_strided_slice %315 {offsets = [0, 0], sizes = [8, 128], strides = [1, 1]} : vector<8x384xf32> to vector<8x128xf32>
    %319 = vector.extract_strided_slice %315 {offsets = [0, 128], sizes = [8, 128], strides = [1, 1]} : vector<8x384xf32> to vector<8x128xf32>
    %320 = vector.extract_strided_slice %315 {offsets = [0, 256], sizes = [8, 128], strides = [1, 1]} : vector<8x384xf32> to vector<8x128xf32>
    %321 = arith.mulf %319, %281 : vector<8x128xf32>
    %322 = arith.mulf %318, %317 : vector<8x128xf32>
    %323 = arith.addf %321, %322 : vector<8x128xf32>
    %324 = math.tanh %323 : vector<8x128xf32>
    %325 = arith.mulf %320, %324 : vector<8x128xf32>
    %cst_69 = arith.constant dense<0.000000e+00> : vector<8x512xf32>
    %326 = tpu.matmul %325, %4, %cst_69 {dimension_numbers = #tpu.dot_dimension_numbers<[1], [0], [0], [1], [0, 0, 1, 1], [], []>} : vector<8x128xf32>, vector<128x512xf32>, vector<8x512xf32> -> vector<8x512xf32>
    %cst_70 = arith.constant dense<0.000000e+00> : vector<8x512xf32>
    %327 = tpu.matmul %304, %5, %cst_70 {dimension_numbers = #tpu.dot_dimension_numbers<[1], [0], [0], [1], [0, 0, 1, 1], [], []>} : vector<8x128xf32>, vector<128x512xf32>, vector<8x512xf32> -> vector<8x512xf32>
    %328 = arith.addf %326, %327 : vector<8x512xf32>
    %329 = vector.broadcast %6 : vector<1x512xf32> to vector<8x512xf32>
    %330 = arith.addf %328, %329 : vector<8x512xf32>
    %331 = vector.extract_strided_slice %330 {offsets = [0, 0], sizes = [8, 384], strides = [1, 1]} : vector<8x512xf32> to vector<8x384xf32>
    %332 = arith.negf %331 : vector<8x384xf32>
    %333 = math.exp %332 : vector<8x384xf32>
    %cst_71 = arith.constant 1.000000e+00 : f32
    %334 = vector.broadcast %cst_71 : f32 to vector<8x384xf32>
    %335 = arith.addf %334, %333 : vector<8x384xf32>
    %336 = arith.divf %334, %335 : vector<8x384xf32>
    %337 = vector.extract_strided_slice %330 {offsets = [0, 384], sizes = [8, 128], strides = [1, 1]} : vector<8x512xf32> to vector<8x128xf32>
    %338 = math.tanh %337 : vector<8x128xf32>
    %339 = vector.extract_strided_slice %336 {offsets = [0, 0], sizes = [8, 128], strides = [1, 1]} : vector<8x384xf32> to vector<8x128xf32>
    %340 = vector.extract_strided_slice %336 {offsets = [0, 128], sizes = [8, 128], strides = [1, 1]} : vector<8x384xf32> to vector<8x128xf32>
    %341 = vector.extract_strided_slice %336 {offsets = [0, 256], sizes = [8, 128], strides = [1, 1]} : vector<8x384xf32> to vector<8x128xf32>
    %342 = arith.mulf %340, %302 : vector<8x128xf32>
    %343 = arith.mulf %339, %338 : vector<8x128xf32>
    %344 = arith.addf %342, %343 : vector<8x128xf32>
    %345 = math.tanh %344 : vector<8x128xf32>
    %346 = arith.mulf %341, %345 : vector<8x128xf32>
    %c8_i32 = arith.constant 8 : i32
    %c0_72 = arith.constant 0 : index
    %c0_73 = arith.constant 0 : index
    %347 = vector.load %arg11[%c0_72, %c0_73] : memref<8x128xf32, #tpu.memory_space<vmem>>, vector<8x128xf32>
    tpu.vector_store %arg11[%c0_72, %c0_73], %325 {strides = array<i32>} : memref<8x128xf32, #tpu.memory_space<vmem>>, vector<8x128xf32>,
    %c0_74 = arith.constant 0 : index
    %c0_75 = arith.constant 0 : index
    %348 = vector.load %arg12[%c0_74, %c0_75] : memref<8x128xf32, #tpu.memory_space<vmem>>, vector<8x128xf32>
    tpu.vector_store %arg12[%c0_74, %c0_75], %323 {strides = array<i32>} : memref<8x128xf32, #tpu.memory_space<vmem>>, vector<8x128xf32>,
    %c0_76 = arith.constant 0 : index
    %c0_77 = arith.constant 0 : index
    %349 = vector.load %arg13[%c0_76, %c0_77] : memref<8x128xf32, #tpu.memory_space<vmem>>, vector<8x128xf32>
    tpu.vector_store %arg13[%c0_76, %c0_77], %346 {strides = array<i32>} : memref<8x128xf32, #tpu.memory_space<vmem>>, vector<8x128xf32>,
    %c0_78 = arith.constant 0 : index
    %c0_79 = arith.constant 0 : index
    %350 = vector.load %arg14[%c0_78, %c0_79] : memref<8x128xf32, #tpu.memory_space<vmem>>, vector<8x128xf32>
    tpu.vector_store %arg14[%c0_78, %c0_79], %344 {strides = array<i32>} : memref<8x128xf32, #tpu.memory_space<vmem>>, vector<8x128xf32>,
    %c1_i32_80 = arith.constant 1 : i32
    %351 = arith.cmpi eq, %arg0, %c1_i32_80 : i32
    %352 = arith.extui %351 : i1 to i32
    %c0_i32_81 = arith.constant 0 : i32
    %353 = arith.cmpi ne, %352, %c0_i32_81 : i32
    scf.if %353 {
      %cst_82 = arith.constant 0.000000e+00 : f32
      %354 = vector.broadcast %cst_82 : f32 to vector<8x128xf32>
      %355 = arith.maximumf %346, %354 : vector<8x128xf32>
      %c0_83 = arith.constant 0 : index
      %c0_84 = arith.constant 0 : index
      %356 = vector.load %arg6[%c0_83, %c0_84] : memref<128x1xf32, #tpu.memory_space<vmem>>, vector<128x1xf32>
      %cst_85 = arith.constant dense<0.000000e+00> : vector<8x1xf32>
      %357 = tpu.matmul %355, %356, %cst_85 {dimension_numbers = #tpu.dot_dimension_numbers<[1], [0], [0], [1], [0, 0, 1, 1], [], []>} : vector<8x128xf32>, vector<128x1xf32>, vector<8x1xf32> -> vector<8x1xf32>
      %c0_86 = arith.constant 0 : index
      %c0_87 = arith.constant 0 : index
      %358 = vector.load %arg7[%c0_86, %c0_87] : memref<1x1xf32, #tpu.memory_space<vmem>>, vector<1x1xf32>
      %359 = vector.broadcast %358 : vector<1x1xf32> to vector<8x1xf32>
      %360 = arith.addf %357, %359 : vector<8x1xf32>
      %c0_88 = arith.constant 0 : index
      %c0_89 = arith.constant 0 : index
      %361 = vector.load %arg8[%c0_88, %c0_89] : memref<8x1xf32, #tpu.memory_space<vmem>>, vector<8x1xf32>
      tpu.vector_store %arg8[%c0_88, %c0_89], %360 {strides = array<i32>} : memref<8x1xf32, #tpu.memory_space<vmem>>, vector<8x1xf32>,
      %c0_90 = arith.constant 0 : index
      %c0_91 = arith.constant 0 : index
      %c0_92 = arith.constant 0 : index
      %362 = vector.load %arg9[%c0_90, %c0_91, %c0_92] : memref<2x8x128xf32, #tpu.memory_space<vmem>>, vector<1x8x128xf32>
      %363 = vector.shape_cast %362 : vector<1x8x128xf32> to vector<8x128xf32>
      %364 = vector.shape_cast %325 : vector<8x128xf32> to vector<1x8x128xf32>
      tpu.vector_store %arg9[%c0_90, %c0_91, %c0_92], %364 {strides = array<i32>} : memref<2x8x128xf32, #tpu.memory_space<vmem>>, vector<1x8x128xf32>,
      %c1 = arith.constant 1 : index
      %c0_93 = arith.constant 0 : index
      %c0_94 = arith.constant 0 : index
      %365 = vector.load %arg9[%c1, %c0_93, %c0_94] : memref<2x8x128xf32, #tpu.memory_space<vmem>>, vector<1x8x128xf32>
      %366 = vector.shape_cast %365 : vector<1x8x128xf32> to vector<8x128xf32>
      %367 = vector.shape_cast %346 : vector<8x128xf32> to vector<1x8x128xf32>
      tpu.vector_store %arg9[%c1, %c0_93, %c0_94], %367 {strides = array<i32>} : memref<2x8x128xf32, #tpu.memory_space<vmem>>, vector<1x8x128xf32>,
      %c0_95 = arith.constant 0 : index
      %c0_96 = arith.constant 0 : index
      %c0_97 = arith.constant 0 : index
      %368 = vector.load %arg10[%c0_95, %c0_96, %c0_97] : memref<2x8x128xf32, #tpu.memory_space<vmem>>, vector<1x8x128xf32>
      %369 = vector.shape_cast %368 : vector<1x8x128xf32> to vector<8x128xf32>
      %370 = vector.shape_cast %323 : vector<8x128xf32> to vector<1x8x128xf32>
      tpu.vector_store %arg10[%c0_95, %c0_96, %c0_97], %370 {strides = array<i32>} : memref<2x8x128xf32, #tpu.memory_space<vmem>>, vector<1x8x128xf32>,
      %c1_98 = arith.constant 1 : index
      %c0_99 = arith.constant 0 : index
      %c0_100 = arith.constant 0 : index
      %371 = vector.load %arg10[%c1_98, %c0_99, %c0_100] : memref<2x8x128xf32, #tpu.memory_space<vmem>>, vector<1x8x128xf32>
      %372 = vector.shape_cast %371 : vector<1x8x128xf32> to vector<8x128xf32>
      %373 = vector.shape_cast %344 : vector<8x128xf32> to vector<1x8x128xf32>
      tpu.vector_store %arg10[%c1_98, %c0_99, %c0_100], %373 {strides = array<i32>} : memref<2x8x128xf32, #tpu.memory_space<vmem>>, vector<1x8x128xf32>,
    } else {
    }
    return
  }
  func.func @transform_0(%arg0: i32) -> (i32, i32, i32) {
    %c0_i32 = arith.constant 0 : i32
    %c0_i32_0 = arith.constant 0 : i32
    %c0_i32_1 = arith.constant 0 : i32
    return %arg0, %c0_i32, %c0_i32_0 : i32, i32, i32
  }
  func.func @transform_1(%arg0: i32) -> (i32, i32) {
    %c0_i32 = arith.constant 0 : i32
    %c0_i32_0 = arith.constant 0 : i32
    %c0_i32_1 = arith.constant 0 : i32
    return %c0_i32, %c0_i32_0 : i32, i32
  }
  func.func @transform_2(%arg0: i32) -> (i32, i32) {
    %c0_i32 = arith.constant 0 : i32
    %c0_i32_0 = arith.constant 0 : i32
    %c0_i32_1 = arith.constant 0 : i32
    return %c0_i32, %c0_i32_0 : i32, i32
  }
  func.func @transform_3(%arg0: i32) -> (i32, i32) {
    %c0_i32 = arith.constant 0 : i32
    %c0_i32_0 = arith.constant 0 : i32
    %c0_i32_1 = arith.constant 0 : i32
    return %c0_i32, %c0_i32_0 : i32, i32
  }
  func.func @transform_4(%arg0: i32) -> (i32, i32) {
    %c0_i32 = arith.constant 0 : i32
    %c0_i32_0 = arith.constant 0 : i32
    %c0_i32_1 = arith.constant 0 : i32
    return %c0_i32, %c0_i32_0 : i32, i32
  }
  func.func @transform_5(%arg0: i32) -> (i32, i32) {
    %c0_i32 = arith.constant 0 : i32
    %c0_i32_0 = arith.constant 0 : i32
    %c0_i32_1 = arith.constant 0 : i32
    return %c0_i32, %c0_i32_0 : i32, i32
  }
  func.func @transform_6(%arg0: i32) -> (i32, i32) {
    %c0_i32 = arith.constant 0 : i32
    %c0_i32_0 = arith.constant 0 : i32
    %c0_i32_1 = arith.constant 0 : i32
    return %c0_i32, %c0_i32_0 : i32, i32
  }
  func.func @transform_7(%arg0: i32) -> (i32, i32) {
    %c0_i32 = arith.constant 0 : i32
    %c0_i32_0 = arith.constant 0 : i32
    %c0_i32_1 = arith.constant 0 : i32
    return %c0_i32, %c0_i32_0 : i32, i32
  }
  func.func @transform_8(%arg0: i32) -> (i32, i32, i32) {
    %c0_i32 = arith.constant 0 : i32
    %c0_i32_0 = arith.constant 0 : i32
    %c0_i32_1 = arith.constant 0 : i32
    %c0_i32_2 = arith.constant 0 : i32
    return %c0_i32, %c0_i32_0, %c0_i32_1 : i32, i32, i32
  }
  func.func @transform_9(%arg0: i32) -> (i32, i32, i32) {
    %c0_i32 = arith.constant 0 : i32
    %c0_i32_0 = arith.constant 0 : i32
    %c0_i32_1 = arith.constant 0 : i32
    %c0_i32_2 = arith.constant 0 : i32
    return %c0_i32, %c0_i32_0, %c0_i32_1 : i32, i32, i32
  }
}

</mosaic_0001>

<llo_original>
// kernel: lstm_net_forward.1
$region0: #{lstm_net_forward.1}
  #allocation0 [shape = 'u32[]', space=smem, size = 0x4, offset = 0x4, fixed_abs, tag = 'smem constant byte address 0x4 - core index']
  #allocation1 [shape = 'u32[144,128]{1,0:T(1,128)}', space=vmem, size = 0x12000, scoped, tag = 'internal scratch']
  #allocation2 [shape = 'f32[8,128]{1,0:T(8,128)}', space=vmem, size = 0x1000, scoped, tag = 'scratch operand']
  #allocation3 [shape = 'f32[8,128]{1,0:T(8,128)}', space=vmem, size = 0x1000, scoped, tag = 'scratch operand']
  #allocation4 [shape = 'f32[8,128]{1,0:T(8,128)}', space=vmem, size = 0x1000, scoped, tag = 'scratch operand']
  #allocation5 [shape = 'f32[8,128]{1,0:T(8,128)}', space=vmem, size = 0x1000, scoped, tag = 'scratch operand']
  #allocation6 [shape = 'f32[1,1]{1,0:T(1,128)S(1)}', space=vmem, size = 0x200, scoped, tag = 'scoped memory for lstm_net_forward.1']
  %s0 = inlined_call_operand.hbm [shape: f32[16,8,512], index: 0, kind: input, shape index: {}]
  %s1 = inlined_call_operand.hbm [shape: f32[128,512], index: 1, kind: input, shape index: {}]
  %s2 = inlined_call_operand.hbm [shape: f32[128,512], index: 2, kind: input, shape index: {}]
  %s3 = inlined_call_operand.hbm [shape: f32[128,512], index: 3, kind: input, shape index: {}]
  %s4 = inlined_call_operand.hbm [shape: f32[1,512], index: 4, kind: input, shape index: {}]
  %s5 = inlined_call_operand.hbm [shape: f32[128,1], index: 5, kind: input, shape index: {}]
  %s6 = inlined_call_operand.<no memory space> [shape: f32[1,1], index: 6, kind: input, shape index: {}]
  %s7 = inlined_call_operand.hbm [shape: f32[8,1], index: 7, kind: output, shape index: {0}]
  %s8 = inlined_call_operand.hbm [shape: f32[2,8,128], index: 8, kind: output, shape index: {1}]
  %s9 = inlined_call_operand.hbm [shape: f32[2,8,128], index: 9, kind: output, shape index: {2}]
  %10 = xla_tuple %s7, %s8, %s9
  %s11 = sld [smem:[#allocation0]]
  $region109: #{lstm_net_forward.1} parent=0
    _
  %s13 = ssub.s32 1, %s11
  %s14 = scalar_select 0, %s13, %s11
  %v15 = vstv %s6
  %16 = vst [vmem:[#allocation6] sm:$0x1] %v15
  $region1: #{lstm_net_forward.1} parent=0
    #allocation7 [shape = 'u8[262144]{0}', space=vmem, size = 0x40000, scoped, tag = 'input window, operand 0']
    #allocation8 [shape = 's32[2]{0}', space=sflag, size = 0x8, scoped, tag = 'scoped memory for lstm_net_forward.1']
    #allocation9 [shape = 's32[2]{0}', space=sflag, size = 0x8, scoped, tag = 'scoped memory for lstm_net_forward.1']
    #allocation10 [shape = 'u8[262144]{0}', space=vmem, size = 0x40000, scoped, tag = 'input window, operand 1, single buffered']
    #allocation11 [shape = 's32[1]{0}', space=sflag, size = 0x4, scoped, tag = 'scoped memory for lstm_net_forward.1']
    #allocation12 [shape = 'u8[262144]{0}', space=vmem, size = 0x40000, scoped, tag = 'input window, operand 2, single buffered']
    #allocation13 [shape = 'u8[262144]{0}', space=vmem, size = 0x40000, scoped, tag = 'input window, operand 3, single buffered']
    #allocation14 [shape = 's32[1]{0}', space=sflag, size = 0x4, scoped, tag = 'scoped memory for lstm_net_forward.1']
    #allocation15 [shape = 'u8[2048]{0}', space=vmem, size = 0x800, scoped, tag = 'input window, operand 4, single buffered']
    #allocation16 [shape = 'u8[65536]{0}', space=vmem, size = 0x10000, scoped, tag = 'input window, operand 5, single buffered']
    #allocation17 [shape = 's32[1]{0}', space=sflag, size = 0x4, scoped, tag = 'scoped memory for lstm_net_forward.1']
    #allocation18 [shape = 'u8[4096]{0}', space=vmem, size = 0x1000, scoped, tag = 'output window, operand 0, single buffered']
    #allocation19 [shape = 'u8[8192]{0}', space=vmem, size = 0x2000, scoped, tag = 'output window, operand 1, single buffered']
    #allocation20 [shape = 's32[1]{0}', space=sflag, size = 0x4, scoped, tag = 'scoped memory for lstm_net_forward.1']
    #allocation21 [shape = 'u8[8192]{0}', space=vmem, size = 0x2000, scoped, tag = 'output window, operand 2, single buffered']
    %17 = vsyncpa [#allocation8], 0
    %s18 = scalar_lea.sflag [#allocation8], 1
    %19 = vsyncpa %s18, 0
    %20 = vsyncpa [#allocation11], 0
    %21 = vsyncpa [#allocation14], 0
    %22 = vsyncpa [#allocation17], 0
    %23 = vsyncpa [#allocation9], 0
    %24 = vsyncpa [#allocation20], 0
    loop: start=0, step=1, limit=4
    $region2: #{lstm_net_forward.1} parent=1 // loop_pre_header
      _
    $region3: #{lstm_net_forward.1} parent=1 // loop_header
      %s26 = sphi 0, %s30
      %p27 = scmp.ge.s32.totalorder %s26, 4
      %s36 = sphi 0, %s38
      %s39 = sphi 0, %s36
      %s40 = sphi 0, %s39
      %s56 = sphi 0, %s40
      %s60 = sphi 0, %s60
      %s62 = sphi 0, %s60
      %s63 = sphi 0, %s62
      %s77 = sphi 0, %s63
      %s81 = sphi 0, %s81
      %s83 = sphi 0, %s81
      %s84 = sphi 0, %s83
      %s98 = sphi 0, %s84
      %s102 = sphi 0, %s102
      %s104 = sphi 0, %s102
      %s105 = sphi 0, %s104
      %s119 = sphi 0, %s105
      %s123 = sphi 0, %s123
      %s125 = sphi 0, %s123
      %s126 = sphi 0, %s125
      %s140 = sphi 0, %s126
      %s144 = sphi 0, %s144
      %s146 = sphi 0, %s144
      %s147 = sphi 0, %s146
      %s161 = sphi 0, %s147
      %s165 = sphi 0, %s165
      %s167 = sphi 0, %s165
      %s168 = sphi 0, %s167
      %s182 = sphi 0, %s168
      %s186 = sphi 0, %s186
      %s188 = sphi 0, %s186
      %s189 = sphi 0, %s188
      %s203 = sphi 0, %s189
      %s207 = sphi 0, %s207
      %s209 = sphi 0, %s207
      %s210 = sphi 0, %s209
      %s224 = sphi 0, %s210
      %s228 = sphi 0, %s228
      %s230 = sphi 0, %s228
      %s231 = sphi 0, %s230
      %s245 = sphi 0, %s231
    $region4: #{lstm_net_forward.1} parent=1 // loop_header_branch
      %29 = sbr.rel (%p27) target = $region8
    $region5: #{lstm_net_forward.1} parent=1 // loop_body
      %s31 = ssub.s32 %s26, 1
      %s32 = ssub.s32 %s26, 2
      %s33 = sadd.s32 %s26, 1
      %s34 = ssub.s32 %s26, %s33
      %p35 = scmp.eq.s32.totalorder %s34, 0
      %s37 = sadd.s32 %s36, 1
      %s38 = scalar_select %p35, %s36, %s37
      %p41 = pneg %p35
      %p42 = scmp.eq.s32.totalorder %s26, 1
      %p43 = por %p41, %p42
      %p44 = scmp.ne.s32.totalorder %s36, %s39
      %p45 = scmp.eq.s32.totalorder %s26, 0
      %p46 = por %p44, %p45
      %p47 = scmp.ne.s32.totalorder %s36, %s39
      %p48 = scmp.eq.s32.totalorder %s31, 1
      %p49 = por %p47, %p48
      %p50 = scmp.ne.s32.totalorder %s39, %s40
      %p51 = scmp.eq.s32.totalorder %s31, 0
      %p52 = por %p50, %p51
      %p53 = scmp.ne.s32.totalorder %s39, %s40
      %p54 = scmp.eq.s32.totalorder %s32, 1
      %p55 = por %p53, %p54
      %p57 = scmp.ne.s32.totalorder %s40, %s56
      %p58 = scmp.eq.s32.totalorder %s32, 0
      %p59 = por %p57, %p58
      %s61 = sadd.s32 %s60, 1
      %p64 = scmp.eq.s32.totalorder %s26, 1
      %p65 = scmp.ne.s32.totalorder %s60, %s62
      %p66 = scmp.eq.s32.totalorder %s26, 0
      %p67 = por %p65, %p66
      %p68 = scmp.ne.s32.totalorder %s60, %s62
      %p69 = scmp.eq.s32.totalorder %s31, 1
      %p70 = por %p68, %p69
      %p71 = scmp.ne.s32.totalorder %s62, %s63
      %p72 = scmp.eq.s32.totalorder %s31, 0
      %p73 = por %p71, %p72
      %p74 = scmp.ne.s32.totalorder %s62, %s63
      %p75 = scmp.eq.s32.totalorder %s32, 1
      %p76 = por %p74, %p75
      %p78 = scmp.ne.s32.totalorder %s63, %s77
      %p79 = scmp.eq.s32.totalorder %s32, 0
      %p80 = por %p78, %p79
      %s82 = sadd.s32 %s81, 1
      %p85 = scmp.eq.s32.totalorder %s26, 1
      %p86 = scmp.ne.s32.totalorder %s81, %s83
      %p87 = scmp.eq.s32.totalorder %s26, 0
      %p88 = por %p86, %p87
      %p89 = scmp.ne.s32.totalorder %s81, %s83
      %p90 = scmp.eq.s32.totalorder %s31, 1
      %p91 = por %p89, %p90
      %p92 = scmp.ne.s32.totalorder %s83, %s84
      %p93 = scmp.eq.s32.totalorder %s31, 0
      %p94 = por %p92, %p93
      %p95 = scmp.ne.s32.totalorder %s83, %s84
      %p96 = scmp.eq.s32.totalorder %s32, 1
      %p97 = por %p95, %p96
      %p99 = scmp.ne.s32.totalorder %s84, %s98
      %p100 = scmp.eq.s32.totalorder %s32, 0
      %p101 = por %p99, %p100
      %s103 = sadd.s32 %s102, 1
      %p106 = scmp.eq.s32.totalorder %s26, 1
      %p107 = scmp.ne.s32.totalorder %s102, %s104
      %p108 = scmp.eq.s32.totalorder %s26, 0
      %p109 = por %p107, %p108
      %p110 = scmp.ne.s32.totalorder %s102, %s104
      %p111 = scmp.eq.s32.totalorder %s31, 1
      %p112 = por %p110, %p111
      %p113 = scmp.ne.s32.totalorder %s104, %s105
      %p114 = scmp.eq.s32.totalorder %s31, 0
      %p115 = por %p113, %p114
      %p116 = scmp.ne.s32.totalorder %s104, %s105
      %p117 = scmp.eq.s32.totalorder %s32, 1
      %p118 = por %p116, %p117
      %p120 = scmp.ne.s32.totalorder %s105, %s119
      %p121 = scmp.eq.s32.totalorder %s32, 0
      %p122 = por %p120, %p121
      %s124 = sadd.s32 %s123, 1
      %p127 = scmp.eq.s32.totalorder %s26, 1
      %p128 = scmp.ne.s32.totalorder %s123, %s125
      %p129 = scmp.eq.s32.totalorder %s26, 0
      %p130 = por %p128, %p129
      %p131 = scmp.ne.s32.totalorder %s123, %s125
      %p132 = scmp.eq.s32.totalorder %s31, 1
      %p133 = por %p131, %p132
      %p134 = scmp.ne.s32.totalorder %s125, %s126
      %p135 = scmp.eq.s32.totalorder %s31, 0
      %p136 = por %p134, %p135
      %p137 = scmp.ne.s32.totalorder %s125, %s126
      %p138 = scmp.eq.s32.totalorder %s32, 1
      %p139 = por %p137, %p138
      %p141 = scmp.ne.s32.totalorder %s126, %s140
      %p142 = scmp.eq.s32.totalorder %s32, 0
      %p143 = por %p141, %p142
      %s145 = sadd.s32 %s144, 1
      %p148 = scmp.eq.s32.totalorder %s26, 1
      %p149 = scmp.ne.s32.totalorder %s144, %s146
      %p150 = scmp.eq.s32.totalorder %s26, 0
      %p151 = por %p149, %p150
      %p152 = scmp.ne.s32.totalorder %s144, %s146
      %p153 = scmp.eq.s32.totalorder %s31, 1
      %p154 = por %p152, %p153
      %p155 = scmp.ne.s32.totalorder %s146, %s147
      %p156 = scmp.eq.s32.totalorder %s31, 0
      %p157 = por %p155, %p156
      %p158 = scmp.ne.s32.totalorder %s146, %s147
      %p159 = scmp.eq.s32.totalorder %s32, 1
      %p160 = por %p158, %p159
      %p162 = scmp.ne.s32.totalorder %s147, %s161
      %p163 = scmp.eq.s32.totalorder %s32, 0
      %p164 = por %p162, %p163
      %s166 = sadd.s32 %s165, 1
      %p169 = scmp.eq.s32.totalorder %s26, 1
      %p170 = scmp.ne.s32.totalorder %s165, %s167
      %p171 = scmp.eq.s32.totalorder %s26, 0
      %p172 = por %p170, %p171
      %p173 = scmp.ne.s32.totalorder %s165, %s167
      %p174 = scmp.eq.s32.totalorder %s31, 1
      %p175 = por %p173, %p174
      %p176 = scmp.ne.s32.totalorder %s167, %s168
      %p177 = scmp.eq.s32.totalorder %s31, 0
      %p178 = por %p176, %p177
      %p179 = scmp.ne.s32.totalorder %s167, %s168
      %p180 = scmp.eq.s32.totalorder %s32, 1
      %p181 = por %p179, %p180
      %p183 = scmp.ne.s32.totalorder %s168, %s182
      %p184 = scmp.eq.s32.totalorder %s32, 0
      %p185 = por %p183, %p184
      %s187 = sadd.s32 %s186, 1
      %p190 = scmp.eq.s32.totalorder %s26, 1
      %p191 = scmp.ne.s32.totalorder %s186, %s188
      %p192 = scmp.eq.s32.totalorder %s26, 0
      %p193 = por %p191, %p192
      %p194 = scmp.ne.s32.totalorder %s186, %s188
      %p195 = scmp.eq.s32.totalorder %s31, 1
      %p196 = por %p194, %p195
      %p197 = scmp.ne.s32.totalorder %s188, %s189
      %p198 = scmp.eq.s32.totalorder %s31, 0
      %p199 = por %p197, %p198
      %p200 = scmp.ne.s32.totalorder %s188, %s189
      %p201 = scmp.eq.s32.totalorder %s32, 1
      %p202 = por %p200, %p201
      %p204 = scmp.ne.s32.totalorder %s189, %s203
      %p205 = scmp.eq.s32.totalorder %s32, 0
      %p206 = por %p204, %p205
      %s208 = sadd.s32 %s207, 1
      %p211 = scmp.eq.s32.totalorder %s26, 1
      %p212 = scmp.ne.s32.totalorder %s207, %s209
      %p213 = scmp.eq.s32.totalorder %s26, 0
      %p214 = por %p212, %p213
      %p215 = scmp.ne.s32.totalorder %s207, %s209
      %p216 = scmp.eq.s32.totalorder %s31, 1
      %p217 = por %p215, %p216
      %p218 = scmp.ne.s32.totalorder %s209, %s210
      %p219 = scmp.eq.s32.totalorder %s31, 0
      %p220 = por %p218, %p219
      %p221 = scmp.ne.s32.totalorder %s209, %s210
      %p222 = scmp.eq.s32.totalorder %s32, 1
      %p223 = por %p221, %p222
      %p225 = scmp.ne.s32.totalorder %s210, %s224
      %p226 = scmp.eq.s32.totalorder %s32, 0
      %p227 = por %p225, %p226
      %s229 = sadd.s32 %s228, 1
      %p232 = scmp.eq.s32.totalorder %s26, 1
      %p233 = scmp.ne.s32.totalorder %s228, %s230
      %p234 = scmp.eq.s32.totalorder %s26, 0
      %p235 = por %p233, %p234
      %p236 = scmp.ne.s32.totalorder %s228, %s230
      %p237 = scmp.eq.s32.totalorder %s31, 1
      %p238 = por %p236, %p237
      %p239 = scmp.ne.s32.totalorder %s230, %s231
      %p240 = scmp.eq.s32.totalorder %s31, 0
      %p241 = por %p239, %p240
      %p242 = scmp.ne.s32.totalorder %s230, %s231
      %p243 = scmp.eq.s32.totalorder %s32, 1
      %p244 = por %p242, %p243
      %p246 = scmp.ne.s32.totalorder %s231, %s245
      %p247 = scmp.eq.s32.totalorder %s32, 0
      %p248 = por %p246, %p247
      %p249 = scmp.le.s32.totalorder 1, %s26
      %p250 = scmp.lt.s32.totalorder %s26, 3
      %p251 = pnand %p249, %p250
      %p252 = pneg %p251
      // Predicated region
      $region9: #{lstm_net_forward.1} parent=5 // pred_check
        _
      $region10: #{lstm_net_forward.1} parent=5 // pred_check_branch
        %254 = sbr.rel (%p251) target = $region12
      $region11: #{lstm_net_forward.1} parent=5 // pred_region
        %s255 = ssub.s32 %s26, 1
        // Predicated region
        $region13: #{lstm_net_forward.1} parent=11 // pred_check
          %p256 = pneg %p73
        $region14: #{lstm_net_forward.1} parent=11 // pred_check_branch
          %258 = sbr.rel (%p256) target = $region16
        $region15: #{lstm_net_forward.1} parent=11 // pred_region
          %s260 = ssub.s32 8192, 8192
          %261 = vsyncadd [#allocation11], %s260
          %s262 = sshll.u32 [#allocation10], 4
          %s263 = int_to_ptr.vmem [resolvable:$true] %s262
          %268 = dma.hbm_to_vmem [thread:$0]  %s1, 8192, %s263, [#allocation11], 512, 512, 32
        $region16: #{lstm_net_forward.1} parent=11 // pred_fallthru
          _
        // Predicated region
        $region17: #{lstm_net_forward.1} parent=11 // pred_check
          %p269 = pneg %p94
        $region18: #{lstm_net_forward.1} parent=11 // pred_check_branch
          %271 = sbr.rel (%p269) target = $region20
        $region19: #{lstm_net_forward.1} parent=11 // pred_region
          %s273 = ssub.s32 8192, 8192
          %274 = vsyncadd [#allocation11], %s273
          %s275 = sshll.u32 [#allocation12], 4
          %s276 = int_to_ptr.vmem [resolvable:$true] %s275
          %281 = dma.hbm_to_vmem [thread:$0]  %s2, 8192, %s276, [#allocation11], 512, 512, 32
        $region20: #{lstm_net_forward.1} parent=11 // pred_fallthru
          _
        // Predicated region
        $region21: #{lstm_net_forward.1} parent=11 // pred_check
          %p282 = pneg %p115
        $region22: #{lstm_net_forward.1} parent=11 // pred_check_branch
          %284 = sbr.rel (%p282) target = $region24
        $region23: #{lstm_net_forward.1} parent=11 // pred_region
          %s286 = ssub.s32 8192, 8192
          %287 = vsyncadd [#allocation14], %s286
          %s288 = sshll.u32 [#allocation13], 4
          %s289 = int_to_ptr.vmem [resolvable:$true] %s288
          %294 = dma.hbm_to_vmem [thread:$0]  %s3, 8192, %s289, [#allocation14], 512, 512, 32
        $region24: #{lstm_net_forward.1} parent=11 // pred_fallthru
          _
        // Predicated region
        $region25: #{lstm_net_forward.1} parent=11 // pred_check
          %p295 = pneg %p136
        $region26: #{lstm_net_forward.1} parent=11 // pred_check_branch
          %297 = sbr.rel (%p295) target = $region28
        $region27: #{lstm_net_forward.1} parent=11 // pred_region
          %s299 = ssub.s32 64, 64
          %300 = vsyncadd [#allocation14], %s299
          %s302 = sshll.u32 [#allocation15], 4
          %s303 = int_to_ptr.vmem [resolvable:$true] %s302
          %305 = dma.hbm_to_vmem [thread:$0]  %s4, 64, %s303, [#allocation14]
        $region28: #{lstm_net_forward.1} parent=11 // pred_fallthru
          _
        // Predicated region
        $region29: #{lstm_net_forward.1} parent=11 // pred_check
          %p306 = pneg %p157
        $region30: #{lstm_net_forward.1} parent=11 // pred_check_branch
          %308 = sbr.rel (%p306) target = $region32
        $region31: #{lstm_net_forward.1} parent=11 // pred_region
          %s310 = ssub.s32 2048, 2048
          %311 = vsyncadd [#allocation17], %s310
          %s312 = sshll.u32 [#allocation16], 4
          %s313 = int_to_ptr.vmem [resolvable:$true] %s312
          %318 = dma.hbm_to_vmem [thread:$0]  %s5, 2048, %s313, [#allocation17], 128, 128, 8
        $region32: #{lstm_net_forward.1} parent=11 // pred_fallthru
          _
        // Predicated region
        $region33: #{lstm_net_forward.1} parent=11 // pred_check
          %p319 = pneg %p178
        $region34: #{lstm_net_forward.1} parent=11 // pred_check_branch
          %321 = sbr.rel (%p319) target = $region36
        $region35: #{lstm_net_forward.1} parent=11 // pred_region
          _
        $region36: #{lstm_net_forward.1} parent=11 // pred_fallthru
          _
      $region12: #{lstm_net_forward.1} parent=5 // pred_fallthru
        _
      %p322 = scmp.lt.s32.totalorder %s26, 2
      // Predicated region
      $region37: #{lstm_net_forward.1} parent=5 // pred_check
        %p323 = pneg %p322
      $region38: #{lstm_net_forward.1} parent=5 // pred_check_branch
        %325 = sbr.rel (%p323) target = $region40
      $region39: #{lstm_net_forward.1} parent=5 // pred_region
        // Predicated region
        $region41: #{lstm_net_forward.1} parent=39 // pred_check
          %p326 = pneg %p46
        $region42: #{lstm_net_forward.1} parent=39 // pred_check_branch
          %328 = sbr.rel (%p326) target = $region44
        $region43: #{lstm_net_forward.1} parent=39 // pred_region
          %s329 = sand.u32 %s36, 1
          %s330 = scalar_lea.sflag [#allocation8], %s329
          %s331 = sand.u32 %s36, 1
          %s332 = smul.addr %s331, 256
          %s333 = scalar_lea.vmem [#allocation7], %s332
          %s334 = smul.u32 8, %s26
          %s336 = ssub.s32 4096, 4096
          %337 = vsyncadd %s330, %s336
          %s338 = smul.addr %s334, 4
          %s339 = smul.addr %s338, 128
          %s340 = scalar_lea.hbm %s0, %s339
          %s341 = sshll.u32 %s333, 4
          %s342 = int_to_ptr.vmem [resolvable:$true] %s341
          %347 = dma.hbm_to_vmem [thread:$0]  %s340, 4096, %s342, %s330, 512, 512, 32
        $region44: #{lstm_net_forward.1} parent=39 // pred_fallthru
          _
      $region40: #{lstm_net_forward.1} parent=5 // pred_fallthru
        _
      %p348 = scmp.le.s32.totalorder 1, %s26
      %p349 = scmp.lt.s32.totalorder %s26, 3
      %p350 = pnand %p348, %p349
      %p351 = pneg %p350
      // Predicated region
      $region45: #{lstm_net_forward.1} parent=5 // pred_check
        _
      $region46: #{lstm_net_forward.1} parent=5 // pred_check_branch
        %353 = sbr.rel (%p350) target = $region48
      $region47: #{lstm_net_forward.1} parent=5 // pred_region
        %s354 = ssub.s32 %s26, 1
        %s355 = sand.u32 %s39, 1
        %s356 = scalar_lea.sflag [#allocation8], %s355
        %s357 = sand.u32 %s39, 1
        %s358 = smul.addr %s357, 256
        %s359 = scalar_lea.vmem [#allocation7], %s358
        // Predicated region
        $region49: #{lstm_net_forward.1} parent=47 // pred_check
          %p360 = pneg %p52
        $region50: #{lstm_net_forward.1} parent=47 // pred_check_branch
          %362 = sbr.rel (%p360) target = $region52
        $region51: #{lstm_net_forward.1} parent=47 // pred_region
          %363 = dma.done %s356, 4096
        $region52: #{lstm_net_forward.1} parent=47 // pred_fallthru
          _
        // Predicated region
        $region53: #{lstm_net_forward.1} parent=47 // pred_check
          %p364 = pneg %p73
        $region54: #{lstm_net_forward.1} parent=47 // pred_check_branch
          %366 = sbr.rel (%p364) target = $region56
        $region55: #{lstm_net_forward.1} parent=47 // pred_region
          %367 = dma.done [#allocation11], 8192
        $region56: #{lstm_net_forward.1} parent=47 // pred_fallthru
          _
        // Predicated region
        $region57: #{lstm_net_forward.1} parent=47 // pred_check
          %p368 = pneg %p94
        $region58: #{lstm_net_forward.1} parent=47 // pred_check_branch
          %370 = sbr.rel (%p368) target = $region60
        $region59: #{lstm_net_forward.1} parent=47 // pred_region
          %371 = dma.done [#allocation11], 8192
        $region60: #{lstm_net_forward.1} parent=47 // pred_fallthru
          _
        // Predicated region
        $region61: #{lstm_net_forward.1} parent=47 // pred_check
          %p372 = pneg %p115
        $region62: #{lstm_net_forward.1} parent=47 // pred_check_branch
          %374 = sbr.rel (%p372) target = $region64
        $region63: #{lstm_net_forward.1} parent=47 // pred_region
          %375 = dma.done [#allocation14], 8192
        $region64: #{lstm_net_forward.1} parent=47 // pred_fallthru
          _
        // Predicated region
        $region65: #{lstm_net_forward.1} parent=47 // pred_check
          %p376 = pneg %p136
        $region66: #{lstm_net_forward.1} parent=47 // pred_check_branch
          %378 = sbr.rel (%p376) target = $region68
        $region67: #{lstm_net_forward.1} parent=47 // pred_region
          %379 = dma.done [#allocation14], 64
        $region68: #{lstm_net_forward.1} parent=47 // pred_fallthru
          _
        // Predicated region
        $region69: #{lstm_net_forward.1} parent=47 // pred_check
          %p380 = pneg %p157
        $region70: #{lstm_net_forward.1} parent=47 // pred_check_branch
          %382 = sbr.rel (%p380) target = $region72
        $region71: #{lstm_net_forward.1} parent=47 // pred_region
          %383 = dma.done [#allocation17], 2048
        $region72: #{lstm_net_forward.1} parent=47 // pred_fallthru
          _
        %s384 = sand.u32 %s39, 1
        %s385 = scalar_lea.sflag [#allocation8], %s384
        %s386 = sand.u32 %s39, 1
        %s387 = smul.addr %s386, 256
        %s388 = scalar_lea.vmem [#allocation7], %s387
        %p389 = pneg %p52
        %p390 = pneg %p49
        %p391 = pneg %p73
        %p392 = pneg %p70
        %p393 = pneg %p94
        %p394 = pneg %p91
        %p395 = pneg %p115
        %p396 = pneg %p112
        %p397 = pneg %p136
        %p398 = pneg %p133
        %p399 = pneg %p157
        %p400 = pneg %p154
        %p401 = pneg %p178
        %p402 = pneg %p175
        %p403 = pneg %p199
        %p404 = pneg %p196
        %p405 = pneg %p220
        %p406 = pneg %p217
        %p407 = pneg %p241
        %p408 = pneg %p238
        %s409 = smul.u32 8, %s31
        %p410 = scmp.eq.s32.totalorder %s31, 0
        // Predicated region
        $region73: #{lstm_net_forward.1} parent=47 // pred_check
          %p411 = pneg %p410
        $region74: #{lstm_net_forward.1} parent=47 // pred_check_branch
          %413 = sbr.rel (%p411) target = $region76
        $region75: #{lstm_net_forward.1} parent=47 // pred_region
          %414 = vst [vmem:[#allocation2] sm:$0xff] 0.0
          %415 = vst [vmem:[#allocation3] sm:$0xff] 0.0
          %416 = vst [vmem:[#allocation4] sm:$0xff] 0.0
          %417 = vst [vmem:[#allocation5] sm:$0xff] 0.0
        $region76: #{lstm_net_forward.1} parent=47 // pred_fallthru
          _
        %v418 = vld [vmem:[#allocation10] sm:$0xff]
        %v419 = vld [vmem:[#allocation10 + $0x8] sm:$0xff]
        %v420 = vld [vmem:[#allocation10 + $0x10] sm:$0xff]
        %v421 = vld [vmem:[#allocation10 + $0x18] sm:$0xff]
        %v422 = vld [vmem:[#allocation10 + $0x20] sm:$0xff]
        %v423 = vld [vmem:[#allocation10 + $0x28] sm:$0xff]
        %v424 = vld [vmem:[#allocation10 + $0x30] sm:$0xff]
        %v425 = vld [vmem:[#allocation10 + $0x38] sm:$0xff]
        %v426 = vld [vmem:[#allocation10 + $0x40] sm:$0xff]
        %v427 = vld [vmem:[#allocation10 + $0x48] sm:$0xff]
        %v428 = vld [vmem:[#allocation10 + $0x50] sm:$0xff]
        %v429 = vld [vmem:[#allocation10 + $0x58] sm:$0xff]
        %v430 = vld [vmem:[#allocation10 + $0x60] sm:$0xff]
        %v431 = vld [vmem:[#allocation10 + $0x68] sm:$0xff]
        %v432 = vld [vmem:[#allocation10 + $0x70] sm:$0xff]
        %v433 = vld [vmem:[#allocation10 + $0x78] sm:$0xff]
        %v434 = vld [vmem:[#allocation10 + $0x80] sm:$0xff]
        %v435 = vld [vmem:[#allocation10 + $0x88] sm:$0xff]
        %v436 = vld [vmem:[#allocation10 + $0x90] sm:$0xff]
        %v437 = vld [vmem:[#allocation10 + $0x98] sm:$0xff]
        %v438 = vld [vmem:[#allocation10 + $0xa0] sm:$0xff]
        %v439 = vld [vmem:[#allocation10 + $0xa8] sm:$0xff]
        %v440 = vld [vmem:[#allocation10 + $0xb0] sm:$0xff]
        %v441 = vld [vmem:[#allocation10 + $0xb8] sm:$0xff]
        %v442 = vld [vmem:[#allocation10 + $0xc0] sm:$0xff]
        %v443 = vld [vmem:[#allocation10 + $0xc8] sm:$0xff]
        %v444 = vld [vmem:[#allocation10 + $0xd0] sm:$0xff]
        %v445 = vld [vmem:[#allocation10 + $0xd8] sm:$0xff]
        %v446 = vld [vmem:[#allocation10 + $0xe0] sm:$0xff]
        %v447 = vld [vmem:[#allocation10 + $0xe8] sm:$0xff]
        %v448 = vld [vmem:[#allocation10 + $0xf0] sm:$0xff]
        %v449 = vld [vmem:[#allocation10 + $0xf8] sm:$0xff]
        %v450 = vld [vmem:[#allocation10 + $0x100] sm:$0xff]
        %v451 = vld [vmem:[#allocation10 + $0x108] sm:$0xff]
        %v452 = vld [vmem:[#allocation10 + $0x110] sm:$0xff]
        %v453 = vld [vmem:[#allocation10 + $0x118] sm:$0xff]
        %v454 = vld [vmem:[#allocation10 + $0x120] sm:$0xff]
        %v455 = vld [vmem:[#allocation10 + $0x128] sm:$0xff]
        %v456 = vld [vmem:[#allocation10 + $0x130] sm:$0xff]
        %v457 = vld [vmem:[#allocation10 + $0x138] sm:$0xff]
        %v458 = vld [vmem:[#allocation10 + $0x140] sm:$0xff]
        %v459 = vld [vmem:[#allocation10 + $0x148] sm:$0xff]
        %v460 = vld [vmem:[#allocation10 + $0x150] sm:$0xff]
        %v461 = vld [vmem:[#allocation10 + $0x158] sm:$0xff]
        %v462 = vld [vmem:[#allocation10 + $0x160] sm:$0xff]
        %v463 = vld [vmem:[#allocation10 + $0x168] sm:$0xff]
        %v464 = vld [vmem:[#allocation10 + $0x170] sm:$0xff]
        %v465 = vld [vmem:[#allocation10 + $0x178] sm:$0xff]
        %v466 = vld [vmem:[#allocation10 + $0x180] sm:$0xff]
        %v467 = vld [vmem:[#allocation10 + $0x188] sm:$0xff]
        %v468 = vld [vmem:[#allocation10 + $0x190] sm:$0xff]
        %v469 = vld [vmem:[#allocation10 + $0x198] sm:$0xff]
        %v470 = vld [vmem:[#allocation10 + $0x1a0] sm:$0xff]
        %v471 = vld [vmem:[#allocation10 + $0x1a8] sm:$0xff]
        %v472 = vld [vmem:[#allocation10 + $0x1b0] sm:$0xff]
        %v473 = vld [vmem:[#allocation10 + $0x1b8] sm:$0xff]
        %v474 = vld [vmem:[#allocation10 + $0x1c0] sm:$0xff]
        %v475 = vld [vmem:[#allocation10 + $0x1c8] sm:$0xff]
        %v476 = vld [vmem:[#allocation10 + $0x1d0] sm:$0xff]
        %v477 = vld [vmem:[#allocation10 + $0x1d8] sm:$0xff]
        %v478 = vld [vmem:[#allocation10 + $0x1e0] sm:$0xff]
        %v479 = vld [vmem:[#allocation10 + $0x1e8] sm:$0xff]
        %v480 = vld [vmem:[#allocation10 + $0x1f0] sm:$0xff]
        %v481 = vld [vmem:[#allocation10 + $0x1f8] sm:$0xff]
        %v482 = vld [vmem:[#allocation12] sm:$0xff]
        %v483 = vld [vmem:[#allocation12 + $0x8] sm:$0xff]
        %v484 = vld [vmem:[#allocation12 + $0x10] sm:$0xff]
        %v485 = vld [vmem:[#allocation12 + $0x18] sm:$0xff]
        %v486 = vld [vmem:[#allocation12 + $0x20] sm:$0xff]
        %v487 = vld [vmem:[#allocation12 + $0x28] sm:$0xff]
        %v488 = vld [vmem:[#allocation12 + $0x30] sm:$0xff]
        %v489 = vld [vmem:[#allocation12 + $0x38] sm:$0xff]
        %v490 = vld [vmem:[#allocation12 + $0x40] sm:$0xff]
        %v491 = vld [vmem:[#allocation12 + $0x48] sm:$0xff]
        %v492 = vld [vmem:[#allocation12 + $0x50] sm:$0xff]
        %v493 = vld [vmem:[#allocation12 + $0x58] sm:$0xff]
        %v494 = vld [vmem:[#allocation12 + $0x60] sm:$0xff]
        %v495 = vld [vmem:[#allocation12 + $0x68] sm:$0xff]
        %v496 = vld [vmem:[#allocation12 + $0x70] sm:$0xff]
        %v497 = vld [vmem:[#allocation12 + $0x78] sm:$0xff]
        %v498 = vld [vmem:[#allocation12 + $0x80] sm:$0xff]
        %v499 = vld [vmem:[#allocation12 + $0x88] sm:$0xff]
        %v500 = vld [vmem:[#allocation12 + $0x90] sm:$0xff]
        %v501 = vld [vmem:[#allocation12 + $0x98] sm:$0xff]
        %v502 = vld [vmem:[#allocation12 + $0xa0] sm:$0xff]
        %v503 = vld [vmem:[#allocation12 + $0xa8] sm:$0xff]
        %v504 = vld [vmem:[#allocation12 + $0xb0] sm:$0xff]
        %v505 = vld [vmem:[#allocation12 + $0xb8] sm:$0xff]
        %v506 = vld [vmem:[#allocation12 + $0xc0] sm:$0xff]
        %v507 = vld [vmem:[#allocation12 + $0xc8] sm:$0xff]
        %v508 = vld [vmem:[#allocation12 + $0xd0] sm:$0xff]
        %v509 = vld [vmem:[#allocation12 + $0xd8] sm:$0xff]
        %v510 = vld [vmem:[#allocation12 + $0xe0] sm:$0xff]
        %v511 = vld [vmem:[#allocation12 + $0xe8] sm:$0xff]
        %v512 = vld [vmem:[#allocation12 + $0xf0] sm:$0xff]
        %v513 = vld [vmem:[#allocation12 + $0xf8] sm:$0xff]
        %v514 = vld [vmem:[#allocation12 + $0x100] sm:$0xff]
        %v515 = vld [vmem:[#allocation12 + $0x108] sm:$0xff]
        %v516 = vld [vmem:[#allocation12 + $0x110] sm:$0xff]
        %v517 = vld [vmem:[#allocation12 + $0x118] sm:$0xff]
        %v518 = vld [vmem:[#allocation12 + $0x120] sm:$0xff]
        %v519 = vld [vmem:[#allocation12 + $0x128] sm:$0xff]
        %v520 = vld [vmem:[#allocation12 + $0x130] sm:$0xff]
        %v521 = vld [vmem:[#allocation12 + $0x138] sm:$0xff]
        %v522 = vld [vmem:[#allocation12 + $0x140] sm:$0xff]
        %v523 = vld [vmem:[#allocation12 + $0x148] sm:$0xff]
        %v524 = vld [vmem:[#allocation12 + $0x150] sm:$0xff]
        %v525 = vld [vmem:[#allocation12 + $0x158] sm:$0xff]
        %v526 = vld [vmem:[#allocation12 + $0x160] sm:$0xff]
        %v527 = vld [vmem:[#allocation12 + $0x168] sm:$0xff]
        %v528 = vld [vmem:[#allocation12 + $0x170] sm:$0xff]
        %v529 = vld [vmem:[#allocation12 + $0x178] sm:$0xff]
        %v530 = vld [vmem:[#allocation12 + $0x180] sm:$0xff]
        %v531 = vld [vmem:[#allocation12 + $0x188] sm:$0xff]
        %v532 = vld [vmem:[#allocation12 + $0x190] sm:$0xff]
        %v533 = vld [vmem:[#allocation12 + $0x198] sm:$0xff]
        %v534 = vld [vmem:[#allocation12 + $0x1a0] sm:$0xff]
        %v535 = vld [vmem:[#allocation12 + $0x1a8] sm:$0xff]
        %v536 = vld [vmem:[#allocation12 + $0x1b0] sm:$0xff]
        %v537 = vld [vmem:[#allocation12 + $0x1b8] sm:$0xff]
        %v538 = vld [vmem:[#allocation12 + $0x1c0] sm:$0xff]
        %v539 = vld [vmem:[#allocation12 + $0x1c8] sm:$0xff]
        %v540 = vld [vmem:[#allocation12 + $0x1d0] sm:$0xff]
        %v541 = vld [vmem:[#allocation12 + $0x1d8] sm:$0xff]
        %v542 = vld [vmem:[#allocation12 + $0x1e0] sm:$0xff]
        %v543 = vld [vmem:[#allocation12 + $0x1e8] sm:$0xff]
        %v544 = vld [vmem:[#allocation12 + $0x1f0] sm:$0xff]
        %v545 = vld [vmem:[#allocation12 + $0x1f8] sm:$0xff]
        %v546 = vld [vmem:[#allocation13] sm:$0xff]
        %v547 = vld [vmem:[#allocation13 + $0x8] sm:$0xff]
        %v548 = vld [vmem:[#allocation13 + $0x10] sm:$0xff]
        %v549 = vld [vmem:[#allocation13 + $0x18] sm:$0xff]
        %v550 = vld [vmem:[#allocation13 + $0x20] sm:$0xff]
        %v551 = vld [vmem:[#allocation13 + $0x28] sm:$0xff]
        %v552 = vld [vmem:[#allocation13 + $0x30] sm:$0xff]
        %v553 = vld [vmem:[#allocation13 + $0x38] sm:$0xff]
        %v554 = vld [vmem:[#allocation13 + $0x40] sm:$0xff]
        %v555 = vld [vmem:[#allocation13 + $0x48] sm:$0xff]
        %v556 = vld [vmem:[#allocation13 + $0x50] sm:$0xff]
        %v557 = vld [vmem:[#allocation13 + $0x58] sm:$0xff]
        %v558 = vld [vmem:[#allocation13 + $0x60] sm:$0xff]
        %v559 = vld [vmem:[#allocation13 + $0x68] sm:$0xff]
        %v560 = vld [vmem:[#allocation13 + $0x70] sm:$0xff]
        %v561 = vld [vmem:[#allocation13 + $0x78] sm:$0xff]
        %v562 = vld [vmem:[#allocation13 + $0x80] sm:$0xff]
        %v563 = vld [vmem:[#allocation13 + $0x88] sm:$0xff]
        %v564 = vld [vmem:[#allocation13 + $0x90] sm:$0xff]
        %v565 = vld [vmem:[#allocation13 + $0x98] sm:$0xff]
        %v566 = vld [vmem:[#allocation13 + $0xa0] sm:$0xff]
        %v567 = vld [vmem:[#allocation13 + $0xa8] sm:$0xff]
        %v568 = vld [vmem:[#allocation13 + $0xb0] sm:$0xff]
        %v569 = vld [vmem:[#allocation13 + $0xb8] sm:$0xff]
        %v570 = vld [vmem:[#allocation13 + $0xc0] sm:$0xff]
        %v571 = vld [vmem:[#allocation13 + $0xc8] sm:$0xff]
        %v572 = vld [vmem:[#allocation13 + $0xd0] sm:$0xff]
        %v573 = vld [vmem:[#allocation13 + $0xd8] sm:$0xff]
        %v574 = vld [vmem:[#allocation13 + $0xe0] sm:$0xff]
        %v575 = vld [vmem:[#allocation13 + $0xe8] sm:$0xff]
        %v576 = vld [vmem:[#allocation13 + $0xf0] sm:$0xff]
        %v577 = vld [vmem:[#allocation13 + $0xf8] sm:$0xff]
        %v578 = vld [vmem:[#allocation13 + $0x100] sm:$0xff]
        %v579 = vld [vmem:[#allocation13 + $0x108] sm:$0xff]
        %v580 = vld [vmem:[#allocation13 + $0x110] sm:$0xff]
        %v581 = vld [vmem:[#allocation13 + $0x118] sm:$0xff]
        %v582 = vld [vmem:[#allocation13 + $0x120] sm:$0xff]
        %v583 = vld [vmem:[#allocation13 + $0x128] sm:$0xff]
        %v584 = vld [vmem:[#allocation13 + $0x130] sm:$0xff]
        %v585 = vld [vmem:[#allocation13 + $0x138] sm:$0xff]
        %v586 = vld [vmem:[#allocation13 + $0x140] sm:$0xff]
        %v587 = vld [vmem:[#allocation13 + $0x148] sm:$0xff]
        %v588 = vld [vmem:[#allocation13 + $0x150] sm:$0xff]
        %v589 = vld [vmem:[#allocation13 + $0x158] sm:$0xff]
        %v590 = vld [vmem:[#allocation13 + $0x160] sm:$0xff]
        %v591 = vld [vmem:[#allocation13 + $0x168] sm:$0xff]
        %v592 = vld [vmem:[#allocation13 + $0x170] sm:$0xff]
        %v593 = vld [vmem:[#allocation13 + $0x178] sm:$0xff]
        %v594 = vld [vmem:[#allocation13 + $0x180] sm:$0xff]
        %v595 = vld [vmem:[#allocation13 + $0x188] sm:$0xff]
        %v596 = vld [vmem:[#allocation13 + $0x190] sm:$0xff]
        %v597 = vld [vmem:[#allocation13 + $0x198] sm:$0xff]
        %v598 = vld [vmem:[#allocation13 + $0x1a0] sm:$0xff]
        %v599 = vld [vmem:[#allocation13 + $0x1a8] sm:$0xff]
        %v600 = vld [vmem:[#allocation13 + $0x1b0] sm:$0xff]
        %v601 = vld [vmem:[#allocation13 + $0x1b8] sm:$0xff]
        %v602 = vld [vmem:[#allocation13 + $0x1c0] sm:$0xff]
        %v603 = vld [vmem:[#allocation13 + $0x1c8] sm:$0xff]
        %v604 = vld [vmem:[#allocation13 + $0x1d0] sm:$0xff]
        %v605 = vld [vmem:[#allocation13 + $0x1d8] sm:$0xff]
        %v606 = vld [vmem:[#allocation13 + $0x1e0] sm:$0xff]
        %v607 = vld [vmem:[#allocation13 + $0x1e8] sm:$0xff]
        %v608 = vld [vmem:[#allocation13 + $0x1f0] sm:$0xff]
        %v609 = vld [vmem:[#allocation13 + $0x1f8] sm:$0xff]
        %v610 = vld [vmem:[#allocation15] sm:$0xf]
        %v611 = vld [vmem:[#allocation2] sm:$0xff]
        %v612 = vld [vmem:[#allocation3] sm:$0xff]
        %v613 = vld [vmem:[#allocation4] sm:$0xff]
        %v614 = vld [vmem:[#allocation5] sm:$0xff]
        %v615 = vld [vmem:[%s359] sm:$0xff]
        %v616 = vld [vmem:[%s359 + $0x8] sm:$0xff]
        %v617 = vld [vmem:[%s359 + $0x10] sm:$0xff]
        %v618 = vld [vmem:[%s359 + $0x18] sm:$0xff]
        %619 = vmatprep.subr.mxu0 %v419
        %620 = vmatpush1.msra.mxu0 %v418
        %621 = vmatprep.subr.mxu0 %v423
        %622 = vmatpush1.msra.mxu0 %v422
        %623 = vmatprep.subr.mxu0 %v427
        %624 = vmatpush1.msra.mxu0 %v426
        %625 = vmatprep.subr.mxu0 %v431
        %626 = vmatpush1.msra.mxu0 %v430
        %627 = vmatprep.subr.mxu0 %v435
        %628 = vmatpush1.msra.mxu0 %v434
        %629 = vmatprep.subr.mxu0 %v439
        %630 = vmatpush1.msra.mxu0 %v438
        %631 = vmatprep.subr.mxu0 %v443
        %632 = vmatpush1.msra.mxu0 %v442
        %633 = vmatprep.subr.mxu0 %v447
        %634 = vmatpush1.msra.mxu0 %v446
        %635 = vmatprep.subr.mxu0 %v451
        %636 = vmatpush1.msra.mxu0 %v450
        %637 = vmatprep.subr.mxu0 %v455
        %638 = vmatpush1.msra.mxu0 %v454
        %639 = vmatprep.subr.mxu0 %v459
        %640 = vmatpush1.msra.mxu0 %v458
        %641 = vmatprep.subr.mxu0 %v463
        %642 = vmatpush1.msra.mxu0 %v462
        %643 = vmatprep.subr.mxu0 %v467
        %644 = vmatpush1.msra.mxu0 %v466
        %645 = vmatprep.subr.mxu0 %v471
        %646 = vmatpush1.msra.mxu0 %v470
        %647 = vmatprep.subr.mxu0 %v475
        %648 = vmatpush1.msra.mxu0 %v474
        %649 = vmatprep.subr.mxu0 %v479
        %650 = vmatpush1.msra.mxu0 %v478
        %651 = vmatprep.subr.mxu0 0.0
        %652 = vmatpush1.msra.mxu0 0.0
        %653 = vmatprep.subr.mxu0 0.0
        %654 = vmatpush1.msra.mxu0 0.0
        %655 = vmatprep.subr.mxu0 0.0
        %656 = vmatpush1.msra.mxu0 0.0
        %657 = vmatprep.subr.mxu0 0.0
        %658 = vmatpush1.msra.mxu0 0.0
        %659 = vmatprep.subr.mxu0 0.0
        %660 = vmatpush1.msra.mxu0 0.0
        %661 = vmatprep.subr.mxu0 0.0
        %662 = vmatpush1.msra.mxu0 0.0
        %663 = vmatprep.subr.mxu0 0.0
        %664 = vmatpush1.msra.mxu0 0.0
        %665 = vmatprep.subr.mxu0 0.0
        %666 = vmatpush1.msra.mxu0 0.0
        %667 = vmatprep.subr.mxu0 0.0
        %668 = vmatpush1.msra.mxu0 0.0
        %669 = vmatprep.subr.mxu0 0.0
        %670 = vmatpush1.msra.mxu0 0.0
        %671 = vmatprep.subr.mxu0 0.0
        %672 = vmatpush1.msra.mxu0 0.0
        %673 = vmatprep.subr.mxu0 0.0
        %674 = vmatpush1.msra.mxu0 0.0
        %675 = vmatprep.subr.mxu0 0.0
        %676 = vmatpush1.msra.mxu0 0.0
        %677 = vmatprep.subr.mxu0 0.0
        %678 = vmatpush1.msra.mxu0 0.0
        %679 = vmatprep.subr.mxu0 0.0
        %680 = vmatpush1.msra.mxu0 0.0
        %681 = vmatprep.subr.mxu0 0.0
        %682 = vmatpush1.msra.mxu0 0.0
        %683 = vmatprep.mubr.f32.mxu0 0.0
        %684 = vmatmul.mubr.f32.gmra.mrb[0].mxu0 %v611
        %v685 = vpop.f32.mrb[0].mxu0
        %v686 = vadd.f32 0.0, %v685
        %v687 = vpop.f32.mrb[0].mxu0
        %v688 = vadd.f32 0.0, %v687
        %689 = vdwg.mxu0
        %690 = vmatprep.subr.mxu0 %v421
        %691 = vmatpush1.msra.mxu0 %v420
        %692 = vmatprep.subr.mxu0 %v425
        %693 = vmatpush1.msra.mxu0 %v424
        %694 = vmatprep.subr.mxu0 %v429
        %695 = vmatpush1.msra.mxu0 %v428
        %696 = vmatprep.subr.mxu0 %v433
        %697 = vmatpush1.msra.mxu0 %v432
        %698 = vmatprep.subr.mxu0 %v437
        %699 = vmatpush1.msra.mxu0 %v436
        %700 = vmatprep.subr.mxu0 %v441
        %701 = vmatpush1.msra.mxu0 %v440
        %702 = vmatprep.subr.mxu0 %v445
        %703 = vmatpush1.msra.mxu0 %v444
        %704 = vmatprep.subr.mxu0 %v449
        %705 = vmatpush1.msra.mxu0 %v448
        %706 = vmatprep.subr.mxu0 %v453
        %707 = vmatpush1.msra.mxu0 %v452
        %708 = vmatprep.subr.mxu0 %v457
        %709 = vmatpush1.msra.mxu0 %v456
        %710 = vmatprep.subr.mxu0 %v461
        %711 = vmatpush1.msra.mxu0 %v460
        %712 = vmatprep.subr.mxu0 %v465
        %713 = vmatpush1.msra.mxu0 %v464
        %714 = vmatprep.subr.mxu0 %v469
        %715 = vmatpush1.msra.mxu0 %v468
        %716 = vmatprep.subr.mxu0 %v473
        %717 = vmatpush1.msra.mxu0 %v472
        %718 = vmatprep.subr.mxu0 %v477
        %719 = vmatpush1.msra.mxu0 %v476
        %720 = vmatprep.subr.mxu0 %v481
        %721 = vmatpush1.msra.mxu0 %v480
        %722 = vmatprep.subr.mxu0 0.0
        %723 = vmatpush1.msra.mxu0 0.0
        %724 = vmatprep.subr.mxu0 0.0
        %725 = vmatpush1.msra.mxu0 0.0
        %726 = vmatprep.subr.mxu0 0.0
        %727 = vmatpush1.msra.mxu0 0.0
        %728 = vmatprep.subr.mxu0 0.0
        %729 = vmatpush1.msra.mxu0 0.0
        %730 = vmatprep.subr.mxu0 0.0
        %731 = vmatpush1.msra.mxu0 0.0
        %732 = vmatprep.subr.mxu0 0.0
        %733 = vmatpush1.msra.mxu0 0.0
        %734 = vmatprep.subr.mxu0 0.0
        %735 = vmatpush1.msra.mxu0 0.0
        %736 = vmatprep.subr.mxu0 0.0
        %737 = vmatpush1.msra.mxu0 0.0
        %738 = vmatprep.subr.mxu0 0.0
        %739 = vmatpush1.msra.mxu0 0.0
        %740 = vmatprep.subr.mxu0 0.0
        %741 = vmatpush1.msra.mxu0 0.0
        %742 = vmatprep.subr.mxu0 0.0
        %743 = vmatpush1.msra.mxu0 0.0
        %744 = vmatprep.subr.mxu0 0.0
        %745 = vmatpush1.msra.mxu0 0.0
        %746 = vmatprep.subr.mxu0 0.0
        %747 = vmatpush1.msra.mxu0 0.0
        %748 = vmatprep.subr.mxu0 0.0
        %749 = vmatpush1.msra.mxu0 0.0
        %750 = vmatprep.subr.mxu0 0.0
        %751 = vmatpush1.msra.mxu0 0.0
        %752 = vmatprep.subr.mxu0 0.0
        %753 = vmatpush1.msra.mxu0 0.0
        %754 = vmatprep.mubr.f32.mxu0 0.0
        %755 = vmatmul.mubr.f32.gmra.mrb[0].mxu0 %v611
        %v756 = vpop.f32.mrb[0].mxu0
        %v757 = vadd.f32 0.0, %v756
        %v758 = vpop.f32.mrb[0].mxu0
        %v759 = vadd.f32 0.0, %v758
        %760 = vdwg.mxu0
        %v761 = vadd.f32 %v615, %v686
        %v762 = vadd.f32 %v616, %v688
        %v763 = vadd.f32 %v617, %v757
        %v764 = vadd.f32 %v618, %v759
        %v765 = vxor.u32 %v761, 2147483648
        %v766 = vxor.u32 %v762, 2147483648
        %v767 = vxor.u32 %v763, 2147483648
        %v768 = vmul.f32 %v765, 1.442695
        %v769 = vpow.pop %v768
        %v770 = vmul.f32 %v766, 1.442695
        %v771 = vpow.pop %v770
        %v772 = vmul.f32 %v767, 1.442695
        %v773 = vpow.pop %v772
        %v774 = vadd.f32 %v769, 1.0
        %v775 = vadd.f32 %v771, 1.0
        %v776 = vadd.f32 %v773, 1.0
        %v777 = vrcp.pop %v774
        %v778 = vmul.f32 1.0, %v777
        %v779 = vrcp.pop %v775
        %v780 = vmul.f32 1.0, %v779
        %v781 = vrcp.pop %v776
        %v782 = vmul.f32 1.0, %v781
        %v783 = vtanh.pop %v764
        %v784 = vmul.f32 %v780, %v612
        %v785 = vmul.f32 %v778, %v783
        %v786 = vadd.f32 %v784, %v785
        %v787 = vtanh.pop %v786
        %v788 = vmul.f32 %v782, %v787
        %789 = vmatprep.subr.mxu0 %v547
        %790 = vmatpush1.msra.mxu0 %v546
        %791 = vmatprep.subr.mxu0 %v551
        %792 = vmatpush1.msra.mxu0 %v550
        %793 = vmatprep.subr.mxu0 %v555
        %794 = vmatpush1.msra.mxu0 %v554
        %795 = vmatprep.subr.mxu0 %v559
        %796 = vmatpush1.msra.mxu0 %v558
        %797 = vmatprep.subr.mxu0 %v563
        %798 = vmatpush1.msra.mxu0 %v562
        %799 = vmatprep.subr.mxu0 %v567
        %800 = vmatpush1.msra.mxu0 %v566
        %801 = vmatprep.subr.mxu0 %v571
        %802 = vmatpush1.msra.mxu0 %v570
        %803 = vmatprep.subr.mxu0 %v575
        %804 = vmatpush1.msra.mxu0 %v574
        %805 = vmatprep.subr.mxu0 %v579
        %806 = vmatpush1.msra.mxu0 %v578
        %807 = vmatprep.subr.mxu0 %v583
        %808 = vmatpush1.msra.mxu0 %v582
        %809 = vmatprep.subr.mxu0 %v587
        %810 = vmatpush1.msra.mxu0 %v586
        %811 = vmatprep.subr.mxu0 %v591
        %812 = vmatpush1.msra.mxu0 %v590
        %813 = vmatprep.subr.mxu0 %v595
        %814 = vmatpush1.msra.mxu0 %v594
        %815 = vmatprep.subr.mxu0 %v599
        %816 = vmatpush1.msra.mxu0 %v598
        %817 = vmatprep.subr.mxu0 %v603
        %818 = vmatpush1.msra.mxu0 %v602
        %819 = vmatprep.subr.mxu0 %v607
        %820 = vmatpush1.msra.mxu0 %v606
        %821 = vmatprep.subr.mxu0 0.0
        %822 = vmatpush1.msra.mxu0 0.0
        %823 = vmatprep.subr.mxu0 0.0
        %824 = vmatpush1.msra.mxu0 0.0
        %825 = vmatprep.subr.mxu0 0.0
        %826 = vmatpush1.msra.mxu0 0.0
        %827 = vmatprep.subr.mxu0 0.0
        %828 = vmatpush1.msra.mxu0 0.0
        %829 = vmatprep.subr.mxu0 0.0
        %830 = vmatpush1.msra.mxu0 0.0
        %831 = vmatprep.subr.mxu0 0.0
        %832 = vmatpush1.msra.mxu0 0.0
        %833 = vmatprep.subr.mxu0 0.0
        %834 = vmatpush1.msra.mxu0 0.0
        %835 = vmatprep.subr.mxu0 0.0
        %836 = vmatpush1.msra.mxu0 0.0
        %837 = vmatprep.subr.mxu0 0.0
        %838 = vmatpush1.msra.mxu0 0.0
        %839 = vmatprep.subr.mxu0 0.0
        %840 = vmatpush1.msra.mxu0 0.0
        %841 = vmatprep.subr.mxu0 0.0
        %842 = vmatpush1.msra.mxu0 0.0
        %843 = vmatprep.subr.mxu0 0.0
        %844 = vmatpush1.msra.mxu0 0.0
        %845 = vmatprep.subr.mxu0 0.0
        %846 = vmatpush1.msra.mxu0 0.0
        %847 = vmatprep.subr.mxu0 0.0
        %848 = vmatpush1.msra.mxu0 0.0
        %849 = vmatprep.subr.mxu0 0.0
        %850 = vmatpush1.msra.mxu0 0.0
        %851 = vmatprep.subr.mxu0 0.0
        %852 = vmatpush1.msra.mxu0 0.0
        %853 = vmatprep.mubr.f32.mxu0 0.0
        %854 = vmatmul.mubr.f32.gmra.mrb[0].mxu0 %v613
        %v855 = vpop.f32.mrb[0].mxu0
        %v856 = vadd.f32 0.0, %v855
        %v857 = vpop.f32.mrb[0].mxu0
        %v858 = vadd.f32 0.0, %v857
        %859 = vdwg.mxu0
        %860 = vmatprep.subr.mxu0 %v549
        %861 = vmatpush1.msra.mxu0 %v548
        %862 = vmatprep.subr.mxu0 %v553
        %863 = vmatpush1.msra.mxu0 %v552
        %864 = vmatprep.subr.mxu0 %v557
        %865 = vmatpush1.msra.mxu0 %v556
        %866 = vmatprep.subr.mxu0 %v561
        %867 = vmatpush1.msra.mxu0 %v560
        %868 = vmatprep.subr.mxu0 %v565
        %869 = vmatpush1.msra.mxu0 %v564
        %870 = vmatprep.subr.mxu0 %v569
        %871 = vmatpush1.msra.mxu0 %v568
        %872 = vmatprep.subr.mxu0 %v573
        %873 = vmatpush1.msra.mxu0 %v572
        %874 = vmatprep.subr.mxu0 %v577
        %875 = vmatpush1.msra.mxu0 %v576
        %876 = vmatprep.subr.mxu0 %v581
        %877 = vmatpush1.msra.mxu0 %v580
        %878 = vmatprep.subr.mxu0 %v585
        %879 = vmatpush1.msra.mxu0 %v584
        %880 = vmatprep.subr.mxu0 %v589
        %881 = vmatpush1.msra.mxu0 %v588
        %882 = vmatprep.subr.mxu0 %v593
        %883 = vmatpush1.msra.mxu0 %v592
        %884 = vmatprep.subr.mxu0 %v597
        %885 = vmatpush1.msra.mxu0 %v596
        %886 = vmatprep.subr.mxu0 %v601
        %887 = vmatpush1.msra.mxu0 %v600
        %888 = vmatprep.subr.mxu0 %v605
        %889 = vmatpush1.msra.mxu0 %v604
        %890 = vmatprep.subr.mxu0 %v609
        %891 = vmatpush1.msra.mxu0 %v608
        %892 = vmatprep.subr.mxu0 0.0
        %893 = vmatpush1.msra.mxu0 0.0
        %894 = vmatprep.subr.mxu0 0.0
        %895 = vmatpush1.msra.mxu0 0.0
        %896 = vmatprep.subr.mxu0 0.0
        %897 = vmatpush1.msra.mxu0 0.0
        %898 = vmatprep.subr.mxu0 0.0
        %899 = vmatpush1.msra.mxu0 0.0
        %900 = vmatprep.subr.mxu0 0.0
        %901 = vmatpush1.msra.mxu0 0.0
        %902 = vmatprep.subr.mxu0 0.0
        %903 = vmatpush1.msra.mxu0 0.0
        %904 = vmatprep.subr.mxu0 0.0
        %905 = vmatpush1.msra.mxu0 0.0
        %906 = vmatprep.subr.mxu0 0.0
        %907 = vmatpush1.msra.mxu0 0.0
        %908 = vmatprep.subr.mxu0 0.0
        %909 = vmatpush1.msra.mxu0 0.0
        %910 = vmatprep.subr.mxu0 0.0
        %911 = vmatpush1.msra.mxu0 0.0
        %912 = vmatprep.subr.mxu0 0.0
        %913 = vmatpush1.msra.mxu0 0.0
        %914 = vmatprep.subr.mxu0 0.0
        %915 = vmatpush1.msra.mxu0 0.0
        %916 = vmatprep.subr.mxu0 0.0
        %917 = vmatpush1.msra.mxu0 0.0
        %918 = vmatprep.subr.mxu0 0.0
        %919 = vmatpush1.msra.mxu0 0.0
        %920 = vmatprep.subr.mxu0 0.0
        %921 = vmatpush1.msra.mxu0 0.0
        %922 = vmatprep.subr.mxu0 0.0
        %923 = vmatpush1.msra.mxu0 0.0
        %924 = vmatprep.mubr.f32.mxu0 0.0
        %925 = vmatmul.mubr.f32.gmra.mrb[0].mxu0 %v613
        %v926 = vpop.f32.mrb[0].mxu0
        %v927 = vadd.f32 0.0, %v926
        %v928 = vpop.f32.mrb[0].mxu0
        %v929 = vadd.f32 0.0, %v928
        %930 = vdwg.mxu0
        %931 = vmatprep.subr.mxu0 %v483
        %932 = vmatpush1.msra.mxu0 %v482
        %933 = vmatprep.subr.mxu0 %v487
        %934 = vmatpush1.msra.mxu0 %v486
        %935 = vmatprep.subr.mxu0 %v491
        %936 = vmatpush1.msra.mxu0 %v490
        %937 = vmatprep.subr.mxu0 %v495
        %938 = vmatpush1.msra.mxu0 %v494
        %939 = vmatprep.subr.mxu0 %v499
        %940 = vmatpush1.msra.mxu0 %v498
        %941 = vmatprep.subr.mxu0 %v503
        %942 = vmatpush1.msra.mxu0 %v502
        %943 = vmatprep.subr.mxu0 %v507
        %944 = vmatpush1.msra.mxu0 %v506
        %945 = vmatprep.subr.mxu0 %v511
        %946 = vmatpush1.msra.mxu0 %v510
        %947 = vmatprep.subr.mxu0 %v515
        %948 = vmatpush1.msra.mxu0 %v514
        %949 = vmatprep.subr.mxu0 %v519
        %950 = vmatpush1.msra.mxu0 %v518
        %951 = vmatprep.subr.mxu0 %v523
        %952 = vmatpush1.msra.mxu0 %v522
        %953 = vmatprep.subr.mxu0 %v527
        %954 = vmatpush1.msra.mxu0 %v526
        %955 = vmatprep.subr.mxu0 %v531
        %956 = vmatpush1.msra.mxu0 %v530
        %957 = vmatprep.subr.mxu0 %v535
        %958 = vmatpush1.msra.mxu0 %v534
        %959 = vmatprep.subr.mxu0 %v539
        %960 = vmatpush1.msra.mxu0 %v538
        %961 = vmatprep.subr.mxu0 %v543
        %962 = vmatpush1.msra.mxu0 %v542
        %963 = vmatprep.subr.mxu0 0.0
        %964 = vmatpush1.msra.mxu0 0.0
        %965 = vmatprep.subr.mxu0 0.0
        %966 = vmatpush1.msra.mxu0 0.0
        %967 = vmatprep.subr.mxu0 0.0
        %968 = vmatpush1.msra.mxu0 0.0
        %969 = vmatprep.subr.mxu0 0.0
        %970 = vmatpush1.msra.mxu0 0.0
        %971 = vmatprep.subr.mxu0 0.0
        %972 = vmatpush1.msra.mxu0 0.0
        %973 = vmatprep.subr.mxu0 0.0
        %974 = vmatpush1.msra.mxu0 0.0
        %975 = vmatprep.subr.mxu0 0.0
        %976 = vmatpush1.msra.mxu0 0.0
        %977 = vmatprep.subr.mxu0 0.0
        %978 = vmatpush1.msra.mxu0 0.0
        %979 = vmatprep.subr.mxu0 0.0
        %980 = vmatpush1.msra.mxu0 0.0
        %981 = vmatprep.subr.mxu0 0.0
        %982 = vmatpush1.msra.mxu0 0.0
        %983 = vmatprep.subr.mxu0 0.0
        %984 = vmatpush1.msra.mxu0 0.0
        %985 = vmatprep.subr.mxu0 0.0
        %986 = vmatpush1.msra.mxu0 0.0
        %987 = vmatprep.subr.mxu0 0.0
        %988 = vmatpush1.msra.mxu0 0.0
        %989 = vmatprep.subr.mxu0 0.0
        %990 = vmatpush1.msra.mxu0 0.0
        %991 = vmatprep.subr.mxu0 0.0
        %992 = vmatpush1.msra.mxu0 0.0
        %993 = vmatprep.subr.mxu0 0.0
        %994 = vmatpush1.msra.mxu0 0.0
        %995 = vmatprep.mubr.f32.mxu0 0.0
        %996 = vmatmul.mubr.f32.gmra.mrb[0].mxu0 %v788
        %v997 = vpop.f32.mrb[0].mxu0
        %v998 = vadd.f32 %v856, %v997
        %v999 = vpop.f32.mrb[0].mxu0
        %v1000 = vadd.f32 %v858, %v999
        %1001 = vdwg.mxu0
        %1002 = vmatprep.subr.mxu0 %v485
        %1003 = vmatpush1.msra.mxu0 %v484
        %1004 = vmatprep.subr.mxu0 %v489
        %1005 = vmatpush1.msra.mxu0 %v488
        %1006 = vmatprep.subr.mxu0 %v493
        %1007 = vmatpush1.msra.mxu0 %v492
        %1008 = vmatprep.subr.mxu0 %v497
        %1009 = vmatpush1.msra.mxu0 %v496
        %1010 = vmatprep.subr.mxu0 %v501
        %1011 = vmatpush1.msra.mxu0 %v500
        %1012 = vmatprep.subr.mxu0 %v505
        %1013 = vmatpush1.msra.mxu0 %v504
        %1014 = vmatprep.subr.mxu0 %v509
        %1015 = vmatpush1.msra.mxu0 %v508
        %1016 = vmatprep.subr.mxu0 %v513
        %1017 = vmatpush1.msra.mxu0 %v512
        %1018 = vmatprep.subr.mxu0 %v517
        %1019 = vmatpush1.msra.mxu0 %v516
        %1020 = vmatprep.subr.mxu0 %v521
        %1021 = vmatpush1.msra.mxu0 %v520
        %1022 = vmatprep.subr.mxu0 %v525
        %1023 = vmatpush1.msra.mxu0 %v524
        %1024 = vmatprep.subr.mxu0 %v529
        %1025 = vmatpush1.msra.mxu0 %v528
        %1026 = vmatprep.subr.mxu0 %v533
        %1027 = vmatpush1.msra.mxu0 %v532
        %1028 = vmatprep.subr.mxu0 %v537
        %1029 = vmatpush1.msra.mxu0 %v536
        %1030 = vmatprep.subr.mxu0 %v541
        %1031 = vmatpush1.msra.mxu0 %v540
        %1032 = vmatprep.subr.mxu0 %v545
        %1033 = vmatpush1.msra.mxu0 %v544
        %1034 = vmatprep.subr.mxu0 0.0
        %1035 = vmatpush1.msra.mxu0 0.0
        %1036 = vmatprep.subr.mxu0 0.0
        %1037 = vmatpush1.msra.mxu0 0.0
        %1038 = vmatprep.subr.mxu0 0.0
        %1039 = vmatpush1.msra.mxu0 0.0
        %1040 = vmatprep.subr.mxu0 0.0
        %1041 = vmatpush1.msra.mxu0 0.0
        %1042 = vmatprep.subr.mxu0 0.0
        %1043 = vmatpush1.msra.mxu0 0.0
        %1044 = vmatprep.subr.mxu0 0.0
        %1045 = vmatpush1.msra.mxu0 0.0
        %1046 = vmatprep.subr.mxu0 0.0
        %1047 = vmatpush1.msra.mxu0 0.0
        %1048 = vmatprep.subr.mxu0 0.0
        %1049 = vmatpush1.msra.mxu0 0.0
        %1050 = vmatprep.subr.mxu0 0.0
        %1051 = vmatpush1.msra.mxu0 0.0
        %1052 = vmatprep.subr.mxu0 0.0
        %1053 = vmatpush1.msra.mxu0 0.0
        %1054 = vmatprep.subr.mxu0 0.0
        %1055 = vmatpush1.msra.mxu0 0.0
        %1056 = vmatprep.subr.mxu0 0.0
        %1057 = vmatpush1.msra.mxu0 0.0
        %1058 = vmatprep.subr.mxu0 0.0
        %1059 = vmatpush1.msra.mxu0 0.0
        %1060 = vmatprep.subr.mxu0 0.0
        %1061 = vmatpush1.msra.mxu0 0.0
        %1062 = vmatprep.subr.mxu0 0.0
        %1063 = vmatpush1.msra.mxu0 0.0
        %1064 = vmatprep.subr.mxu0 0.0
        %1065 = vmatpush1.msra.mxu0 0.0
        %1066 = vmatprep.mubr.f32.mxu0 0.0
        %1067 = vmatmul.mubr.f32.gmra.mrb[0].mxu0 %v788
        %v1068 = vpop.f32.mrb[0].mxu0
        %v1069 = vadd.f32 %v927, %v1068
        %v1070 = vpop.f32.mrb[0].mxu0
        %v1071 = vadd.f32 %v929, %v1070
        %1072 = vdwg.mxu0
        %v1074 = vlaneseq
        %v1075 = vshrl.u32 %v1074, 7
        %v1076 = vsub.s32 0, %v1075
        %v1077 = vrot.slane %v610, %v1076
        %v1078 = vlaneseq
        %v1079 = vshrl.u32 %v1078, 7
        %v1080 = vsub.s32 1, %v1079
        %v1081 = vrot.slane %v610, %v1080
        %v1082 = vlaneseq
        %v1083 = vshrl.u32 %v1082, 7
        %v1084 = vsub.s32 2, %v1083
        %v1085 = vrot.slane %v610, %v1084
        %v1086 = vlaneseq
        %v1087 = vshrl.u32 %v1086, 7
        %v1088 = vsub.s32 3, %v1087
        %v1089 = vrot.slane %v610, %v1088
        %v1094 = vadd.f32 %v998, %v1077
        %v1095 = vadd.f32 %v1000, %v1081
        %v1096 = vadd.f32 %v1069, %v1085
        %v1097 = vadd.f32 %v1071, %v1089
        %v1098 = vxor.u32 %v1094, 2147483648
        %v1099 = vxor.u32 %v1095, 2147483648
        %v1100 = vxor.u32 %v1096, 2147483648
        %v1101 = vmul.f32 %v1098, 1.442695
        %v1102 = vpow.pop %v1101
        %v1103 = vmul.f32 %v1099, 1.442695
        %v1104 = vpow.pop %v1103
        %v1105 = vmul.f32 %v1100, 1.442695
        %v1106 = vpow.pop %v1105
        %v1107 = vadd.f32 %v1102, 1.0
        %v1108 = vadd.f32 %v1104, 1.0
        %v1109 = vadd.f32 %v1106, 1.0
        %v1110 = vrcp.pop %v1107
        %v1111 = vmul.f32 1.0, %v1110
        %v1112 = vrcp.pop %v1108
        %v1113 = vmul.f32 1.0, %v1112
        %v1114 = vrcp.pop %v1109
        %v1115 = vmul.f32 1.0, %v1114
        %v1116 = vtanh.pop %v1097
        %v1117 = vmul.f32 %v1113, %v614
        %v1118 = vmul.f32 %v1111, %v1116
        %v1119 = vadd.f32 %v1117, %v1118
        %v1120 = vtanh.pop %v1119
        %v1121 = vmul.f32 %v1115, %v1120
        %s1122 = scalar_lea.vmem %s359, 32 [#allocation7]
        %v1123 = vld [vmem:[%s1122] sm:$0xff]
        %v1124 = vld [vmem:[%s1122 + $0x8] sm:$0xff]
        %v1125 = vld [vmem:[%s1122 + $0x10] sm:$0xff]
        %v1126 = vld [vmem:[%s1122 + $0x18] sm:$0xff]
        %1127 = vmatprep.subr.mxu0 %v419
        %1128 = vmatpush1.msra.mxu0 %v418
        %1129 = vmatprep.subr.mxu0 %v423
        %1130 = vmatpush1.msra.mxu0 %v422
        %1131 = vmatprep.subr.mxu0 %v427
        %1132 = vmatpush1.msra.mxu0 %v426
        %1133 = vmatprep.subr.mxu0 %v431
        %1134 = vmatpush1.msra.mxu0 %v430
        %1135 = vmatprep.subr.mxu0 %v435
        %1136 = vmatpush1.msra.mxu0 %v434
        %1137 = vmatprep.subr.mxu0 %v439
        %1138 = vmatpush1.msra.mxu0 %v438
        %1139 = vmatprep.subr.mxu0 %v443
        %1140 = vmatpush1.msra.mxu0 %v442
        %1141 = vmatprep.subr.mxu0 %v447
        %1142 = vmatpush1.msra.mxu0 %v446
        %1143 = vmatprep.subr.mxu0 %v451
        %1144 = vmatpush1.msra.mxu0 %v450
        %1145 = vmatprep.subr.mxu0 %v455
        %1146 = vmatpush1.msra.mxu0 %v454
        %1147 = vmatprep.subr.mxu0 %v459
        %1148 = vmatpush1.msra.mxu0 %v458
        %1149 = vmatprep.subr.mxu0 %v463
        %1150 = vmatpush1.msra.mxu0 %v462
        %1151 = vmatprep.subr.mxu0 %v467
        %1152 = vmatpush1.msra.mxu0 %v466
        %1153 = vmatprep.subr.mxu0 %v471
        %1154 = vmatpush1.msra.mxu0 %v470
        %1155 = vmatprep.subr.mxu0 %v475
        %1156 = vmatpush1.msra.mxu0 %v474
        %1157 = vmatprep.subr.mxu0 %v479
        %1158 = vmatpush1.msra.mxu0 %v478
        %1159 = vmatprep.subr.mxu0 0.0
        %1160 = vmatpush1.msra.mxu0 0.0
        %1161 = vmatprep.subr.mxu0 0.0
        %1162 = vmatpush1.msra.mxu0 0.0
        %1163 = vmatprep.subr.mxu0 0.0
        %1164 = vmatpush1.msra.mxu0 0.0
        %1165 = vmatprep.subr.mxu0 0.0
        %1166 = vmatpush1.msra.mxu0 0.0
        %1167 = vmatprep.subr.mxu0 0.0
        %1168 = vmatpush1.msra.mxu0 0.0
        %1169 = vmatprep.subr.mxu0 0.0
        %1170 = vmatpush1.msra.mxu0 0.0
        %1171 = vmatprep.subr.mxu0 0.0
        %1172 = vmatpush1.msra.mxu0 0.0
        %1173 = vmatprep.subr.mxu0 0.0
        %1174 = vmatpush1.msra.mxu0 0.0
        %1175 = vmatprep.subr.mxu0 0.0
        %1176 = vmatpush1.msra.mxu0 0.0
        %1177 = vmatprep.subr.mxu0 0.0
        %1178 = vmatpush1.msra.mxu0 0.0
        %1179 = vmatprep.subr.mxu0 0.0
        %1180 = vmatpush1.msra.mxu0 0.0
        %1181 = vmatprep.subr.mxu0 0.0
        %1182 = vmatpush1.msra.mxu0 0.0
        %1183 = vmatprep.subr.mxu0 0.0
        %1184 = vmatpush1.msra.mxu0 0.0
        %1185 = vmatprep.subr.mxu0 0.0
        %1186 = vmatpush1.msra.mxu0 0.0
        %1187 = vmatprep.subr.mxu0 0.0
        %1188 = vmatpush1.msra.mxu0 0.0
        %1189 = vmatprep.subr.mxu0 0.0
        %1190 = vmatpush1.msra.mxu0 0.0
        %1191 = vmatprep.mubr.f32.mxu0 0.0
        %1192 = vmatmul.mubr.f32.gmra.mrb[0].mxu0 %v788
        %v1193 = vpop.f32.mrb[0].mxu0
        %v1194 = vadd.f32 0.0, %v1193
        %v1195 = vpop.f32.mrb[0].mxu0
        %v1196 = vadd.f32 0.0, %v1195
        %1197 = vdwg.mxu0
        %1198 = vmatprep.subr.mxu0 %v421
        %1199 = vmatpush1.msra.mxu0 %v420
        %1200 = vmatprep.subr.mxu0 %v425
        %1201 = vmatpush1.msra.mxu0 %v424
        %1202 = vmatprep.subr.mxu0 %v429
        %1203 = vmatpush1.msra.mxu0 %v428
        %1204 = vmatprep.subr.mxu0 %v433
        %1205 = vmatpush1.msra.mxu0 %v432
        %1206 = vmatprep.subr.mxu0 %v437
        %1207 = vmatpush1.msra.mxu0 %v436
        %1208 = vmatprep.subr.mxu0 %v441
        %1209 = vmatpush1.msra.mxu0 %v440
        %1210 = vmatprep.subr.mxu0 %v445
        %1211 = vmatpush1.msra.mxu0 %v444
        %1212 = vmatprep.subr.mxu0 %v449
        %1213 = vmatpush1.msra.mxu0 %v448
        %1214 = vmatprep.subr.mxu0 %v453
        %1215 = vmatpush1.msra.mxu0 %v452
        %1216 = vmatprep.subr.mxu0 %v457
        %1217 = vmatpush1.msra.mxu0 %v456
        %1218 = vmatprep.subr.mxu0 %v461
        %1219 = vmatpush1.msra.mxu0 %v460
        %1220 = vmatprep.subr.mxu0 %v465
        %1221 = vmatpush1.msra.mxu0 %v464
        %1222 = vmatprep.subr.mxu0 %v469
        %1223 = vmatpush1.msra.mxu0 %v468
        %1224 = vmatprep.subr.mxu0 %v473
        %1225 = vmatpush1.msra.mxu0 %v472
        %1226 = vmatprep.subr.mxu0 %v477
        %1227 = vmatpush1.msra.mxu0 %v476
        %1228 = vmatprep.subr.mxu0 %v481
        %1229 = vmatpush1.msra.mxu0 %v480
        %1230 = vmatprep.subr.mxu0 0.0
        %1231 = vmatpush1.msra.mxu0 0.0
        %1232 = vmatprep.subr.mxu0 0.0
        %1233 = vmatpush1.msra.mxu0 0.0
        %1234 = vmatprep.subr.mxu0 0.0
        %1235 = vmatpush1.msra.mxu0 0.0
        %1236 = vmatprep.subr.mxu0 0.0
        %1237 = vmatpush1.msra.mxu0 0.0
        %1238 = vmatprep.subr.mxu0 0.0
        %1239 = vmatpush1.msra.mxu0 0.0
        %1240 = vmatprep.subr.mxu0 0.0
        %1241 = vmatpush1.msra.mxu0 0.0
        %1242 = vmatprep.subr.mxu0 0.0
        %1243 = vmatpush1.msra.mxu0 0.0
        %1244 = vmatprep.subr.mxu0 0.0
        %1245 = vmatpush1.msra.mxu0 0.0
        %1246 = vmatprep.subr.mxu0 0.0
        %1247 = vmatpush1.msra.mxu0 0.0
        %1248 = vmatprep.subr.mxu0 0.0
        %1249 = vmatpush1.msra.mxu0 0.0
        %1250 = vmatprep.subr.mxu0 0.0
        %1251 = vmatpush1.msra.mxu0 0.0
        %1252 = vmatprep.subr.mxu0 0.0
        %1253 = vmatpush1.msra.mxu0 0.0
        %1254 = vmatprep.subr.mxu0 0.0
        %1255 = vmatpush1.msra.mxu0 0.0
        %1256 = vmatprep.subr.mxu0 0.0
        %1257 = vmatpush1.msra.mxu0 0.0
        %1258 = vmatprep.subr.mxu0 0.0
        %1259 = vmatpush1.msra.mxu0 0.0
        %1260 = vmatprep.subr.mxu0 0.0
        %1261 = vmatpush1.msra.mxu0 0.0
        %1262 = vmatprep.mubr.f32.mxu0 0.0
        %1263 = vmatmul.mubr.f32.gmra.mrb[0].mxu0 %v788
        %v1264 = vpop.f32.mrb[0].mxu0
        %v1265 = vadd.f32 0.0, %v1264
        %v1266 = vpop.f32.mrb[0].mxu0
        %v1267 = vadd.f32 0.0, %v1266
        %1268 = vdwg.mxu0
        %v1269 = vadd.f32 %v1123, %v1194
        %v1270 = vadd.f32 %v1124, %v1196
        %v1271 = vadd.f32 %v1125, %v1265
        %v1272 = vadd.f32 %v1126, %v1267
        %v1273 = vxor.u32 %v1269, 2147483648
        %v1274 = vxor.u32 %v1270, 2147483648
        %v1275 = vxor.u32 %v1271, 2147483648
        %v1276 = vmul.f32 %v1273, 1.442695
        %v1277 = vpow.pop %v1276
        %v1278 = vmul.f32 %v1274, 1.442695
        %v1279 = vpow.pop %v1278
        %v1280 = vmul.f32 %v1275, 1.442695
        %v1281 = vpow.pop %v1280
        %v1282 = vadd.f32 %v1277, 1.0
        %v1283 = vadd.f32 %v1279, 1.0
        %v1284 = vadd.f32 %v1281, 1.0
        %v1285 = vrcp.pop %v1282
        %v1286 = vmul.f32 1.0, %v1285
        %v1287 = vrcp.pop %v1283
        %v1288 = vmul.f32 1.0, %v1287
        %v1289 = vrcp.pop %v1284
        %v1290 = vmul.f32 1.0, %v1289
        %v1291 = vtanh.pop %v1272
        %v1292 = vmul.f32 %v1288, %v786
        %v1293 = vmul.f32 %v1286, %v1291
        %v1294 = vadd.f32 %v1292, %v1293
        %v1295 = vtanh.pop %v1294
        %v1296 = vmul.f32 %v1290, %v1295
        %1297 = vmatprep.subr.mxu0 %v547
        %1298 = vmatpush1.msra.mxu0 %v546
        %1299 = vmatprep.subr.mxu0 %v551
        %1300 = vmatpush1.msra.mxu0 %v550
        %1301 = vmatprep.subr.mxu0 %v555
        %1302 = vmatpush1.msra.mxu0 %v554
        %1303 = vmatprep.subr.mxu0 %v559
        %1304 = vmatpush1.msra.mxu0 %v558
        %1305 = vmatprep.subr.mxu0 %v563
        %1306 = vmatpush1.msra.mxu0 %v562
        %1307 = vmatprep.subr.mxu0 %v567
        %1308 = vmatpush1.msra.mxu0 %v566
        %1309 = vmatprep.subr.mxu0 %v571
        %1310 = vmatpush1.msra.mxu0 %v570
        %1311 = vmatprep.subr.mxu0 %v575
        %1312 = vmatpush1.msra.mxu0 %v574
        %1313 = vmatprep.subr.mxu0 %v579
        %1314 = vmatpush1.msra.mxu0 %v578
        %1315 = vmatprep.subr.mxu0 %v583
        %1316 = vmatpush1.msra.mxu0 %v582
        %1317 = vmatprep.subr.mxu0 %v587
        %1318 = vmatpush1.msra.mxu0 %v586
        %1319 = vmatprep.subr.mxu0 %v591
        %1320 = vmatpush1.msra.mxu0 %v590
        %1321 = vmatprep.subr.mxu0 %v595
        %1322 = vmatpush1.msra.mxu0 %v594
        %1323 = vmatprep.subr.mxu0 %v599
        %1324 = vmatpush1.msra.mxu0 %v598
        %1325 = vmatprep.subr.mxu0 %v603
        %1326 = vmatpush1.msra.mxu0 %v602
        %1327 = vmatprep.subr.mxu0 %v607
        %1328 = vmatpush1.msra.mxu0 %v606
        %1329 = vmatprep.subr.mxu0 0.0
        %1330 = vmatpush1.msra.mxu0 0.0
        %1331 = vmatprep.subr.mxu0 0.0
        %1332 = vmatpush1.msra.mxu0 0.0
        %1333 = vmatprep.subr.mxu0 0.0
        %1334 = vmatpush1.msra.mxu0 0.0
        %1335 = vmatprep.subr.mxu0 0.0
        %1336 = vmatpush1.msra.mxu0 0.0
        %1337 = vmatprep.subr.mxu0 0.0
        %1338 = vmatpush1.msra.mxu0 0.0
        %1339 = vmatprep.subr.mxu0 0.0
        %1340 = vmatpush1.msra.mxu0 0.0
        %1341 = vmatprep.subr.mxu0 0.0
        %1342 = vmatpush1.msra.mxu0 0.0
        %1343 = vmatprep.subr.mxu0 0.0
        %1344 = vmatpush1.msra.mxu0 0.0
        %1345 = vmatprep.subr.mxu0 0.0
        %1346 = vmatpush1.msra.mxu0 0.0
        %1347 = vmatprep.subr.mxu0 0.0
        %1348 = vmatpush1.msra.mxu0 0.0
        %1349 = vmatprep.subr.mxu0 0.0
        %1350 = vmatpush1.msra.mxu0 0.0
        %1351 = vmatprep.subr.mxu0 0.0
        %1352 = vmatpush1.msra.mxu0 0.0
        %1353 = vmatprep.subr.mxu0 0.0
        %1354 = vmatpush1.msra.mxu0 0.0
        %1355 = vmatprep.subr.mxu0 0.0
        %1356 = vmatpush1.msra.mxu0 0.0
        %1357 = vmatprep.subr.mxu0 0.0
        %1358 = vmatpush1.msra.mxu0 0.0
        %1359 = vmatprep.subr.mxu0 0.0
        %1360 = vmatpush1.msra.mxu0 0.0
        %1361 = vmatprep.mubr.f32.mxu0 0.0
        %1362 = vmatmul.mubr.f32.gmra.mrb[0].mxu0 %v1121
        %v1363 = vpop.f32.mrb[0].mxu0
        %v1364 = vadd.f32 0.0, %v1363
        %v1365 = vpop.f32.mrb[0].mxu0
        %v1366 = vadd.f32 0.0, %v1365
        %1367 = vdwg.mxu0
        %1368 = vmatprep.subr.mxu0 %v549
        %1369 = vmatpush1.msra.mxu0 %v548
        %1370 = vmatprep.subr.mxu0 %v553
        %1371 = vmatpush1.msra.mxu0 %v552
        %1372 = vmatprep.subr.mxu0 %v557
        %1373 = vmatpush1.msra.mxu0 %v556
        %1374 = vmatprep.subr.mxu0 %v561
        %1375 = vmatpush1.msra.mxu0 %v560
        %1376 = vmatprep.subr.mxu0 %v565
        %1377 = vmatpush1.msra.mxu0 %v564
        %1378 = vmatprep.subr.mxu0 %v569
        %1379 = vmatpush1.msra.mxu0 %v568
        %1380 = vmatprep.subr.mxu0 %v573
        %1381 = vmatpush1.msra.mxu0 %v572
        %1382 = vmatprep.subr.mxu0 %v577
        %1383 = vmatpush1.msra.mxu0 %v576
        %1384 = vmatprep.subr.mxu0 %v581
        %1385 = vmatpush1.msra.mxu0 %v580
        %1386 = vmatprep.subr.mxu0 %v585
        %1387 = vmatpush1.msra.mxu0 %v584
        %1388 = vmatprep.subr.mxu0 %v589
        %1389 = vmatpush1.msra.mxu0 %v588
        %1390 = vmatprep.subr.mxu0 %v593
        %1391 = vmatpush1.msra.mxu0 %v592
        %1392 = vmatprep.subr.mxu0 %v597
        %1393 = vmatpush1.msra.mxu0 %v596
        %1394 = vmatprep.subr.mxu0 %v601
        %1395 = vmatpush1.msra.mxu0 %v600
        %1396 = vmatprep.subr.mxu0 %v605
        %1397 = vmatpush1.msra.mxu0 %v604
        %1398 = vmatprep.subr.mxu0 %v609
        %1399 = vmatpush1.msra.mxu0 %v608
        %1400 = vmatprep.subr.mxu0 0.0
        %1401 = vmatpush1.msra.mxu0 0.0
        %1402 = vmatprep.subr.mxu0 0.0
        %1403 = vmatpush1.msra.mxu0 0.0
        %1404 = vmatprep.subr.mxu0 0.0
        %1405 = vmatpush1.msra.mxu0 0.0
        %1406 = vmatprep.subr.mxu0 0.0
        %1407 = vmatpush1.msra.mxu0 0.0
        %1408 = vmatprep.subr.mxu0 0.0
        %1409 = vmatpush1.msra.mxu0 0.0
        %1410 = vmatprep.subr.mxu0 0.0
        %1411 = vmatpush1.msra.mxu0 0.0
        %1412 = vmatprep.subr.mxu0 0.0
        %1413 = vmatpush1.msra.mxu0 0.0
        %1414 = vmatprep.subr.mxu0 0.0
        %1415 = vmatpush1.msra.mxu0 0.0
        %1416 = vmatprep.subr.mxu0 0.0
        %1417 = vmatpush1.msra.mxu0 0.0
        %1418 = vmatprep.subr.mxu0 0.0
        %1419 = vmatpush1.msra.mxu0 0.0
        %1420 = vmatprep.subr.mxu0 0.0
        %1421 = vmatpush1.msra.mxu0 0.0
        %1422 = vmatprep.subr.mxu0 0.0
        %1423 = vmatpush1.msra.mxu0 0.0
        %1424 = vmatprep.subr.mxu0 0.0
        %1425 = vmatpush1.msra.mxu0 0.0
        %1426 = vmatprep.subr.mxu0 0.0
        %1427 = vmatpush1.msra.mxu0 0.0
        %1428 = vmatprep.subr.mxu0 0.0
        %1429 = vmatpush1.msra.mxu0 0.0
        %1430 = vmatprep.subr.mxu0 0.0
        %1431 = vmatpush1.msra.mxu0 0.0
        %1432 = vmatprep.mubr.f32.mxu0 0.0
        %1433 = vmatmul.mubr.f32.gmra.mrb[0].mxu0 %v1121
        %v1434 = vpop.f32.mrb[0].mxu0
        %v1435 = vadd.f32 0.0, %v1434
        %v1436 = vpop.f32.mrb[0].mxu0
        %v1437 = vadd.f32 0.0, %v1436
        %1438 = vdwg.mxu0
        %1439 = vmatprep.subr.mxu0 %v483
        %1440 = vmatpush1.msra.mxu0 %v482
        %1441 = vmatprep.subr.mxu0 %v487
        %1442 = vmatpush1.msra.mxu0 %v486
        %1443 = vmatprep.subr.mxu0 %v491
        %1444 = vmatpush1.msra.mxu0 %v490
        %1445 = vmatprep.subr.mxu0 %v495
        %1446 = vmatpush1.msra.mxu0 %v494
        %1447 = vmatprep.subr.mxu0 %v499
        %1448 = vmatpush1.msra.mxu0 %v498
        %1449 = vmatprep.subr.mxu0 %v503
        %1450 = vmatpush1.msra.mxu0 %v502
        %1451 = vmatprep.subr.mxu0 %v507
        %1452 = vmatpush1.msra.mxu0 %v506
        %1453 = vmatprep.subr.mxu0 %v511
        %1454 = vmatpush1.msra.mxu0 %v510
        %1455 = vmatprep.subr.mxu0 %v515
        %1456 = vmatpush1.msra.mxu0 %v514
        %1457 = vmatprep.subr.mxu0 %v519
        %1458 = vmatpush1.msra.mxu0 %v518
        %1459 = vmatprep.subr.mxu0 %v523
        %1460 = vmatpush1.msra.mxu0 %v522
        %1461 = vmatprep.subr.mxu0 %v527
        %1462 = vmatpush1.msra.mxu0 %v526
        %1463 = vmatprep.subr.mxu0 %v531
        %1464 = vmatpush1.msra.mxu0 %v530
        %1465 = vmatprep.subr.mxu0 %v535
        %1466 = vmatpush1.msra.mxu0 %v534
        %1467 = vmatprep.subr.mxu0 %v539
        %1468 = vmatpush1.msra.mxu0 %v538
        %1469 = vmatprep.subr.mxu0 %v543
        %1470 = vmatpush1.msra.mxu0 %v542
        %1471 = vmatprep.subr.mxu0 0.0
        %1472 = vmatpush1.msra.mxu0 0.0
        %1473 = vmatprep.subr.mxu0 0.0
        %1474 = vmatpush1.msra.mxu0 0.0
        %1475 = vmatprep.subr.mxu0 0.0
        %1476 = vmatpush1.msra.mxu0 0.0
        %1477 = vmatprep.subr.mxu0 0.0
        %1478 = vmatpush1.msra.mxu0 0.0
        %1479 = vmatprep.subr.mxu0 0.0
        %1480 = vmatpush1.msra.mxu0 0.0
        %1481 = vmatprep.subr.mxu0 0.0
        %1482 = vmatpush1.msra.mxu0 0.0
        %1483 = vmatprep.subr.mxu0 0.0
        %1484 = vmatpush1.msra.mxu0 0.0
        %1485 = vmatprep.subr.mxu0 0.0
        %1486 = vmatpush1.msra.mxu0 0.0
        %1487 = vmatprep.subr.mxu0 0.0
        %1488 = vmatpush1.msra.mxu0 0.0
        %1489 = vmatprep.subr.mxu0 0.0
        %1490 = vmatpush1.msra.mxu0 0.0
        %1491 = vmatprep.subr.mxu0 0.0
        %1492 = vmatpush1.msra.mxu0 0.0
        %1493 = vmatprep.subr.mxu0 0.0
        %1494 = vmatpush1.msra.mxu0 0.0
        %1495 = vmatprep.subr.mxu0 0.0
        %1496 = vmatpush1.msra.mxu0 0.0
        %1497 = vmatprep.subr.mxu0 0.0
        %1498 = vmatpush1.msra.mxu0 0.0
        %1499 = vmatprep.subr.mxu0 0.0
        %1500 = vmatpush1.msra.mxu0 0.0
        %1501 = vmatprep.subr.mxu0 0.0
        %1502 = vmatpush1.msra.mxu0 0.0
        %1503 = vmatprep.mubr.f32.mxu0 0.0
        %1504 = vmatmul.mubr.f32.gmra.mrb[0].mxu0 %v1296
        %v1505 = vpop.f32.mrb[0].mxu0
        %v1506 = vadd.f32 %v1364, %v1505
        %v1507 = vpop.f32.mrb[0].mxu0
        %v1508 = vadd.f32 %v1366, %v1507
        %1509 = vdwg.mxu0
        %1510 = vmatprep.subr.mxu0 %v485
        %1511 = vmatpush1.msra.mxu0 %v484
        %1512 = vmatprep.subr.mxu0 %v489
        %1513 = vmatpush1.msra.mxu0 %v488
        %1514 = vmatprep.subr.mxu0 %v493
        %1515 = vmatpush1.msra.mxu0 %v492
        %1516 = vmatprep.subr.mxu0 %v497
        %1517 = vmatpush1.msra.mxu0 %v496
        %1518 = vmatprep.subr.mxu0 %v501
        %1519 = vmatpush1.msra.mxu0 %v500
        %1520 = vmatprep.subr.mxu0 %v505
        %1521 = vmatpush1.msra.mxu0 %v504
        %1522 = vmatprep.subr.mxu0 %v509
        %1523 = vmatpush1.msra.mxu0 %v508
        %1524 = vmatprep.subr.mxu0 %v513
        %1525 = vmatpush1.msra.mxu0 %v512
        %1526 = vmatprep.subr.mxu0 %v517
        %1527 = vmatpush1.msra.mxu0 %v516
        %1528 = vmatprep.subr.mxu0 %v521
        %1529 = vmatpush1.msra.mxu0 %v520
        %1530 = vmatprep.subr.mxu0 %v525
        %1531 = vmatpush1.msra.mxu0 %v524
        %1532 = vmatprep.subr.mxu0 %v529
        %1533 = vmatpush1.msra.mxu0 %v528
        %1534 = vmatprep.subr.mxu0 %v533
        %1535 = vmatpush1.msra.mxu0 %v532
        %1536 = vmatprep.subr.mxu0 %v537
        %1537 = vmatpush1.msra.mxu0 %v536
        %1538 = vmatprep.subr.mxu0 %v541
        %1539 = vmatpush1.msra.mxu0 %v540
        %1540 = vmatprep.subr.mxu0 %v545
        %1541 = vmatpush1.msra.mxu0 %v544
        %1542 = vmatprep.subr.mxu0 0.0
        %1543 = vmatpush1.msra.mxu0 0.0
        %1544 = vmatprep.subr.mxu0 0.0
        %1545 = vmatpush1.msra.mxu0 0.0
        %1546 = vmatprep.subr.mxu0 0.0
        %1547 = vmatpush1.msra.mxu0 0.0
        %1548 = vmatprep.subr.mxu0 0.0
        %1549 = vmatpush1.msra.mxu0 0.0
        %1550 = vmatprep.subr.mxu0 0.0
        %1551 = vmatpush1.msra.mxu0 0.0
        %1552 = vmatprep.subr.mxu0 0.0
        %1553 = vmatpush1.msra.mxu0 0.0
        %1554 = vmatprep.subr.mxu0 0.0
        %1555 = vmatpush1.msra.mxu0 0.0
        %1556 = vmatprep.subr.mxu0 0.0
        %1557 = vmatpush1.msra.mxu0 0.0
        %1558 = vmatprep.subr.mxu0 0.0
        %1559 = vmatpush1.msra.mxu0 0.0
        %1560 = vmatprep.subr.mxu0 0.0
        %1561 = vmatpush1.msra.mxu0 0.0
        %1562 = vmatprep.subr.mxu0 0.0
        %1563 = vmatpush1.msra.mxu0 0.0
        %1564 = vmatprep.subr.mxu0 0.0
        %1565 = vmatpush1.msra.mxu0 0.0
        %1566 = vmatprep.subr.mxu0 0.0
        %1567 = vmatpush1.msra.mxu0 0.0
        %1568 = vmatprep.subr.mxu0 0.0
        %1569 = vmatpush1.msra.mxu0 0.0
        %1570 = vmatprep.subr.mxu0 0.0
        %1571 = vmatpush1.msra.mxu0 0.0
        %1572 = vmatprep.subr.mxu0 0.0
        %1573 = vmatpush1.msra.mxu0 0.0
        %1574 = vmatprep.mubr.f32.mxu0 0.0
        %1575 = vmatmul.mubr.f32.gmra.mrb[0].mxu0 %v1296
        %v1576 = vpop.f32.mrb[0].mxu0
        %v1577 = vadd.f32 %v1435, %v1576
        %v1578 = vpop.f32.mrb[0].mxu0
        %v1579 = vadd.f32 %v1437, %v1578
        %1580 = vdwg.mxu0
        %v1581 = vadd.f32 %v1506, %v1077
        %v1582 = vadd.f32 %v1508, %v1081
        %v1583 = vadd.f32 %v1577, %v1085
        %v1584 = vadd.f32 %v1579, %v1089
        %v1585 = vxor.u32 %v1581, 2147483648
        %v1586 = vxor.u32 %v1582, 2147483648
        %v1587 = vxor.u32 %v1583, 2147483648
        %v1588 = vmul.f32 %v1585, 1.442695
        %v1589 = vpow.pop %v1588
        %v1590 = vmul.f32 %v1586, 1.442695
        %v1591 = vpow.pop %v1590
        %v1592 = vmul.f32 %v1587, 1.442695
        %v1593 = vpow.pop %v1592
        %v1594 = vadd.f32 %v1589, 1.0
        %v1595 = vadd.f32 %v1591, 1.0
        %v1596 = vadd.f32 %v1593, 1.0
        %v1597 = vrcp.pop %v1594
        %v1598 = vmul.f32 1.0, %v1597
        %v1599 = vrcp.pop %v1595
        %v1600 = vmul.f32 1.0, %v1599
        %v1601 = vrcp.pop %v1596
        %v1602 = vmul.f32 1.0, %v1601
        %v1603 = vtanh.pop %v1584
        %v1604 = vmul.f32 %v1600, %v1119
        %v1605 = vmul.f32 %v1598, %v1603
        %v1606 = vadd.f32 %v1604, %v1605
        %v1607 = vtanh.pop %v1606
        %v1608 = vmul.f32 %v1602, %v1607
        %s1609 = scalar_lea.vmem %s359, 64 [#allocation7]
        %v1610 = vld [vmem:[%s1609] sm:$0xff]
        %v1611 = vld [vmem:[%s1609 + $0x8] sm:$0xff]
        %v1612 = vld [vmem:[%s1609 + $0x10] sm:$0xff]
        %v1613 = vld [vmem:[%s1609 + $0x18] sm:$0xff]
        %1614 = vmatprep.subr.mxu0 %v419
        %1615 = vmatpush1.msra.mxu0 %v418
        %1616 = vmatprep.subr.mxu0 %v423
        %1617 = vmatpush1.msra.mxu0 %v422
        %1618 = vmatprep.subr.mxu0 %v427
        %1619 = vmatpush1.msra.mxu0 %v426
        %1620 = vmatprep.subr.mxu0 %v431
        %1621 = vmatpush1.msra.mxu0 %v430
        %1622 = vmatprep.subr.mxu0 %v435
        %1623 = vmatpush1.msra.mxu0 %v434
        %1624 = vmatprep.subr.mxu0 %v439
        %1625 = vmatpush1.msra.mxu0 %v438
        %1626 = vmatprep.subr.mxu0 %v443
        %1627 = vmatpush1.msra.mxu0 %v442
        %1628 = vmatprep.subr.mxu0 %v447
        %1629 = vmatpush1.msra.mxu0 %v446
        %1630 = vmatprep.subr.mxu0 %v451
        %1631 = vmatpush1.msra.mxu0 %v450
        %1632 = vmatprep.subr.mxu0 %v455
        %1633 = vmatpush1.msra.mxu0 %v454
        %1634 = vmatprep.subr.mxu0 %v459
        %1635 = vmatpush1.msra.mxu0 %v458
        %1636 = vmatprep.subr.mxu0 %v463
        %1637 = vmatpush1.msra.mxu0 %v462
        %1638 = vmatprep.subr.mxu0 %v467
        %1639 = vmatpush1.msra.mxu0 %v466
        %1640 = vmatprep.subr.mxu0 %v471
        %1641 = vmatpush1.msra.mxu0 %v470
        %1642 = vmatprep.subr.mxu0 %v475
        %1643 = vmatpush1.msra.mxu0 %v474
        %1644 = vmatprep.subr.mxu0 %v479
        %1645 = vmatpush1.msra.mxu0 %v478
        %1646 = vmatprep.subr.mxu0 0.0
        %1647 = vmatpush1.msra.mxu0 0.0
        %1648 = vmatprep.subr.mxu0 0.0
        %1649 = vmatpush1.msra.mxu0 0.0
        %1650 = vmatprep.subr.mxu0 0.0
        %1651 = vmatpush1.msra.mxu0 0.0
        %1652 = vmatprep.subr.mxu0 0.0
        %1653 = vmatpush1.msra.mxu0 0.0
        %1654 = vmatprep.subr.mxu0 0.0
        %1655 = vmatpush1.msra.mxu0 0.0
        %1656 = vmatprep.subr.mxu0 0.0
        %1657 = vmatpush1.msra.mxu0 0.0
        %1658 = vmatprep.subr.mxu0 0.0
        %1659 = vmatpush1.msra.mxu0 0.0
        %1660 = vmatprep.subr.mxu0 0.0
        %1661 = vmatpush1.msra.mxu0 0.0
        %1662 = vmatprep.subr.mxu0 0.0
        %1663 = vmatpush1.msra.mxu0 0.0
        %1664 = vmatprep.subr.mxu0 0.0
        %1665 = vmatpush1.msra.mxu0 0.0
        %1666 = vmatprep.subr.mxu0 0.0
        %1667 = vmatpush1.msra.mxu0 0.0
        %1668 = vmatprep.subr.mxu0 0.0
        %1669 = vmatpush1.msra.mxu0 0.0
        %1670 = vmatprep.subr.mxu0 0.0
        %1671 = vmatpush1.msra.mxu0 0.0
        %1672 = vmatprep.subr.mxu0 0.0
        %1673 = vmatpush1.msra.mxu0 0.0
        %1674 = vmatprep.subr.mxu0 0.0
        %1675 = vmatpush1.msra.mxu0 0.0
        %1676 = vmatprep.subr.mxu0 0.0
        %1677 = vmatpush1.msra.mxu0 0.0
        %1678 = vmatprep.mubr.f32.mxu0 0.0
        %1679 = vmatmul.mubr.f32.gmra.mrb[0].mxu0 %v1296
        %v1680 = vpop.f32.mrb[0].mxu0
        %v1681 = vadd.f32 0.0, %v1680
        %v1682 = vpop.f32.mrb[0].mxu0
        %v1683 = vadd.f32 0.0, %v1682
        %1684 = vdwg.mxu0
        %1685 = vmatprep.subr.mxu0 %v421
        %1686 = vmatpush1.msra.mxu0 %v420
        %1687 = vmatprep.subr.mxu0 %v425
        %1688 = vmatpush1.msra.mxu0 %v424
        %1689 = vmatprep.subr.mxu0 %v429
        %1690 = vmatpush1.msra.mxu0 %v428
        %1691 = vmatprep.subr.mxu0 %v433
        %1692 = vmatpush1.msra.mxu0 %v432
        %1693 = vmatprep.subr.mxu0 %v437
        %1694 = vmatpush1.msra.mxu0 %v436
        %1695 = vmatprep.subr.mxu0 %v441
        %1696 = vmatpush1.msra.mxu0 %v440
        %1697 = vmatprep.subr.mxu0 %v445
        %1698 = vmatpush1.msra.mxu0 %v444
        %1699 = vmatprep.subr.mxu0 %v449
        %1700 = vmatpush1.msra.mxu0 %v448
        %1701 = vmatprep.subr.mxu0 %v453
        %1702 = vmatpush1.msra.mxu0 %v452
        %1703 = vmatprep.subr.mxu0 %v457
        %1704 = vmatpush1.msra.mxu0 %v456
        %1705 = vmatprep.subr.mxu0 %v461
        %1706 = vmatpush1.msra.mxu0 %v460
        %1707 = vmatprep.subr.mxu0 %v465
        %1708 = vmatpush1.msra.mxu0 %v464
        %1709 = vmatprep.subr.mxu0 %v469
        %1710 = vmatpush1.msra.mxu0 %v468
        %1711 = vmatprep.subr.mxu0 %v473
        %1712 = vmatpush1.msra.mxu0 %v472
        %1713 = vmatprep.subr.mxu0 %v477
        %1714 = vmatpush1.msra.mxu0 %v476
        %1715 = vmatprep.subr.mxu0 %v481
        %1716 = vmatpush1.msra.mxu0 %v480
        %1717 = vmatprep.subr.mxu0 0.0
        %1718 = vmatpush1.msra.mxu0 0.0
        %1719 = vmatprep.subr.mxu0 0.0
        %1720 = vmatpush1.msra.mxu0 0.0
        %1721 = vmatprep.subr.mxu0 0.0
        %1722 = vmatpush1.msra.mxu0 0.0
        %1723 = vmatprep.subr.mxu0 0.0
        %1724 = vmatpush1.msra.mxu0 0.0
        %1725 = vmatprep.subr.mxu0 0.0
        %1726 = vmatpush1.msra.mxu0 0.0
        %1727 = vmatprep.subr.mxu0 0.0
        %1728 = vmatpush1.msra.mxu0 0.0
        %1729 = vmatprep.subr.mxu0 0.0
        %1730 = vmatpush1.msra.mxu0 0.0
        %1731 = vmatprep.subr.mxu0 0.0
        %1732 = vmatpush1.msra.mxu0 0.0
        %1733 = vmatprep.subr.mxu0 0.0
        %1734 = vmatpush1.msra.mxu0 0.0
        %1735 = vmatprep.subr.mxu0 0.0
        %1736 = vmatpush1.msra.mxu0 0.0
        %1737 = vmatprep.subr.mxu0 0.0
        %1738 = vmatpush1.msra.mxu0 0.0
        %1739 = vmatprep.subr.mxu0 0.0
        %1740 = vmatpush1.msra.mxu0 0.0
        %1741 = vmatprep.subr.mxu0 0.0
        %1742 = vmatpush1.msra.mxu0 0.0
        %1743 = vmatprep.subr.mxu0 0.0
        %1744 = vmatpush1.msra.mxu0 0.0
        %1745 = vmatprep.subr.mxu0 0.0
        %1746 = vmatpush1.msra.mxu0 0.0
        %1747 = vmatprep.subr.mxu0 0.0
        %1748 = vmatpush1.msra.mxu0 0.0
        %1749 = vmatprep.mubr.f32.mxu0 0.0
        %1750 = vmatmul.mubr.f32.gmra.mrb[0].mxu0 %v1296
        %v1751 = vpop.f32.mrb[0].mxu0
        %v1752 = vadd.f32 0.0, %v1751
        %v1753 = vpop.f32.mrb[0].mxu0
        %v1754 = vadd.f32 0.0, %v1753
        %1755 = vdwg.mxu0
        %v1756 = vadd.f32 %v1610, %v1681
        %v1757 = vadd.f32 %v1611, %v1683
        %v1758 = vadd.f32 %v1612, %v1752
        %v1759 = vadd.f32 %v1613, %v1754
        %v1760 = vxor.u32 %v1756, 2147483648
        %v1761 = vxor.u32 %v1757, 2147483648
        %v1762 = vxor.u32 %v1758, 2147483648
        %v1763 = vmul.f32 %v1760, 1.442695
        %v1764 = vpow.pop %v1763
        %v1765 = vmul.f32 %v1761, 1.442695
        %v1766 = vpow.pop %v1765
        %v1767 = vmul.f32 %v1762, 1.442695
        %v1768 = vpow.pop %v1767
        %v1769 = vadd.f32 %v1764, 1.0
        %v1770 = vadd.f32 %v1766, 1.0
        %v1771 = vadd.f32 %v1768, 1.0
        %v1772 = vrcp.pop %v1769
        %v1773 = vmul.f32 1.0, %v1772
        %v1774 = vrcp.pop %v1770
        %v1775 = vmul.f32 1.0, %v1774
        %v1776 = vrcp.pop %v1771
        %v1777 = vmul.f32 1.0, %v1776
        %v1778 = vtanh.pop %v1759
        %v1779 = vmul.f32 %v1775, %v1294
        %v1780 = vmul.f32 %v1773, %v1778
        %v1781 = vadd.f32 %v1779, %v1780
        %v1782 = vtanh.pop %v1781
        %v1783 = vmul.f32 %v1777, %v1782
        %1784 = vmatprep.subr.mxu0 %v547
        %1785 = vmatpush1.msra.mxu0 %v546
        %1786 = vmatprep.subr.mxu0 %v551
        %1787 = vmatpush1.msra.mxu0 %v550
        %1788 = vmatprep.subr.mxu0 %v555
        %1789 = vmatpush1.msra.mxu0 %v554
        %1790 = vmatprep.subr.mxu0 %v559
        %1791 = vmatpush1.msra.mxu0 %v558
        %1792 = vmatprep.subr.mxu0 %v563
        %1793 = vmatpush1.msra.mxu0 %v562
        %1794 = vmatprep.subr.mxu0 %v567
        %1795 = vmatpush1.msra.mxu0 %v566
        %1796 = vmatprep.subr.mxu0 %v571
        %1797 = vmatpush1.msra.mxu0 %v570
        %1798 = vmatprep.subr.mxu0 %v575
        %1799 = vmatpush1.msra.mxu0 %v574
        %1800 = vmatprep.subr.mxu0 %v579
        %1801 = vmatpush1.msra.mxu0 %v578
        %1802 = vmatprep.subr.mxu0 %v583
        %1803 = vmatpush1.msra.mxu0 %v582
        %1804 = vmatprep.subr.mxu0 %v587
        %1805 = vmatpush1.msra.mxu0 %v586
        %1806 = vmatprep.subr.mxu0 %v591
        %1807 = vmatpush1.msra.mxu0 %v590
        %1808 = vmatprep.subr.mxu0 %v595
        %1809 = vmatpush1.msra.mxu0 %v594
        %1810 = vmatprep.subr.mxu0 %v599
        %1811 = vmatpush1.msra.mxu0 %v598
        %1812 = vmatprep.subr.mxu0 %v603
        %1813 = vmatpush1.msra.mxu0 %v602
        %1814 = vmatprep.subr.mxu0 %v607
        %1815 = vmatpush1.msra.mxu0 %v606
        %1816 = vmatprep.subr.mxu0 0.0
        %1817 = vmatpush1.msra.mxu0 0.0
        %1818 = vmatprep.subr.mxu0 0.0
        %1819 = vmatpush1.msra.mxu0 0.0
        %1820 = vmatprep.subr.mxu0 0.0
        %1821 = vmatpush1.msra.mxu0 0.0
        %1822 = vmatprep.subr.mxu0 0.0
        %1823 = vmatpush1.msra.mxu0 0.0
        %1824 = vmatprep.subr.mxu0 0.0
        %1825 = vmatpush1.msra.mxu0 0.0
        %1826 = vmatprep.subr.mxu0 0.0
        %1827 = vmatpush1.msra.mxu0 0.0
        %1828 = vmatprep.subr.mxu0 0.0
        %1829 = vmatpush1.msra.mxu0 0.0
        %1830 = vmatprep.subr.mxu0 0.0
        %1831 = vmatpush1.msra.mxu0 0.0
        %1832 = vmatprep.subr.mxu0 0.0
        %1833 = vmatpush1.msra.mxu0 0.0
        %1834 = vmatprep.subr.mxu0 0.0
        %1835 = vmatpush1.msra.mxu0 0.0
        %1836 = vmatprep.subr.mxu0 0.0
        %1837 = vmatpush1.msra.mxu0 0.0
        %1838 = vmatprep.subr.mxu0 0.0
        %1839 = vmatpush1.msra.mxu0 0.0
        %1840 = vmatprep.subr.mxu0 0.0
        %1841 = vmatpush1.msra.mxu0 0.0
        %1842 = vmatprep.subr.mxu0 0.0
        %1843 = vmatpush1.msra.mxu0 0.0
        %1844 = vmatprep.subr.mxu0 0.0
        %1845 = vmatpush1.msra.mxu0 0.0
        %1846 = vmatprep.subr.mxu0 0.0
        %1847 = vmatpush1.msra.mxu0 0.0
        %1848 = vmatprep.mubr.f32.mxu0 0.0
        %1849 = vmatmul.mubr.f32.gmra.mrb[0].mxu0 %v1608
        %v1850 = vpop.f32.mrb[0].mxu0
        %v1851 = vadd.f32 0.0, %v1850
        %v1852 = vpop.f32.mrb[0].mxu0
        %v1853 = vadd.f32 0.0, %v1852
        %1854 = vdwg.mxu0
        %1855 = vmatprep.subr.mxu0 %v549
        %1856 = vmatpush1.msra.mxu0 %v548
        %1857 = vmatprep.subr.mxu0 %v553
        %1858 = vmatpush1.msra.mxu0 %v552
        %1859 = vmatprep.subr.mxu0 %v557
        %1860 = vmatpush1.msra.mxu0 %v556
        %1861 = vmatprep.subr.mxu0 %v561
        %1862 = vmatpush1.msra.mxu0 %v560
        %1863 = vmatprep.subr.mxu0 %v565
        %1864 = vmatpush1.msra.mxu0 %v564
        %1865 = vmatprep.subr.mxu0 %v569
        %1866 = vmatpush1.msra.mxu0 %v568
        %1867 = vmatprep.subr.mxu0 %v573
        %1868 = vmatpush1.msra.mxu0 %v572
        %1869 = vmatprep.subr.mxu0 %v577
        %1870 = vmatpush1.msra.mxu0 %v576
        %1871 = vmatprep.subr.mxu0 %v581
        %1872 = vmatpush1.msra.mxu0 %v580
        %1873 = vmatprep.subr.mxu0 %v585
        %1874 = vmatpush1.msra.mxu0 %v584
        %1875 = vmatprep.subr.mxu0 %v589
        %1876 = vmatpush1.msra.mxu0 %v588
        %1877 = vmatprep.subr.mxu0 %v593
        %1878 = vmatpush1.msra.mxu0 %v592
        %1879 = vmatprep.subr.mxu0 %v597
        %1880 = vmatpush1.msra.mxu0 %v596
        %1881 = vmatprep.subr.mxu0 %v601
        %1882 = vmatpush1.msra.mxu0 %v600
        %1883 = vmatprep.subr.mxu0 %v605
        %1884 = vmatpush1.msra.mxu0 %v604
        %1885 = vmatprep.subr.mxu0 %v609
        %1886 = vmatpush1.msra.mxu0 %v608
        %1887 = vmatprep.subr.mxu0 0.0
        %1888 = vmatpush1.msra.mxu0 0.0
        %1889 = vmatprep.subr.mxu0 0.0
        %1890 = vmatpush1.msra.mxu0 0.0
        %1891 = vmatprep.subr.mxu0 0.0
        %1892 = vmatpush1.msra.mxu0 0.0
        %1893 = vmatprep.subr.mxu0 0.0
        %1894 = vmatpush1.msra.mxu0 0.0
        %1895 = vmatprep.subr.mxu0 0.0
        %1896 = vmatpush1.msra.mxu0 0.0
        %1897 = vmatprep.subr.mxu0 0.0
        %1898 = vmatpush1.msra.mxu0 0.0
        %1899 = vmatprep.subr.mxu0 0.0
        %1900 = vmatpush1.msra.mxu0 0.0
        %1901 = vmatprep.subr.mxu0 0.0
        %1902 = vmatpush1.msra.mxu0 0.0
        %1903 = vmatprep.subr.mxu0 0.0
        %1904 = vmatpush1.msra.mxu0 0.0
        %1905 = vmatprep.subr.mxu0 0.0
        %1906 = vmatpush1.msra.mxu0 0.0
        %1907 = vmatprep.subr.mxu0 0.0
        %1908 = vmatpush1.msra.mxu0 0.0
        %1909 = vmatprep.subr.mxu0 0.0
        %1910 = vmatpush1.msra.mxu0 0.0
        %1911 = vmatprep.subr.mxu0 0.0
        %1912 = vmatpush1.msra.mxu0 0.0
        %1913 = vmatprep.subr.mxu0 0.0
        %1914 = vmatpush1.msra.mxu0 0.0
        %1915 = vmatprep.subr.mxu0 0.0
        %1916 = vmatpush1.msra.mxu0 0.0
        %1917 = vmatprep.subr.mxu0 0.0
        %1918 = vmatpush1.msra.mxu0 0.0
        %1919 = vmatprep.mubr.f32.mxu0 0.0
        %1920 = vmatmul.mubr.f32.gmra.mrb[0].mxu0 %v1608
        %v1921 = vpop.f32.mrb[0].mxu0
        %v1922 = vadd.f32 0.0, %v1921
        %v1923 = vpop.f32.mrb[0].mxu0
        %v1924 = vadd.f32 0.0, %v1923
        %1925 = vdwg.mxu0
        %1926 = vmatprep.subr.mxu0 %v483
        %1927 = vmatpush1.msra.mxu0 %v482
        %1928 = vmatprep.subr.mxu0 %v487
        %1929 = vmatpush1.msra.mxu0 %v486
        %1930 = vmatprep.subr.mxu0 %v491
        %1931 = vmatpush1.msra.mxu0 %v490
        %1932 = vmatprep.subr.mxu0 %v495
        %1933 = vmatpush1.msra.mxu0 %v494
        %1934 = vmatprep.subr.mxu0 %v499
        %1935 = vmatpush1.msra.mxu0 %v498
        %1936 = vmatprep.subr.mxu0 %v503
        %1937 = vmatpush1.msra.mxu0 %v502
        %1938 = vmatprep.subr.mxu0 %v507
        %1939 = vmatpush1.msra.mxu0 %v506
        %1940 = vmatprep.subr.mxu0 %v511
        %1941 = vmatpush1.msra.mxu0 %v510
        %1942 = vmatprep.subr.mxu0 %v515
        %1943 = vmatpush1.msra.mxu0 %v514
        %1944 = vmatprep.subr.mxu0 %v519
        %1945 = vmatpush1.msra.mxu0 %v518
        %1946 = vmatprep.subr.mxu0 %v523
        %1947 = vmatpush1.msra.mxu0 %v522
        %1948 = vmatprep.subr.mxu0 %v527
        %1949 = vmatpush1.msra.mxu0 %v526
        %1950 = vmatprep.subr.mxu0 %v531
        %1951 = vmatpush1.msra.mxu0 %v530
        %1952 = vmatprep.subr.mxu0 %v535
        %1953 = vmatpush1.msra.mxu0 %v534
        %1954 = vmatprep.subr.mxu0 %v539
        %1955 = vmatpush1.msra.mxu0 %v538
        %1956 = vmatprep.subr.mxu0 %v543
        %1957 = vmatpush1.msra.mxu0 %v542
        %1958 = vmatprep.subr.mxu0 0.0
        %1959 = vmatpush1.msra.mxu0 0.0
        %1960 = vmatprep.subr.mxu0 0.0
        %1961 = vmatpush1.msra.mxu0 0.0
        %1962 = vmatprep.subr.mxu0 0.0
        %1963 = vmatpush1.msra.mxu0 0.0
        %1964 = vmatprep.subr.mxu0 0.0
        %1965 = vmatpush1.msra.mxu0 0.0
        %1966 = vmatprep.subr.mxu0 0.0
        %1967 = vmatpush1.msra.mxu0 0.0
        %1968 = vmatprep.subr.mxu0 0.0
        %1969 = vmatpush1.msra.mxu0 0.0
        %1970 = vmatprep.subr.mxu0 0.0
        %1971 = vmatpush1.msra.mxu0 0.0
        %1972 = vmatprep.subr.mxu0 0.0
        %1973 = vmatpush1.msra.mxu0 0.0
        %1974 = vmatprep.subr.mxu0 0.0
        %1975 = vmatpush1.msra.mxu0 0.0
        %1976 = vmatprep.subr.mxu0 0.0
        %1977 = vmatpush1.msra.mxu0 0.0
        %1978 = vmatprep.subr.mxu0 0.0
        %1979 = vmatpush1.msra.mxu0 0.0
        %1980 = vmatprep.subr.mxu0 0.0
        %1981 = vmatpush1.msra.mxu0 0.0
        %1982 = vmatprep.subr.mxu0 0.0
        %1983 = vmatpush1.msra.mxu0 0.0
        %1984 = vmatprep.subr.mxu0 0.0
        %1985 = vmatpush1.msra.mxu0 0.0
        %1986 = vmatprep.subr.mxu0 0.0
        %1987 = vmatpush1.msra.mxu0 0.0
        %1988 = vmatprep.subr.mxu0 0.0
        %1989 = vmatpush1.msra.mxu0 0.0
        %1990 = vmatprep.mubr.f32.mxu0 0.0
        %1991 = vmatmul.mubr.f32.gmra.mrb[0].mxu0 %v1783
        %v1992 = vpop.f32.mrb[0].mxu0
        %v1993 = vadd.f32 %v1851, %v1992
        %v1994 = vpop.f32.mrb[0].mxu0
        %v1995 = vadd.f32 %v1853, %v1994
        %1996 = vdwg.mxu0
        %1997 = vmatprep.subr.mxu0 %v485
        %1998 = vmatpush1.msra.mxu0 %v484
        %1999 = vmatprep.subr.mxu0 %v489
        %2000 = vmatpush1.msra.mxu0 %v488
        %2001 = vmatprep.subr.mxu0 %v493
        %2002 = vmatpush1.msra.mxu0 %v492
        %2003 = vmatprep.subr.mxu0 %v497
        %2004 = vmatpush1.msra.mxu0 %v496
        %2005 = vmatprep.subr.mxu0 %v501
        %2006 = vmatpush1.msra.mxu0 %v500
        %2007 = vmatprep.subr.mxu0 %v505
        %2008 = vmatpush1.msra.mxu0 %v504
        %2009 = vmatprep.subr.mxu0 %v509
        %2010 = vmatpush1.msra.mxu0 %v508
        %2011 = vmatprep.subr.mxu0 %v513
        %2012 = vmatpush1.msra.mxu0 %v512
        %2013 = vmatprep.subr.mxu0 %v517
        %2014 = vmatpush1.msra.mxu0 %v516
        %2015 = vmatprep.subr.mxu0 %v521
        %2016 = vmatpush1.msra.mxu0 %v520
        %2017 = vmatprep.subr.mxu0 %v525
        %2018 = vmatpush1.msra.mxu0 %v524
        %2019 = vmatprep.subr.mxu0 %v529
        %2020 = vmatpush1.msra.mxu0 %v528
        %2021 = vmatprep.subr.mxu0 %v533
        %2022 = vmatpush1.msra.mxu0 %v532
        %2023 = vmatprep.subr.mxu0 %v537
        %2024 = vmatpush1.msra.mxu0 %v536
        %2025 = vmatprep.subr.mxu0 %v541
        %2026 = vmatpush1.msra.mxu0 %v540
        %2027 = vmatprep.subr.mxu0 %v545
        %2028 = vmatpush1.msra.mxu0 %v544
        %2029 = vmatprep.subr.mxu0 0.0
        %2030 = vmatpush1.msra.mxu0 0.0
        %2031 = vmatprep.subr.mxu0 0.0
        %2032 = vmatpush1.msra.mxu0 0.0
        %2033 = vmatprep.subr.mxu0 0.0
        %2034 = vmatpush1.msra.mxu0 0.0
        %2035 = vmatprep.subr.mxu0 0.0
        %2036 = vmatpush1.msra.mxu0 0.0
        %2037 = vmatprep.subr.mxu0 0.0
        %2038 = vmatpush1.msra.mxu0 0.0
        %2039 = vmatprep.subr.mxu0 0.0
        %2040 = vmatpush1.msra.mxu0 0.0
        %2041 = vmatprep.subr.mxu0 0.0
        %2042 = vmatpush1.msra.mxu0 0.0
        %2043 = vmatprep.subr.mxu0 0.0
        %2044 = vmatpush1.msra.mxu0 0.0
        %2045 = vmatprep.subr.mxu0 0.0
        %2046 = vmatpush1.msra.mxu0 0.0
        %2047 = vmatprep.subr.mxu0 0.0
        %2048 = vmatpush1.msra.mxu0 0.0
        %2049 = vmatprep.subr.mxu0 0.0
        %2050 = vmatpush1.msra.mxu0 0.0
        %2051 = vmatprep.subr.mxu0 0.0
        %2052 = vmatpush1.msra.mxu0 0.0
        %2053 = vmatprep.subr.mxu0 0.0
        %2054 = vmatpush1.msra.mxu0 0.0
        %2055 = vmatprep.subr.mxu0 0.0
        %2056 = vmatpush1.msra.mxu0 0.0
        %2057 = vmatprep.subr.mxu0 0.0
        %2058 = vmatpush1.msra.mxu0 0.0
        %2059 = vmatprep.subr.mxu0 0.0
        %2060 = vmatpush1.msra.mxu0 0.0
        %2061 = vmatprep.mubr.f32.mxu0 0.0
        %2062 = vmatmul.mubr.f32.gmra.mrb[0].mxu0 %v1783
        %v2063 = vpop.f32.mrb[0].mxu0
        %v2064 = vadd.f32 %v1922, %v2063
        %v2065 = vpop.f32.mrb[0].mxu0
        %v2066 = vadd.f32 %v1924, %v2065
        %2067 = vdwg.mxu0
        %v2068 = vadd.f32 %v1993, %v1077
        %v2069 = vadd.f32 %v1995, %v1081
        %v2070 = vadd.f32 %v2064, %v1085
        %v2071 = vadd.f32 %v2066, %v1089
        %v2072 = vxor.u32 %v2068, 2147483648
        %v2073 = vxor.u32 %v2069, 2147483648
        %v2074 = vxor.u32 %v2070, 2147483648
        %v2075 = vmul.f32 %v2072, 1.442695
        %v2076 = vpow.pop %v2075
        %v2077 = vmul.f32 %v2073, 1.442695
        %v2078 = vpow.pop %v2077
        %v2079 = vmul.f32 %v2074, 1.442695
        %v2080 = vpow.pop %v2079
        %v2081 = vadd.f32 %v2076, 1.0
        %v2082 = vadd.f32 %v2078, 1.0
        %v2083 = vadd.f32 %v2080, 1.0
        %v2084 = vrcp.pop %v2081
        %v2085 = vmul.f32 1.0, %v2084
        %v2086 = vrcp.pop %v2082
        %v2087 = vmul.f32 1.0, %v2086
        %v2088 = vrcp.pop %v2083
        %v2089 = vmul.f32 1.0, %v2088
        %v2090 = vtanh.pop %v2071
        %v2091 = vmul.f32 %v2087, %v1606
        %v2092 = vmul.f32 %v2085, %v2090
        %v2093 = vadd.f32 %v2091, %v2092
        %v2094 = vtanh.pop %v2093
        %v2095 = vmul.f32 %v2089, %v2094
        %s2096 = scalar_lea.vmem %s359, 96 [#allocation7]
        %v2097 = vld [vmem:[%s2096] sm:$0xff]
        %v2098 = vld [vmem:[%s2096 + $0x8] sm:$0xff]
        %v2099 = vld [vmem:[%s2096 + $0x10] sm:$0xff]
        %v2100 = vld [vmem:[%s2096 + $0x18] sm:$0xff]
        %2101 = vmatprep.subr.mxu0 %v419
        %2102 = vmatpush1.msra.mxu0 %v418
        %2103 = vmatprep.subr.mxu0 %v423
        %2104 = vmatpush1.msra.mxu0 %v422
        %2105 = vmatprep.subr.mxu0 %v427
        %2106 = vmatpush1.msra.mxu0 %v426
        %2107 = vmatprep.subr.mxu0 %v431
        %2108 = vmatpush1.msra.mxu0 %v430
        %2109 = vmatprep.subr.mxu0 %v435
        %2110 = vmatpush1.msra.mxu0 %v434
        %2111 = vmatprep.subr.mxu0 %v439
        %2112 = vmatpush1.msra.mxu0 %v438
        %2113 = vmatprep.subr.mxu0 %v443
        %2114 = vmatpush1.msra.mxu0 %v442
        %2115 = vmatprep.subr.mxu0 %v447
        %2116 = vmatpush1.msra.mxu0 %v446
        %2117 = vmatprep.subr.mxu0 %v451
        %2118 = vmatpush1.msra.mxu0 %v450
        %2119 = vmatprep.subr.mxu0 %v455
        %2120 = vmatpush1.msra.mxu0 %v454
        %2121 = vmatprep.subr.mxu0 %v459
        %2122 = vmatpush1.msra.mxu0 %v458
        %2123 = vmatprep.subr.mxu0 %v463
        %2124 = vmatpush1.msra.mxu0 %v462
        %2125 = vmatprep.subr.mxu0 %v467
        %2126 = vmatpush1.msra.mxu0 %v466
        %2127 = vmatprep.subr.mxu0 %v471
        %2128 = vmatpush1.msra.mxu0 %v470
        %2129 = vmatprep.subr.mxu0 %v475
        %2130 = vmatpush1.msra.mxu0 %v474
        %2131 = vmatprep.subr.mxu0 %v479
        %2132 = vmatpush1.msra.mxu0 %v478
        %2133 = vmatprep.subr.mxu0 0.0
        %2134 = vmatpush1.msra.mxu0 0.0
        %2135 = vmatprep.subr.mxu0 0.0
        %2136 = vmatpush1.msra.mxu0 0.0
        %2137 = vmatprep.subr.mxu0 0.0
        %2138 = vmatpush1.msra.mxu0 0.0
        %2139 = vmatprep.subr.mxu0 0.0
        %2140 = vmatpush1.msra.mxu0 0.0
        %2141 = vmatprep.subr.mxu0 0.0
        %2142 = vmatpush1.msra.mxu0 0.0
        %2143 = vmatprep.subr.mxu0 0.0
        %2144 = vmatpush1.msra.mxu0 0.0
        %2145 = vmatprep.subr.mxu0 0.0
        %2146 = vmatpush1.msra.mxu0 0.0
        %2147 = vmatprep.subr.mxu0 0.0
        %2148 = vmatpush1.msra.mxu0 0.0
        %2149 = vmatprep.subr.mxu0 0.0
        %2150 = vmatpush1.msra.mxu0 0.0
        %2151 = vmatprep.subr.mxu0 0.0
        %2152 = vmatpush1.msra.mxu0 0.0
        %2153 = vmatprep.subr.mxu0 0.0
        %2154 = vmatpush1.msra.mxu0 0.0
        %2155 = vmatprep.subr.mxu0 0.0
        %2156 = vmatpush1.msra.mxu0 0.0
        %2157 = vmatprep.subr.mxu0 0.0
        %2158 = vmatpush1.msra.mxu0 0.0
        %2159 = vmatprep.subr.mxu0 0.0
        %2160 = vmatpush1.msra.mxu0 0.0
        %2161 = vmatprep.subr.mxu0 0.0
        %2162 = vmatpush1.msra.mxu0 0.0
        %2163 = vmatprep.subr.mxu0 0.0
        %2164 = vmatpush1.msra.mxu0 0.0
        %2165 = vmatprep.mubr.f32.mxu0 0.0
        %2166 = vmatmul.mubr.f32.gmra.mrb[0].mxu0 %v1783
        %v2167 = vpop.f32.mrb[0].mxu0
        %v2168 = vadd.f32 0.0, %v2167
        %v2169 = vpop.f32.mrb[0].mxu0
        %v2170 = vadd.f32 0.0, %v2169
        %2171 = vdwg.mxu0
        %2172 = vmatprep.subr.mxu0 %v421
        %2173 = vmatpush1.msra.mxu0 %v420
        %2174 = vmatprep.subr.mxu0 %v425
        %2175 = vmatpush1.msra.mxu0 %v424
        %2176 = vmatprep.subr.mxu0 %v429
        %2177 = vmatpush1.msra.mxu0 %v428
        %2178 = vmatprep.subr.mxu0 %v433
        %2179 = vmatpush1.msra.mxu0 %v432
        %2180 = vmatprep.subr.mxu0 %v437
        %2181 = vmatpush1.msra.mxu0 %v436
        %2182 = vmatprep.subr.mxu0 %v441
        %2183 = vmatpush1.msra.mxu0 %v440
        %2184 = vmatprep.subr.mxu0 %v445
        %2185 = vmatpush1.msra.mxu0 %v444
        %2186 = vmatprep.subr.mxu0 %v449
        %2187 = vmatpush1.msra.mxu0 %v448
        %2188 = vmatprep.subr.mxu0 %v453
        %2189 = vmatpush1.msra.mxu0 %v452
        %2190 = vmatprep.subr.mxu0 %v457
        %2191 = vmatpush1.msra.mxu0 %v456
        %2192 = vmatprep.subr.mxu0 %v461
        %2193 = vmatpush1.msra.mxu0 %v460
        %2194 = vmatprep.subr.mxu0 %v465
        %2195 = vmatpush1.msra.mxu0 %v464
        %2196 = vmatprep.subr.mxu0 %v469
        %2197 = vmatpush1.msra.mxu0 %v468
        %2198 = vmatprep.subr.mxu0 %v473
        %2199 = vmatpush1.msra.mxu0 %v472
        %2200 = vmatprep.subr.mxu0 %v477
        %2201 = vmatpush1.msra.mxu0 %v476
        %2202 = vmatprep.subr.mxu0 %v481
        %2203 = vmatpush1.msra.mxu0 %v480
        %2204 = vmatprep.subr.mxu0 0.0
        %2205 = vmatpush1.msra.mxu0 0.0
        %2206 = vmatprep.subr.mxu0 0.0
        %2207 = vmatpush1.msra.mxu0 0.0
        %2208 = vmatprep.subr.mxu0 0.0
        %2209 = vmatpush1.msra.mxu0 0.0
        %2210 = vmatprep.subr.mxu0 0.0
        %2211 = vmatpush1.msra.mxu0 0.0
        %2212 = vmatprep.subr.mxu0 0.0
        %2213 = vmatpush1.msra.mxu0 0.0
        %2214 = vmatprep.subr.mxu0 0.0
        %2215 = vmatpush1.msra.mxu0 0.0
        %2216 = vmatprep.subr.mxu0 0.0
        %2217 = vmatpush1.msra.mxu0 0.0
        %2218 = vmatprep.subr.mxu0 0.0
        %2219 = vmatpush1.msra.mxu0 0.0
        %2220 = vmatprep.subr.mxu0 0.0
        %2221 = vmatpush1.msra.mxu0 0.0
        %2222 = vmatprep.subr.mxu0 0.0
        %2223 = vmatpush1.msra.mxu0 0.0
        %2224 = vmatprep.subr.mxu0 0.0
        %2225 = vmatpush1.msra.mxu0 0.0
        %2226 = vmatprep.subr.mxu0 0.0
        %2227 = vmatpush1.msra.mxu0 0.0
        %2228 = vmatprep.subr.mxu0 0.0
        %2229 = vmatpush1.msra.mxu0 0.0
        %2230 = vmatprep.subr.mxu0 0.0
        %2231 = vmatpush1.msra.mxu0 0.0
        %2232 = vmatprep.subr.mxu0 0.0
        %2233 = vmatpush1.msra.mxu0 0.0
        %2234 = vmatprep.subr.mxu0 0.0
        %2235 = vmatpush1.msra.mxu0 0.0
        %2236 = vmatprep.mubr.f32.mxu0 0.0
        %2237 = vmatmul.mubr.f32.gmra.mrb[0].mxu0 %v1783
        %v2238 = vpop.f32.mrb[0].mxu0
        %v2239 = vadd.f32 0.0, %v2238
        %v2240 = vpop.f32.mrb[0].mxu0
        %v2241 = vadd.f32 0.0, %v2240
        %2242 = vdwg.mxu0
        %v2243 = vadd.f32 %v2097, %v2168
        %v2244 = vadd.f32 %v2098, %v2170
        %v2245 = vadd.f32 %v2099, %v2239
        %v2246 = vadd.f32 %v2100, %v2241
        %v2247 = vxor.u32 %v2243, 2147483648
        %v2248 = vxor.u32 %v2244, 2147483648
        %v2249 = vxor.u32 %v2245, 2147483648
        %v2250 = vmul.f32 %v2247, 1.442695
        %v2251 = vpow.pop %v2250
        %v2252 = vmul.f32 %v2248, 1.442695
        %v2253 = vpow.pop %v2252
        %v2254 = vmul.f32 %v2249, 1.442695
        %v2255 = vpow.pop %v2254
        %v2256 = vadd.f32 %v2251, 1.0
        %v2257 = vadd.f32 %v2253, 1.0
        %v2258 = vadd.f32 %v2255, 1.0
        %v2259 = vrcp.pop %v2256
        %v2260 = vmul.f32 1.0, %v2259
        %v2261 = vrcp.pop %v2257
        %v2262 = vmul.f32 1.0, %v2261
        %v2263 = vrcp.pop %v2258
        %v2264 = vmul.f32 1.0, %v2263
        %v2265 = vtanh.pop %v2246
        %v2266 = vmul.f32 %v2262, %v1781
        %v2267 = vmul.f32 %v2260, %v2265
        %v2268 = vadd.f32 %v2266, %v2267
        %v2269 = vtanh.pop %v2268
        %v2270 = vmul.f32 %v2264, %v2269
        %2271 = vmatprep.subr.mxu0 %v547
        %2272 = vmatpush1.msra.mxu0 %v546
        %2273 = vmatprep.subr.mxu0 %v551
        %2274 = vmatpush1.msra.mxu0 %v550
        %2275 = vmatprep.subr.mxu0 %v555
        %2276 = vmatpush1.msra.mxu0 %v554
        %2277 = vmatprep.subr.mxu0 %v559
        %2278 = vmatpush1.msra.mxu0 %v558
        %2279 = vmatprep.subr.mxu0 %v563
        %2280 = vmatpush1.msra.mxu0 %v562
        %2281 = vmatprep.subr.mxu0 %v567
        %2282 = vmatpush1.msra.mxu0 %v566
        %2283 = vmatprep.subr.mxu0 %v571
        %2284 = vmatpush1.msra.mxu0 %v570
        %2285 = vmatprep.subr.mxu0 %v575
        %2286 = vmatpush1.msra.mxu0 %v574
        %2287 = vmatprep.subr.mxu0 %v579
        %2288 = vmatpush1.msra.mxu0 %v578
        %2289 = vmatprep.subr.mxu0 %v583
        %2290 = vmatpush1.msra.mxu0 %v582
        %2291 = vmatprep.subr.mxu0 %v587
        %2292 = vmatpush1.msra.mxu0 %v586
        %2293 = vmatprep.subr.mxu0 %v591
        %2294 = vmatpush1.msra.mxu0 %v590
        %2295 = vmatprep.subr.mxu0 %v595
        %2296 = vmatpush1.msra.mxu0 %v594
        %2297 = vmatprep.subr.mxu0 %v599
        %2298 = vmatpush1.msra.mxu0 %v598
        %2299 = vmatprep.subr.mxu0 %v603
        %2300 = vmatpush1.msra.mxu0 %v602
        %2301 = vmatprep.subr.mxu0 %v607
        %2302 = vmatpush1.msra.mxu0 %v606
        %2303 = vmatprep.subr.mxu0 0.0
        %2304 = vmatpush1.msra.mxu0 0.0
        %2305 = vmatprep.subr.mxu0 0.0
        %2306 = vmatpush1.msra.mxu0 0.0
        %2307 = vmatprep.subr.mxu0 0.0
        %2308 = vmatpush1.msra.mxu0 0.0
        %2309 = vmatprep.subr.mxu0 0.0
        %2310 = vmatpush1.msra.mxu0 0.0
        %2311 = vmatprep.subr.mxu0 0.0
        %2312 = vmatpush1.msra.mxu0 0.0
        %2313 = vmatprep.subr.mxu0 0.0
        %2314 = vmatpush1.msra.mxu0 0.0
        %2315 = vmatprep.subr.mxu0 0.0
        %2316 = vmatpush1.msra.mxu0 0.0
        %2317 = vmatprep.subr.mxu0 0.0
        %2318 = vmatpush1.msra.mxu0 0.0
        %2319 = vmatprep.subr.mxu0 0.0
        %2320 = vmatpush1.msra.mxu0 0.0
        %2321 = vmatprep.subr.mxu0 0.0
        %2322 = vmatpush1.msra.mxu0 0.0
        %2323 = vmatprep.subr.mxu0 0.0
        %2324 = vmatpush1.msra.mxu0 0.0
        %2325 = vmatprep.subr.mxu0 0.0
        %2326 = vmatpush1.msra.mxu0 0.0
        %2327 = vmatprep.subr.mxu0 0.0
        %2328 = vmatpush1.msra.mxu0 0.0
        %2329 = vmatprep.subr.mxu0 0.0
        %2330 = vmatpush1.msra.mxu0 0.0
        %2331 = vmatprep.subr.mxu0 0.0
        %2332 = vmatpush1.msra.mxu0 0.0
        %2333 = vmatprep.subr.mxu0 0.0
        %2334 = vmatpush1.msra.mxu0 0.0
        %2335 = vmatprep.mubr.f32.mxu0 0.0
        %2336 = vmatmul.mubr.f32.gmra.mrb[0].mxu0 %v2095
        %v2337 = vpop.f32.mrb[0].mxu0
        %v2338 = vadd.f32 0.0, %v2337
        %v2339 = vpop.f32.mrb[0].mxu0
        %v2340 = vadd.f32 0.0, %v2339
        %2341 = vdwg.mxu0
        %2342 = vmatprep.subr.mxu0 %v549
        %2343 = vmatpush1.msra.mxu0 %v548
        %2344 = vmatprep.subr.mxu0 %v553
        %2345 = vmatpush1.msra.mxu0 %v552
        %2346 = vmatprep.subr.mxu0 %v557
        %2347 = vmatpush1.msra.mxu0 %v556
        %2348 = vmatprep.subr.mxu0 %v561
        %2349 = vmatpush1.msra.mxu0 %v560
        %2350 = vmatprep.subr.mxu0 %v565
        %2351 = vmatpush1.msra.mxu0 %v564
        %2352 = vmatprep.subr.mxu0 %v569
        %2353 = vmatpush1.msra.mxu0 %v568
        %2354 = vmatprep.subr.mxu0 %v573
        %2355 = vmatpush1.msra.mxu0 %v572
        %2356 = vmatprep.subr.mxu0 %v577
        %2357 = vmatpush1.msra.mxu0 %v576
        %2358 = vmatprep.subr.mxu0 %v581
        %2359 = vmatpush1.msra.mxu0 %v580
        %2360 = vmatprep.subr.mxu0 %v585
        %2361 = vmatpush1.msra.mxu0 %v584
        %2362 = vmatprep.subr.mxu0 %v589
        %2363 = vmatpush1.msra.mxu0 %v588
        %2364 = vmatprep.subr.mxu0 %v593
        %2365 = vmatpush1.msra.mxu0 %v592
        %2366 = vmatprep.subr.mxu0 %v597
        %2367 = vmatpush1.msra.mxu0 %v596
        %2368 = vmatprep.subr.mxu0 %v601
        %2369 = vmatpush1.msra.mxu0 %v600
        %2370 = vmatprep.subr.mxu0 %v605
        %2371 = vmatpush1.msra.mxu0 %v604
        %2372 = vmatprep.subr.mxu0 %v609
        %2373 = vmatpush1.msra.mxu0 %v608
        %2374 = vmatprep.subr.mxu0 0.0
        %2375 = vmatpush1.msra.mxu0 0.0
        %2376 = vmatprep.subr.mxu0 0.0
        %2377 = vmatpush1.msra.mxu0 0.0
        %2378 = vmatprep.subr.mxu0 0.0
        %2379 = vmatpush1.msra.mxu0 0.0
        %2380 = vmatprep.subr.mxu0 0.0
        %2381 = vmatpush1.msra.mxu0 0.0
        %2382 = vmatprep.subr.mxu0 0.0
        %2383 = vmatpush1.msra.mxu0 0.0
        %2384 = vmatprep.subr.mxu0 0.0
        %2385 = vmatpush1.msra.mxu0 0.0
        %2386 = vmatprep.subr.mxu0 0.0
        %2387 = vmatpush1.msra.mxu0 0.0
        %2388 = vmatprep.subr.mxu0 0.0
        %2389 = vmatpush1.msra.mxu0 0.0
        %2390 = vmatprep.subr.mxu0 0.0
        %2391 = vmatpush1.msra.mxu0 0.0
        %2392 = vmatprep.subr.mxu0 0.0
        %2393 = vmatpush1.msra.mxu0 0.0
        %2394 = vmatprep.subr.mxu0 0.0
        %2395 = vmatpush1.msra.mxu0 0.0
        %2396 = vmatprep.subr.mxu0 0.0
        %2397 = vmatpush1.msra.mxu0 0.0
        %2398 = vmatprep.subr.mxu0 0.0
        %2399 = vmatpush1.msra.mxu0 0.0
        %2400 = vmatprep.subr.mxu0 0.0
        %2401 = vmatpush1.msra.mxu0 0.0
        %2402 = vmatprep.subr.mxu0 0.0
        %2403 = vmatpush1.msra.mxu0 0.0
        %2404 = vmatprep.subr.mxu0 0.0
        %2405 = vmatpush1.msra.mxu0 0.0
        %2406 = vmatprep.mubr.f32.mxu0 0.0
        %2407 = vmatmul.mubr.f32.gmra.mrb[0].mxu0 %v2095
        %v2408 = vpop.f32.mrb[0].mxu0
        %v2409 = vadd.f32 0.0, %v2408
        %v2410 = vpop.f32.mrb[0].mxu0
        %v2411 = vadd.f32 0.0, %v2410
        %2412 = vdwg.mxu0
        %2413 = vmatprep.subr.mxu0 %v483
        %2414 = vmatpush1.msra.mxu0 %v482
        %2415 = vmatprep.subr.mxu0 %v487
        %2416 = vmatpush1.msra.mxu0 %v486
        %2417 = vmatprep.subr.mxu0 %v491
        %2418 = vmatpush1.msra.mxu0 %v490
        %2419 = vmatprep.subr.mxu0 %v495
        %2420 = vmatpush1.msra.mxu0 %v494
        %2421 = vmatprep.subr.mxu0 %v499
        %2422 = vmatpush1.msra.mxu0 %v498
        %2423 = vmatprep.subr.mxu0 %v503
        %2424 = vmatpush1.msra.mxu0 %v502
        %2425 = vmatprep.subr.mxu0 %v507
        %2426 = vmatpush1.msra.mxu0 %v506
        %2427 = vmatprep.subr.mxu0 %v511
        %2428 = vmatpush1.msra.mxu0 %v510
        %2429 = vmatprep.subr.mxu0 %v515
        %2430 = vmatpush1.msra.mxu0 %v514
        %2431 = vmatprep.subr.mxu0 %v519
        %2432 = vmatpush1.msra.mxu0 %v518
        %2433 = vmatprep.subr.mxu0 %v523
        %2434 = vmatpush1.msra.mxu0 %v522
        %2435 = vmatprep.subr.mxu0 %v527
        %2436 = vmatpush1.msra.mxu0 %v526
        %2437 = vmatprep.subr.mxu0 %v531
        %2438 = vmatpush1.msra.mxu0 %v530
        %2439 = vmatprep.subr.mxu0 %v535
        %2440 = vmatpush1.msra.mxu0 %v534
        %2441 = vmatprep.subr.mxu0 %v539
        %2442 = vmatpush1.msra.mxu0 %v538
        %2443 = vmatprep.subr.mxu0 %v543
        %2444 = vmatpush1.msra.mxu0 %v542
        %2445 = vmatprep.subr.mxu0 0.0
        %2446 = vmatpush1.msra.mxu0 0.0
        %2447 = vmatprep.subr.mxu0 0.0
        %2448 = vmatpush1.msra.mxu0 0.0
        %2449 = vmatprep.subr.mxu0 0.0
        %2450 = vmatpush1.msra.mxu0 0.0
        %2451 = vmatprep.subr.mxu0 0.0
        %2452 = vmatpush1.msra.mxu0 0.0
        %2453 = vmatprep.subr.mxu0 0.0
        %2454 = vmatpush1.msra.mxu0 0.0
        %2455 = vmatprep.subr.mxu0 0.0
        %2456 = vmatpush1.msra.mxu0 0.0
        %2457 = vmatprep.subr.mxu0 0.0
        %2458 = vmatpush1.msra.mxu0 0.0
        %2459 = vmatprep.subr.mxu0 0.0
        %2460 = vmatpush1.msra.mxu0 0.0
        %2461 = vmatprep.subr.mxu0 0.0
        %2462 = vmatpush1.msra.mxu0 0.0
        %2463 = vmatprep.subr.mxu0 0.0
        %2464 = vmatpush1.msra.mxu0 0.0
        %2465 = vmatprep.subr.mxu0 0.0
        %2466 = vmatpush1.msra.mxu0 0.0
        %2467 = vmatprep.subr.mxu0 0.0
        %2468 = vmatpush1.msra.mxu0 0.0
        %2469 = vmatprep.subr.mxu0 0.0
        %2470 = vmatpush1.msra.mxu0 0.0
        %2471 = vmatprep.subr.mxu0 0.0
        %2472 = vmatpush1.msra.mxu0 0.0
        %2473 = vmatprep.subr.mxu0 0.0
        %2474 = vmatpush1.msra.mxu0 0.0
        %2475 = vmatprep.subr.mxu0 0.0
        %2476 = vmatpush1.msra.mxu0 0.0
        %2477 = vmatprep.mubr.f32.mxu0 0.0
        %2478 = vmatmul.mubr.f32.gmra.mrb[0].mxu0 %v2270
        %v2479 = vpop.f32.mrb[0].mxu0
        %v2480 = vadd.f32 %v2338, %v2479
        %v2481 = vpop.f32.mrb[0].mxu0
        %v2482 = vadd.f32 %v2340, %v2481
        %2483 = vdwg.mxu0
        %2484 = vmatprep.subr.mxu0 %v485
        %2485 = vmatpush1.msra.mxu0 %v484
        %2486 = vmatprep.subr.mxu0 %v489
        %2487 = vmatpush1.msra.mxu0 %v488
        %2488 = vmatprep.subr.mxu0 %v493
        %2489 = vmatpush1.msra.mxu0 %v492
        %2490 = vmatprep.subr.mxu0 %v497
        %2491 = vmatpush1.msra.mxu0 %v496
        %2492 = vmatprep.subr.mxu0 %v501
        %2493 = vmatpush1.msra.mxu0 %v500
        %2494 = vmatprep.subr.mxu0 %v505
        %2495 = vmatpush1.msra.mxu0 %v504
        %2496 = vmatprep.subr.mxu0 %v509
        %2497 = vmatpush1.msra.mxu0 %v508
        %2498 = vmatprep.subr.mxu0 %v513
        %2499 = vmatpush1.msra.mxu0 %v512
        %2500 = vmatprep.subr.mxu0 %v517
        %2501 = vmatpush1.msra.mxu0 %v516
        %2502 = vmatprep.subr.mxu0 %v521
        %2503 = vmatpush1.msra.mxu0 %v520
        %2504 = vmatprep.subr.mxu0 %v525
        %2505 = vmatpush1.msra.mxu0 %v524
        %2506 = vmatprep.subr.mxu0 %v529
        %2507 = vmatpush1.msra.mxu0 %v528
        %2508 = vmatprep.subr.mxu0 %v533
        %2509 = vmatpush1.msra.mxu0 %v532
        %2510 = vmatprep.subr.mxu0 %v537
        %2511 = vmatpush1.msra.mxu0 %v536
        %2512 = vmatprep.subr.mxu0 %v541
        %2513 = vmatpush1.msra.mxu0 %v540
        %2514 = vmatprep.subr.mxu0 %v545
        %2515 = vmatpush1.msra.mxu0 %v544
        %2516 = vmatprep.subr.mxu0 0.0
        %2517 = vmatpush1.msra.mxu0 0.0
        %2518 = vmatprep.subr.mxu0 0.0
        %2519 = vmatpush1.msra.mxu0 0.0
        %2520 = vmatprep.subr.mxu0 0.0
        %2521 = vmatpush1.msra.mxu0 0.0
        %2522 = vmatprep.subr.mxu0 0.0
        %2523 = vmatpush1.msra.mxu0 0.0
        %2524 = vmatprep.subr.mxu0 0.0
        %2525 = vmatpush1.msra.mxu0 0.0
        %2526 = vmatprep.subr.mxu0 0.0
        %2527 = vmatpush1.msra.mxu0 0.0
        %2528 = vmatprep.subr.mxu0 0.0
        %2529 = vmatpush1.msra.mxu0 0.0
        %2530 = vmatprep.subr.mxu0 0.0
        %2531 = vmatpush1.msra.mxu0 0.0
        %2532 = vmatprep.subr.mxu0 0.0
        %2533 = vmatpush1.msra.mxu0 0.0
        %2534 = vmatprep.subr.mxu0 0.0
        %2535 = vmatpush1.msra.mxu0 0.0
        %2536 = vmatprep.subr.mxu0 0.0
        %2537 = vmatpush1.msra.mxu0 0.0
        %2538 = vmatprep.subr.mxu0 0.0
        %2539 = vmatpush1.msra.mxu0 0.0
        %2540 = vmatprep.subr.mxu0 0.0
        %2541 = vmatpush1.msra.mxu0 0.0
        %2542 = vmatprep.subr.mxu0 0.0
        %2543 = vmatpush1.msra.mxu0 0.0
        %2544 = vmatprep.subr.mxu0 0.0
        %2545 = vmatpush1.msra.mxu0 0.0
        %2546 = vmatprep.subr.mxu0 0.0
        %2547 = vmatpush1.msra.mxu0 0.0
        %2548 = vmatprep.mubr.f32.mxu0 0.0
        %2549 = vmatmul.mubr.f32.gmra.mrb[0].mxu0 %v2270
        %v2550 = vpop.f32.mrb[0].mxu0
        %v2551 = vadd.f32 %v2409, %v2550
        %v2552 = vpop.f32.mrb[0].mxu0
        %v2553 = vadd.f32 %v2411, %v2552
        %2554 = vdwg.mxu0
        %v2555 = vadd.f32 %v2480, %v1077
        %v2556 = vadd.f32 %v2482, %v1081
        %v2557 = vadd.f32 %v2551, %v1085
        %v2558 = vadd.f32 %v2553, %v1089
        %v2559 = vxor.u32 %v2555, 2147483648
        %v2560 = vxor.u32 %v2556, 2147483648
        %v2561 = vxor.u32 %v2557, 2147483648
        %v2562 = vmul.f32 %v2559, 1.442695
        %v2563 = vpow.pop %v2562
        %v2564 = vmul.f32 %v2560, 1.442695
        %v2565 = vpow.pop %v2564
        %v2566 = vmul.f32 %v2561, 1.442695
        %v2567 = vpow.pop %v2566
        %v2568 = vadd.f32 %v2563, 1.0
        %v2569 = vadd.f32 %v2565, 1.0
        %v2570 = vadd.f32 %v2567, 1.0
        %v2571 = vrcp.pop %v2568
        %v2572 = vmul.f32 1.0, %v2571
        %v2573 = vrcp.pop %v2569
        %v2574 = vmul.f32 1.0, %v2573
        %v2575 = vrcp.pop %v2570
        %v2576 = vmul.f32 1.0, %v2575
        %v2577 = vtanh.pop %v2558
        %v2578 = vmul.f32 %v2574, %v2093
        %v2579 = vmul.f32 %v2572, %v2577
        %v2580 = vadd.f32 %v2578, %v2579
        %v2581 = vtanh.pop %v2580
        %v2582 = vmul.f32 %v2576, %v2581
        %s2583 = scalar_lea.vmem %s359, 128 [#allocation7]
        %v2584 = vld [vmem:[%s2583] sm:$0xff]
        %v2585 = vld [vmem:[%s2583 + $0x8] sm:$0xff]
        %v2586 = vld [vmem:[%s2583 + $0x10] sm:$0xff]
        %v2587 = vld [vmem:[%s2583 + $0x18] sm:$0xff]
        %2588 = vmatprep.subr.mxu0 %v419
        %2589 = vmatpush1.msra.mxu0 %v418
        %2590 = vmatprep.subr.mxu0 %v423
        %2591 = vmatpush1.msra.mxu0 %v422
        %2592 = vmatprep.subr.mxu0 %v427
        %2593 = vmatpush1.msra.mxu0 %v426
        %2594 = vmatprep.subr.mxu0 %v431
        %2595 = vmatpush1.msra.mxu0 %v430
        %2596 = vmatprep.subr.mxu0 %v435
        %2597 = vmatpush1.msra.mxu0 %v434
        %2598 = vmatprep.subr.mxu0 %v439
        %2599 = vmatpush1.msra.mxu0 %v438
        %2600 = vmatprep.subr.mxu0 %v443
        %2601 = vmatpush1.msra.mxu0 %v442
        %2602 = vmatprep.subr.mxu0 %v447
        %2603 = vmatpush1.msra.mxu0 %v446
        %2604 = vmatprep.subr.mxu0 %v451
        %2605 = vmatpush1.msra.mxu0 %v450
        %2606 = vmatprep.subr.mxu0 %v455
        %2607 = vmatpush1.msra.mxu0 %v454
        %2608 = vmatprep.subr.mxu0 %v459
        %2609 = vmatpush1.msra.mxu0 %v458
        %2610 = vmatprep.subr.mxu0 %v463
        %2611 = vmatpush1.msra.mxu0 %v462
        %2612 = vmatprep.subr.mxu0 %v467
        %2613 = vmatpush1.msra.mxu0 %v466
        %2614 = vmatprep.subr.mxu0 %v471
        %2615 = vmatpush1.msra.mxu0 %v470
        %2616 = vmatprep.subr.mxu0 %v475
        %2617 = vmatpush1.msra.mxu0 %v474
        %2618 = vmatprep.subr.mxu0 %v479
        %2619 = vmatpush1.msra.mxu0 %v478
        %2620 = vmatprep.subr.mxu0 0.0
        %2621 = vmatpush1.msra.mxu0 0.0
        %2622 = vmatprep.subr.mxu0 0.0
        %2623 = vmatpush1.msra.mxu0 0.0
        %2624 = vmatprep.subr.mxu0 0.0
        %2625 = vmatpush1.msra.mxu0 0.0
        %2626 = vmatprep.subr.mxu0 0.0
        %2627 = vmatpush1.msra.mxu0 0.0
        %2628 = vmatprep.subr.mxu0 0.0
        %2629 = vmatpush1.msra.mxu0 0.0
        %2630 = vmatprep.subr.mxu0 0.0
        %2631 = vmatpush1.msra.mxu0 0.0
        %2632 = vmatprep.subr.mxu0 0.0
        %2633 = vmatpush1.msra.mxu0 0.0
        %2634 = vmatprep.subr.mxu0 0.0
        %2635 = vmatpush1.msra.mxu0 0.0
        %2636 = vmatprep.subr.mxu0 0.0
        %2637 = vmatpush1.msra.mxu0 0.0
        %2638 = vmatprep.subr.mxu0 0.0
        %2639 = vmatpush1.msra.mxu0 0.0
        %2640 = vmatprep.subr.mxu0 0.0
        %2641 = vmatpush1.msra.mxu0 0.0
        %2642 = vmatprep.subr.mxu0 0.0
        %2643 = vmatpush1.msra.mxu0 0.0
        %2644 = vmatprep.subr.mxu0 0.0
        %2645 = vmatpush1.msra.mxu0 0.0
        %2646 = vmatprep.subr.mxu0 0.0
        %2647 = vmatpush1.msra.mxu0 0.0
        %2648 = vmatprep.subr.mxu0 0.0
        %2649 = vmatpush1.msra.mxu0 0.0
        %2650 = vmatprep.subr.mxu0 0.0
        %2651 = vmatpush1.msra.mxu0 0.0
        %2652 = vmatprep.mubr.f32.mxu0 0.0
        %2653 = vmatmul.mubr.f32.gmra.mrb[0].mxu0 %v2270
        %v2654 = vpop.f32.mrb[0].mxu0
        %v2655 = vadd.f32 0.0, %v2654
        %v2656 = vpop.f32.mrb[0].mxu0
        %v2657 = vadd.f32 0.0, %v2656
        %2658 = vdwg.mxu0
        %2659 = vmatprep.subr.mxu0 %v421
        %2660 = vmatpush1.msra.mxu0 %v420
        %2661 = vmatprep.subr.mxu0 %v425
        %2662 = vmatpush1.msra.mxu0 %v424
        %2663 = vmatprep.subr.mxu0 %v429
        %2664 = vmatpush1.msra.mxu0 %v428
        %2665 = vmatprep.subr.mxu0 %v433
        %2666 = vmatpush1.msra.mxu0 %v432
        %2667 = vmatprep.subr.mxu0 %v437
        %2668 = vmatpush1.msra.mxu0 %v436
        %2669 = vmatprep.subr.mxu0 %v441
        %2670 = vmatpush1.msra.mxu0 %v440
        %2671 = vmatprep.subr.mxu0 %v445
        %2672 = vmatpush1.msra.mxu0 %v444
        %2673 = vmatprep.subr.mxu0 %v449
        %2674 = vmatpush1.msra.mxu0 %v448
        %2675 = vmatprep.subr.mxu0 %v453
        %2676 = vmatpush1.msra.mxu0 %v452
        %2677 = vmatprep.subr.mxu0 %v457
        %2678 = vmatpush1.msra.mxu0 %v456
        %2679 = vmatprep.subr.mxu0 %v461
        %2680 = vmatpush1.msra.mxu0 %v460
        %2681 = vmatprep.subr.mxu0 %v465
        %2682 = vmatpush1.msra.mxu0 %v464
        %2683 = vmatprep.subr.mxu0 %v469
        %2684 = vmatpush1.msra.mxu0 %v468
        %2685 = vmatprep.subr.mxu0 %v473
        %2686 = vmatpush1.msra.mxu0 %v472
        %2687 = vmatprep.subr.mxu0 %v477
        %2688 = vmatpush1.msra.mxu0 %v476
        %2689 = vmatprep.subr.mxu0 %v481
        %2690 = vmatpush1.msra.mxu0 %v480
        %2691 = vmatprep.subr.mxu0 0.0
        %2692 = vmatpush1.msra.mxu0 0.0
        %2693 = vmatprep.subr.mxu0 0.0
        %2694 = vmatpush1.msra.mxu0 0.0
        %2695 = vmatprep.subr.mxu0 0.0
        %2696 = vmatpush1.msra.mxu0 0.0
        %2697 = vmatprep.subr.mxu0 0.0
        %2698 = vmatpush1.msra.mxu0 0.0
        %2699 = vmatprep.subr.mxu0 0.0
        %2700 = vmatpush1.msra.mxu0 0.0
        %2701 = vmatprep.subr.mxu0 0.0
        %2702 = vmatpush1.msra.mxu0 0.0
        %2703 = vmatprep.subr.mxu0 0.0
        %2704 = vmatpush1.msra.mxu0 0.0
        %2705 = vmatprep.subr.mxu0 0.0
        %2706 = vmatpush1.msra.mxu0 0.0
        %2707 = vmatprep.subr.mxu0 0.0
        %2708 = vmatpush1.msra.mxu0 0.0
        %2709 = vmatprep.subr.mxu0 0.0
        %2710 = vmatpush1.msra.mxu0 0.0
        %2711 = vmatprep.subr.mxu0 0.0
        %2712 = vmatpush1.msra.mxu0 0.0
        %2713 = vmatprep.subr.mxu0 0.0
        %2714 = vmatpush1.msra.mxu0 0.0
        %2715 = vmatprep.subr.mxu0 0.0
        %2716 = vmatpush1.msra.mxu0 0.0
        %2717 = vmatprep.subr.mxu0 0.0
        %2718 = vmatpush1.msra.mxu0 0.0
        %2719 = vmatprep.subr.mxu0 0.0
        %2720 = vmatpush1.msra.mxu0 0.0
        %2721 = vmatprep.subr.mxu0 0.0
        %2722 = vmatpush1.msra.mxu0 0.0
        %2723 = vmatprep.mubr.f32.mxu0 0.0
        %2724 = vmatmul.mubr.f32.gmra.mrb[0].mxu0 %v2270
        %v2725 = vpop.f32.mrb[0].mxu0
        %v2726 = vadd.f32 0.0, %v2725
        %v2727 = vpop.f32.mrb[0].mxu0
        %v2728 = vadd.f32 0.0, %v2727
        %2729 = vdwg.mxu0
        %v2730 = vadd.f32 %v2584, %v2655
        %v2731 = vadd.f32 %v2585, %v2657
        %v2732 = vadd.f32 %v2586, %v2726
        %v2733 = vadd.f32 %v2587, %v2728
        %v2734 = vxor.u32 %v2730, 2147483648
        %v2735 = vxor.u32 %v2731, 2147483648
        %v2736 = vxor.u32 %v2732, 2147483648
        %v2737 = vmul.f32 %v2734, 1.442695
        %v2738 = vpow.pop %v2737
        %v2739 = vmul.f32 %v2735, 1.442695
        %v2740 = vpow.pop %v2739
        %v2741 = vmul.f32 %v2736, 1.442695
        %v2742 = vpow.pop %v2741
        %v2743 = vadd.f32 %v2738, 1.0
        %v2744 = vadd.f32 %v2740, 1.0
        %v2745 = vadd.f32 %v2742, 1.0
        %v2746 = vrcp.pop %v2743
        %v2747 = vmul.f32 1.0, %v2746
        %v2748 = vrcp.pop %v2744
        %v2749 = vmul.f32 1.0, %v2748
        %v2750 = vrcp.pop %v2745
        %v2751 = vmul.f32 1.0, %v2750
        %v2752 = vtanh.pop %v2733
        %v2753 = vmul.f32 %v2749, %v2268
        %v2754 = vmul.f32 %v2747, %v2752
        %v2755 = vadd.f32 %v2753, %v2754
        %v2756 = vtanh.pop %v2755
        %v2757 = vmul.f32 %v2751, %v2756
        %2758 = vmatprep.subr.mxu0 %v547
        %2759 = vmatpush1.msra.mxu0 %v546
        %2760 = vmatprep.subr.mxu0 %v551
        %2761 = vmatpush1.msra.mxu0 %v550
        %2762 = vmatprep.subr.mxu0 %v555
        %2763 = vmatpush1.msra.mxu0 %v554
        %2764 = vmatprep.subr.mxu0 %v559
        %2765 = vmatpush1.msra.mxu0 %v558
        %2766 = vmatprep.subr.mxu0 %v563
        %2767 = vmatpush1.msra.mxu0 %v562
        %2768 = vmatprep.subr.mxu0 %v567
        %2769 = vmatpush1.msra.mxu0 %v566
        %2770 = vmatprep.subr.mxu0 %v571
        %2771 = vmatpush1.msra.mxu0 %v570
        %2772 = vmatprep.subr.mxu0 %v575
        %2773 = vmatpush1.msra.mxu0 %v574
        %2774 = vmatprep.subr.mxu0 %v579
        %2775 = vmatpush1.msra.mxu0 %v578
        %2776 = vmatprep.subr.mxu0 %v583
        %2777 = vmatpush1.msra.mxu0 %v582
        %2778 = vmatprep.subr.mxu0 %v587
        %2779 = vmatpush1.msra.mxu0 %v586
        %2780 = vmatprep.subr.mxu0 %v591
        %2781 = vmatpush1.msra.mxu0 %v590
        %2782 = vmatprep.subr.mxu0 %v595
        %2783 = vmatpush1.msra.mxu0 %v594
        %2784 = vmatprep.subr.mxu0 %v599
        %2785 = vmatpush1.msra.mxu0 %v598
        %2786 = vmatprep.subr.mxu0 %v603
        %2787 = vmatpush1.msra.mxu0 %v602
        %2788 = vmatprep.subr.mxu0 %v607
        %2789 = vmatpush1.msra.mxu0 %v606
        %2790 = vmatprep.subr.mxu0 0.0
        %2791 = vmatpush1.msra.mxu0 0.0
        %2792 = vmatprep.subr.mxu0 0.0
        %2793 = vmatpush1.msra.mxu0 0.0
        %2794 = vmatprep.subr.mxu0 0.0
        %2795 = vmatpush1.msra.mxu0 0.0
        %2796 = vmatprep.subr.mxu0 0.0
        %2797 = vmatpush1.msra.mxu0 0.0
        %2798 = vmatprep.subr.mxu0 0.0
        %2799 = vmatpush1.msra.mxu0 0.0
        %2800 = vmatprep.subr.mxu0 0.0
        %2801 = vmatpush1.msra.mxu0 0.0
        %2802 = vmatprep.subr.mxu0 0.0
        %2803 = vmatpush1.msra.mxu0 0.0
        %2804 = vmatprep.subr.mxu0 0.0
        %2805 = vmatpush1.msra.mxu0 0.0
        %2806 = vmatprep.subr.mxu0 0.0
        %2807 = vmatpush1.msra.mxu0 0.0
        %2808 = vmatprep.subr.mxu0 0.0
        %2809 = vmatpush1.msra.mxu0 0.0
        %2810 = vmatprep.subr.mxu0 0.0
        %2811 = vmatpush1.msra.mxu0 0.0
        %2812 = vmatprep.subr.mxu0 0.0
        %2813 = vmatpush1.msra.mxu0 0.0
        %2814 = vmatprep.subr.mxu0 0.0
        %2815 = vmatpush1.msra.mxu0 0.0
        %2816 = vmatprep.subr.mxu0 0.0
        %2817 = vmatpush1.msra.mxu0 0.0
        %2818 = vmatprep.subr.mxu0 0.0
        %2819 = vmatpush1.msra.mxu0 0.0
        %2820 = vmatprep.subr.mxu0 0.0
        %2821 = vmatpush1.msra.mxu0 0.0
        %2822 = vmatprep.mubr.f32.mxu0 0.0
        %2823 = vmatmul.mubr.f32.gmra.mrb[0].mxu0 %v2582
        %v2824 = vpop.f32.mrb[0].mxu0
        %v2825 = vadd.f32 0.0, %v2824
        %v2826 = vpop.f32.mrb[0].mxu0
        %v2827 = vadd.f32 0.0, %v2826
        %2828 = vdwg.mxu0
        %2829 = vmatprep.subr.mxu0 %v549
        %2830 = vmatpush1.msra.mxu0 %v548
        %2831 = vmatprep.subr.mxu0 %v553
        %2832 = vmatpush1.msra.mxu0 %v552
        %2833 = vmatprep.subr.mxu0 %v557
        %2834 = vmatpush1.msra.mxu0 %v556
        %2835 = vmatprep.subr.mxu0 %v561
        %2836 = vmatpush1.msra.mxu0 %v560
        %2837 = vmatprep.subr.mxu0 %v565
        %2838 = vmatpush1.msra.mxu0 %v564
        %2839 = vmatprep.subr.mxu0 %v569
        %2840 = vmatpush1.msra.mxu0 %v568
        %2841 = vmatprep.subr.mxu0 %v573
        %2842 = vmatpush1.msra.mxu0 %v572
        %2843 = vmatprep.subr.mxu0 %v577
        %2844 = vmatpush1.msra.mxu0 %v576
        %2845 = vmatprep.subr.mxu0 %v581
        %2846 = vmatpush1.msra.mxu0 %v580
        %2847 = vmatprep.subr.mxu0 %v585
        %2848 = vmatpush1.msra.mxu0 %v584
        %2849 = vmatprep.subr.mxu0 %v589
        %2850 = vmatpush1.msra.mxu0 %v588
        %2851 = vmatprep.subr.mxu0 %v593
        %2852 = vmatpush1.msra.mxu0 %v592
        %2853 = vmatprep.subr.mxu0 %v597
        %2854 = vmatpush1.msra.mxu0 %v596
        %2855 = vmatprep.subr.mxu0 %v601
        %2856 = vmatpush1.msra.mxu0 %v600
        %2857 = vmatprep.subr.mxu0 %v605
        %2858 = vmatpush1.msra.mxu0 %v604
        %2859 = vmatprep.subr.mxu0 %v609
        %2860 = vmatpush1.msra.mxu0 %v608
        %2861 = vmatprep.subr.mxu0 0.0
        %2862 = vmatpush1.msra.mxu0 0.0
        %2863 = vmatprep.subr.mxu0 0.0
        %2864 = vmatpush1.msra.mxu0 0.0
        %2865 = vmatprep.subr.mxu0 0.0
        %2866 = vmatpush1.msra.mxu0 0.0
        %2867 = vmatprep.subr.mxu0 0.0
        %2868 = vmatpush1.msra.mxu0 0.0
        %2869 = vmatprep.subr.mxu0 0.0
        %2870 = vmatpush1.msra.mxu0 0.0
        %2871 = vmatprep.subr.mxu0 0.0
        %2872 = vmatpush1.msra.mxu0 0.0
        %2873 = vmatprep.subr.mxu0 0.0
        %2874 = vmatpush1.msra.mxu0 0.0
        %2875 = vmatprep.subr.mxu0 0.0
        %2876 = vmatpush1.msra.mxu0 0.0
        %2877 = vmatprep.subr.mxu0 0.0
        %2878 = vmatpush1.msra.mxu0 0.0
        %2879 = vmatprep.subr.mxu0 0.0
        %2880 = vmatpush1.msra.mxu0 0.0
        %2881 = vmatprep.subr.mxu0 0.0
        %2882 = vmatpush1.msra.mxu0 0.0
        %2883 = vmatprep.subr.mxu0 0.0
        %2884 = vmatpush1.msra.mxu0 0.0
        %2885 = vmatprep.subr.mxu0 0.0
        %2886 = vmatpush1.msra.mxu0 0.0
        %2887 = vmatprep.subr.mxu0 0.0
        %2888 = vmatpush1.msra.mxu0 0.0
        %2889 = vmatprep.subr.mxu0 0.0
        %2890 = vmatpush1.msra.mxu0 0.0
        %2891 = vmatprep.subr.mxu0 0.0
        %2892 = vmatpush1.msra.mxu0 0.0
        %2893 = vmatprep.mubr.f32.mxu0 0.0
        %2894 = vmatmul.mubr.f32.gmra.mrb[0].mxu0 %v2582
        %v2895 = vpop.f32.mrb[0].mxu0
        %v2896 = vadd.f32 0.0, %v2895
        %v2897 = vpop.f32.mrb[0].mxu0
        %v2898 = vadd.f32 0.0, %v2897
        %2899 = vdwg.mxu0
        %2900 = vmatprep.subr.mxu0 %v483
        %2901 = vmatpush1.msra.mxu0 %v482
        %2902 = vmatprep.subr.mxu0 %v487
        %2903 = vmatpush1.msra.mxu0 %v486
        %2904 = vmatprep.subr.mxu0 %v491
        %2905 = vmatpush1.msra.mxu0 %v490
        %2906 = vmatprep.subr.mxu0 %v495
        %2907 = vmatpush1.msra.mxu0 %v494
        %2908 = vmatprep.subr.mxu0 %v499
        %2909 = vmatpush1.msra.mxu0 %v498
        %2910 = vmatprep.subr.mxu0 %v503
        %2911 = vmatpush1.msra.mxu0 %v502
        %2912 = vmatprep.subr.mxu0 %v507
        %2913 = vmatpush1.msra.mxu0 %v506
        %2914 = vmatprep.subr.mxu0 %v511
        %2915 = vmatpush1.msra.mxu0 %v510
        %2916 = vmatprep.subr.mxu0 %v515
        %2917 = vmatpush1.msra.mxu0 %v514
        %2918 = vmatprep.subr.mxu0 %v519
        %2919 = vmatpush1.msra.mxu0 %v518
        %2920 = vmatprep.subr.mxu0 %v523
        %2921 = vmatpush1.msra.mxu0 %v522
        %2922 = vmatprep.subr.mxu0 %v527
        %2923 = vmatpush1.msra.mxu0 %v526
        %2924 = vmatprep.subr.mxu0 %v531
        %2925 = vmatpush1.msra.mxu0 %v530
        %2926 = vmatprep.subr.mxu0 %v535
        %2927 = vmatpush1.msra.mxu0 %v534
        %2928 = vmatprep.subr.mxu0 %v539
        %2929 = vmatpush1.msra.mxu0 %v538
        %2930 = vmatprep.subr.mxu0 %v543
        %2931 = vmatpush1.msra.mxu0 %v542
        %2932 = vmatprep.subr.mxu0 0.0
        %2933 = vmatpush1.msra.mxu0 0.0
        %2934 = vmatprep.subr.mxu0 0.0
        %2935 = vmatpush1.msra.mxu0 0.0
        %2936 = vmatprep.subr.mxu0 0.0
        %2937 = vmatpush1.msra.mxu0 0.0
        %2938 = vmatprep.subr.mxu0 0.0
        %2939 = vmatpush1.msra.mxu0 0.0
        %2940 = vmatprep.subr.mxu0 0.0
        %2941 = vmatpush1.msra.mxu0 0.0
        %2942 = vmatprep.subr.mxu0 0.0
        %2943 = vmatpush1.msra.mxu0 0.0
        %2944 = vmatprep.subr.mxu0 0.0
        %2945 = vmatpush1.msra.mxu0 0.0
        %2946 = vmatprep.subr.mxu0 0.0
        %2947 = vmatpush1.msra.mxu0 0.0
        %2948 = vmatprep.subr.mxu0 0.0
        %2949 = vmatpush1.msra.mxu0 0.0
        %2950 = vmatprep.subr.mxu0 0.0
        %2951 = vmatpush1.msra.mxu0 0.0
        %2952 = vmatprep.subr.mxu0 0.0
        %2953 = vmatpush1.msra.mxu0 0.0
        %2954 = vmatprep.subr.mxu0 0.0
        %2955 = vmatpush1.msra.mxu0 0.0
        %2956 = vmatprep.subr.mxu0 0.0
        %2957 = vmatpush1.msra.mxu0 0.0
        %2958 = vmatprep.subr.mxu0 0.0
        %2959 = vmatpush1.msra.mxu0 0.0
        %2960 = vmatprep.subr.mxu0 0.0
        %2961 = vmatpush1.msra.mxu0 0.0
        %2962 = vmatprep.subr.mxu0 0.0
        %2963 = vmatpush1.msra.mxu0 0.0
        %2964 = vmatprep.mubr.f32.mxu0 0.0
        %2965 = vmatmul.mubr.f32.gmra.mrb[0].mxu0 %v2757
        %v2966 = vpop.f32.mrb[0].mxu0
        %v2967 = vadd.f32 %v2825, %v2966
        %v2968 = vpop.f32.mrb[0].mxu0
        %v2969 = vadd.f32 %v2827, %v2968
        %2970 = vdwg.mxu0
        %2971 = vmatprep.subr.mxu0 %v485
        %2972 = vmatpush1.msra.mxu0 %v484
        %2973 = vmatprep.subr.mxu0 %v489
        %2974 = vmatpush1.msra.mxu0 %v488
        %2975 = vmatprep.subr.mxu0 %v493
        %2976 = vmatpush1.msra.mxu0 %v492
        %2977 = vmatprep.subr.mxu0 %v497
        %2978 = vmatpush1.msra.mxu0 %v496
        %2979 = vmatprep.subr.mxu0 %v501
        %2980 = vmatpush1.msra.mxu0 %v500
        %2981 = vmatprep.subr.mxu0 %v505
        %2982 = vmatpush1.msra.mxu0 %v504
        %2983 = vmatprep.subr.mxu0 %v509
        %2984 = vmatpush1.msra.mxu0 %v508
        %2985 = vmatprep.subr.mxu0 %v513
        %2986 = vmatpush1.msra.mxu0 %v512
        %2987 = vmatprep.subr.mxu0 %v517
        %2988 = vmatpush1.msra.mxu0 %v516
        %2989 = vmatprep.subr.mxu0 %v521
        %2990 = vmatpush1.msra.mxu0 %v520
        %2991 = vmatprep.subr.mxu0 %v525
        %2992 = vmatpush1.msra.mxu0 %v524
        %2993 = vmatprep.subr.mxu0 %v529
        %2994 = vmatpush1.msra.mxu0 %v528
        %2995 = vmatprep.subr.mxu0 %v533
        %2996 = vmatpush1.msra.mxu0 %v532
        %2997 = vmatprep.subr.mxu0 %v537
        %2998 = vmatpush1.msra.mxu0 %v536
        %2999 = vmatprep.subr.mxu0 %v541
        %3000 = vmatpush1.msra.mxu0 %v540
        %3001 = vmatprep.subr.mxu0 %v545
        %3002 = vmatpush1.msra.mxu0 %v544
        %3003 = vmatprep.subr.mxu0 0.0
        %3004 = vmatpush1.msra.mxu0 0.0
        %3005 = vmatprep.subr.mxu0 0.0
        %3006 = vmatpush1.msra.mxu0 0.0
        %3007 = vmatprep.subr.mxu0 0.0
        %3008 = vmatpush1.msra.mxu0 0.0
        %3009 = vmatprep.subr.mxu0 0.0
        %3010 = vmatpush1.msra.mxu0 0.0
        %3011 = vmatprep.subr.mxu0 0.0
        %3012 = vmatpush1.msra.mxu0 0.0
        %3013 = vmatprep.subr.mxu0 0.0
        %3014 = vmatpush1.msra.mxu0 0.0
        %3015 = vmatprep.subr.mxu0 0.0
        %3016 = vmatpush1.msra.mxu0 0.0
        %3017 = vmatprep.subr.mxu0 0.0
        %3018 = vmatpush1.msra.mxu0 0.0
        %3019 = vmatprep.subr.mxu0 0.0
        %3020 = vmatpush1.msra.mxu0 0.0
        %3021 = vmatprep.subr.mxu0 0.0
        %3022 = vmatpush1.msra.mxu0 0.0
        %3023 = vmatprep.subr.mxu0 0.0
        %3024 = vmatpush1.msra.mxu0 0.0
        %3025 = vmatprep.subr.mxu0 0.0
        %3026 = vmatpush1.msra.mxu0 0.0
        %3027 = vmatprep.subr.mxu0 0.0
        %3028 = vmatpush1.msra.mxu0 0.0
        %3029 = vmatprep.subr.mxu0 0.0
        %3030 = vmatpush1.msra.mxu0 0.0
        %3031 = vmatprep.subr.mxu0 0.0
        %3032 = vmatpush1.msra.mxu0 0.0
        %3033 = vmatprep.subr.mxu0 0.0
        %3034 = vmatpush1.msra.mxu0 0.0
        %3035 = vmatprep.mubr.f32.mxu0 0.0
        %3036 = vmatmul.mubr.f32.gmra.mrb[0].mxu0 %v2757
        %v3037 = vpop.f32.mrb[0].mxu0
        %v3038 = vadd.f32 %v2896, %v3037
        %v3039 = vpop.f32.mrb[0].mxu0
        %v3040 = vadd.f32 %v2898, %v3039
        %3041 = vdwg.mxu0
        %v3042 = vadd.f32 %v2967, %v1077
        %v3043 = vadd.f32 %v2969, %v1081
        %v3044 = vadd.f32 %v3038, %v1085
        %v3045 = vadd.f32 %v3040, %v1089
        %v3046 = vxor.u32 %v3042, 2147483648
        %v3047 = vxor.u32 %v3043, 2147483648
        %v3048 = vxor.u32 %v3044, 2147483648
        %v3049 = vmul.f32 %v3046, 1.442695
        %v3050 = vpow.pop %v3049
        %v3051 = vmul.f32 %v3047, 1.442695
        %v3052 = vpow.pop %v3051
        %v3053 = vmul.f32 %v3048, 1.442695
        %v3054 = vpow.pop %v3053
        %v3055 = vadd.f32 %v3050, 1.0
        %v3056 = vadd.f32 %v3052, 1.0
        %v3057 = vadd.f32 %v3054, 1.0
        %v3058 = vrcp.pop %v3055
        %v3059 = vmul.f32 1.0, %v3058
        %v3060 = vrcp.pop %v3056
        %v3061 = vmul.f32 1.0, %v3060
        %v3062 = vrcp.pop %v3057
        %v3063 = vmul.f32 1.0, %v3062
        %v3064 = vtanh.pop %v3045
        %v3065 = vmul.f32 %v3061, %v2580
        %v3066 = vmul.f32 %v3059, %v3064
        %v3067 = vadd.f32 %v3065, %v3066
        %v3068 = vtanh.pop %v3067
        %v3069 = vmul.f32 %v3063, %v3068
        %s3070 = scalar_lea.vmem %s359, 160 [#allocation7]
        %v3071 = vld [vmem:[%s3070] sm:$0xff]
        %v3072 = vld [vmem:[%s3070 + $0x8] sm:$0xff]
        %v3073 = vld [vmem:[%s3070 + $0x10] sm:$0xff]
        %v3074 = vld [vmem:[%s3070 + $0x18] sm:$0xff]
        %3075 = vmatprep.subr.mxu0 %v419
        %3076 = vmatpush1.msra.mxu0 %v418
        %3077 = vmatprep.subr.mxu0 %v423
        %3078 = vmatpush1.msra.mxu0 %v422
        %3079 = vmatprep.subr.mxu0 %v427
        %3080 = vmatpush1.msra.mxu0 %v426
        %3081 = vmatprep.subr.mxu0 %v431
        %3082 = vmatpush1.msra.mxu0 %v430
        %3083 = vmatprep.subr.mxu0 %v435
        %3084 = vmatpush1.msra.mxu0 %v434
        %3085 = vmatprep.subr.mxu0 %v439
        %3086 = vmatpush1.msra.mxu0 %v438
        %3087 = vmatprep.subr.mxu0 %v443
        %3088 = vmatpush1.msra.mxu0 %v442
        %3089 = vmatprep.subr.mxu0 %v447
        %3090 = vmatpush1.msra.mxu0 %v446
        %3091 = vmatprep.subr.mxu0 %v451
        %3092 = vmatpush1.msra.mxu0 %v450
        %3093 = vmatprep.subr.mxu0 %v455
        %3094 = vmatpush1.msra.mxu0 %v454
        %3095 = vmatprep.subr.mxu0 %v459
        %3096 = vmatpush1.msra.mxu0 %v458
        %3097 = vmatprep.subr.mxu0 %v463
        %3098 = vmatpush1.msra.mxu0 %v462
        %3099 = vmatprep.subr.mxu0 %v467
        %3100 = vmatpush1.msra.mxu0 %v466
        %3101 = vmatprep.subr.mxu0 %v471
        %3102 = vmatpush1.msra.mxu0 %v470
        %3103 = vmatprep.subr.mxu0 %v475
        %3104 = vmatpush1.msra.mxu0 %v474
        %3105 = vmatprep.subr.mxu0 %v479
        %3106 = vmatpush1.msra.mxu0 %v478
        %3107 = vmatprep.subr.mxu0 0.0
        %3108 = vmatpush1.msra.mxu0 0.0
        %3109 = vmatprep.subr.mxu0 0.0
        %3110 = vmatpush1.msra.mxu0 0.0
        %3111 = vmatprep.subr.mxu0 0.0
        %3112 = vmatpush1.msra.mxu0 0.0
        %3113 = vmatprep.subr.mxu0 0.0
        %3114 = vmatpush1.msra.mxu0 0.0
        %3115 = vmatprep.subr.mxu0 0.0
        %3116 = vmatpush1.msra.mxu0 0.0
        %3117 = vmatprep.subr.mxu0 0.0
        %3118 = vmatpush1.msra.mxu0 0.0
        %3119 = vmatprep.subr.mxu0 0.0
        %3120 = vmatpush1.msra.mxu0 0.0
        %3121 = vmatprep.subr.mxu0 0.0
        %3122 = vmatpush1.msra.mxu0 0.0
        %3123 = vmatprep.subr.mxu0 0.0
        %3124 = vmatpush1.msra.mxu0 0.0
        %3125 = vmatprep.subr.mxu0 0.0
        %3126 = vmatpush1.msra.mxu0 0.0
        %3127 = vmatprep.subr.mxu0 0.0
        %3128 = vmatpush1.msra.mxu0 0.0
        %3129 = vmatprep.subr.mxu0 0.0
        %3130 = vmatpush1.msra.mxu0 0.0
        %3131 = vmatprep.subr.mxu0 0.0
        %3132 = vmatpush1.msra.mxu0 0.0
        %3133 = vmatprep.subr.mxu0 0.0
        %3134 = vmatpush1.msra.mxu0 0.0
        %3135 = vmatprep.subr.mxu0 0.0
        %3136 = vmatpush1.msra.mxu0 0.0
        %3137 = vmatprep.subr.mxu0 0.0
        %3138 = vmatpush1.msra.mxu0 0.0
        %3139 = vmatprep.mubr.f32.mxu0 0.0
        %3140 = vmatmul.mubr.f32.gmra.mrb[0].mxu0 %v2757
        %v3141 = vpop.f32.mrb[0].mxu0
        %v3142 = vadd.f32 0.0, %v3141
        %v3143 = vpop.f32.mrb[0].mxu0
        %v3144 = vadd.f32 0.0, %v3143
        %3145 = vdwg.mxu0
        %3146 = vmatprep.subr.mxu0 %v421
        %3147 = vmatpush1.msra.mxu0 %v420
        %3148 = vmatprep.subr.mxu0 %v425
        %3149 = vmatpush1.msra.mxu0 %v424
        %3150 = vmatprep.subr.mxu0 %v429
        %3151 = vmatpush1.msra.mxu0 %v428
        %3152 = vmatprep.subr.mxu0 %v433
        %3153 = vmatpush1.msra.mxu0 %v432
        %3154 = vmatprep.subr.mxu0 %v437
        %3155 = vmatpush1.msra.mxu0 %v436
        %3156 = vmatprep.subr.mxu0 %v441
        %3157 = vmatpush1.msra.mxu0 %v440
        %3158 = vmatprep.subr.mxu0 %v445
        %3159 = vmatpush1.msra.mxu0 %v444
        %3160 = vmatprep.subr.mxu0 %v449
        %3161 = vmatpush1.msra.mxu0 %v448
        %3162 = vmatprep.subr.mxu0 %v453
        %3163 = vmatpush1.msra.mxu0 %v452
        %3164 = vmatprep.subr.mxu0 %v457
        %3165 = vmatpush1.msra.mxu0 %v456
        %3166 = vmatprep.subr.mxu0 %v461
        %3167 = vmatpush1.msra.mxu0 %v460
        %3168 = vmatprep.subr.mxu0 %v465
        %3169 = vmatpush1.msra.mxu0 %v464
        %3170 = vmatprep.subr.mxu0 %v469
        %3171 = vmatpush1.msra.mxu0 %v468
        %3172 = vmatprep.subr.mxu0 %v473
        %3173 = vmatpush1.msra.mxu0 %v472
        %3174 = vmatprep.subr.mxu0 %v477
        %3175 = vmatpush1.msra.mxu0 %v476
        %3176 = vmatprep.subr.mxu0 %v481
        %3177 = vmatpush1.msra.mxu0 %v480
        %3178 = vmatprep.subr.mxu0 0.0
        %3179 = vmatpush1.msra.mxu0 0.0
        %3180 = vmatprep.subr.mxu0 0.0
        %3181 = vmatpush1.msra.mxu0 0.0
        %3182 = vmatprep.subr.mxu0 0.0
        %3183 = vmatpush1.msra.mxu0 0.0
        %3184 = vmatprep.subr.mxu0 0.0
        %3185 = vmatpush1.msra.mxu0 0.0
        %3186 = vmatprep.subr.mxu0 0.0
        %3187 = vmatpush1.msra.mxu0 0.0
        %3188 = vmatprep.subr.mxu0 0.0
        %3189 = vmatpush1.msra.mxu0 0.0
        %3190 = vmatprep.subr.mxu0 0.0
        %3191 = vmatpush1.msra.mxu0 0.0
        %3192 = vmatprep.subr.mxu0 0.0
        %3193 = vmatpush1.msra.mxu0 0.0
        %3194 = vmatprep.subr.mxu0 0.0
        %3195 = vmatpush1.msra.mxu0 0.0
        %3196 = vmatprep.subr.mxu0 0.0
        %3197 = vmatpush1.msra.mxu0 0.0
        %3198 = vmatprep.subr.mxu0 0.0
        %3199 = vmatpush1.msra.mxu0 0.0
        %3200 = vmatprep.subr.mxu0 0.0
        %3201 = vmatpush1.msra.mxu0 0.0
        %3202 = vmatprep.subr.mxu0 0.0
        %3203 = vmatpush1.msra.mxu0 0.0
        %3204 = vmatprep.subr.mxu0 0.0
        %3205 = vmatpush1.msra.mxu0 0.0
        %3206 = vmatprep.subr.mxu0 0.0
        %3207 = vmatpush1.msra.mxu0 0.0
        %3208 = vmatprep.subr.mxu0 0.0
        %3209 = vmatpush1.msra.mxu0 0.0
        %3210 = vmatprep.mubr.f32.mxu0 0.0
        %3211 = vmatmul.mubr.f32.gmra.mrb[0].mxu0 %v2757
        %v3212 = vpop.f32.mrb[0].mxu0
        %v3213 = vadd.f32 0.0, %v3212
        %v3214 = vpop.f32.mrb[0].mxu0
        %v3215 = vadd.f32 0.0, %v3214
        %3216 = vdwg.mxu0
        %v3217 = vadd.f32 %v3071, %v3142
        %v3218 = vadd.f32 %v3072, %v3144
        %v3219 = vadd.f32 %v3073, %v3213
        %v3220 = vadd.f32 %v3074, %v3215
        %v3221 = vxor.u32 %v3217, 2147483648
        %v3222 = vxor.u32 %v3218, 2147483648
        %v3223 = vxor.u32 %v3219, 2147483648
        %v3224 = vmul.f32 %v3221, 1.442695
        %v3225 = vpow.pop %v3224
        %v3226 = vmul.f32 %v3222, 1.442695
        %v3227 = vpow.pop %v3226
        %v3228 = vmul.f32 %v3223, 1.442695
        %v3229 = vpow.pop %v3228
        %v3230 = vadd.f32 %v3225, 1.0
        %v3231 = vadd.f32 %v3227, 1.0
        %v3232 = vadd.f32 %v3229, 1.0
        %v3233 = vrcp.pop %v3230
        %v3234 = vmul.f32 1.0, %v3233
        %v3235 = vrcp.pop %v3231
        %v3236 = vmul.f32 1.0, %v3235
        %v3237 = vrcp.pop %v3232
        %v3238 = vmul.f32 1.0, %v3237
        %v3239 = vtanh.pop %v3220
        %v3240 = vmul.f32 %v3236, %v2755
        %v3241 = vmul.f32 %v3234, %v3239
        %v3242 = vadd.f32 %v3240, %v3241
        %v3243 = vtanh.pop %v3242
        %v3244 = vmul.f32 %v3238, %v3243
        %3245 = vmatprep.subr.mxu0 %v547
        %3246 = vmatpush1.msra.mxu0 %v546
        %3247 = vmatprep.subr.mxu0 %v551
        %3248 = vmatpush1.msra.mxu0 %v550
        %3249 = vmatprep.subr.mxu0 %v555
        %3250 = vmatpush1.msra.mxu0 %v554
        %3251 = vmatprep.subr.mxu0 %v559
        %3252 = vmatpush1.msra.mxu0 %v558
        %3253 = vmatprep.subr.mxu0 %v563
        %3254 = vmatpush1.msra.mxu0 %v562
        %3255 = vmatprep.subr.mxu0 %v567
        %3256 = vmatpush1.msra.mxu0 %v566
        %3257 = vmatprep.subr.mxu0 %v571
        %3258 = vmatpush1.msra.mxu0 %v570
        %3259 = vmatprep.subr.mxu0 %v575
        %3260 = vmatpush1.msra.mxu0 %v574
        %3261 = vmatprep.subr.mxu0 %v579
        %3262 = vmatpush1.msra.mxu0 %v578
        %3263 = vmatprep.subr.mxu0 %v583
        %3264 = vmatpush1.msra.mxu0 %v582
        %3265 = vmatprep.subr.mxu0 %v587
        %3266 = vmatpush1.msra.mxu0 %v586
        %3267 = vmatprep.subr.mxu0 %v591
        %3268 = vmatpush1.msra.mxu0 %v590
        %3269 = vmatprep.subr.mxu0 %v595
        %3270 = vmatpush1.msra.mxu0 %v594
        %3271 = vmatprep.subr.mxu0 %v599
        %3272 = vmatpush1.msra.mxu0 %v598
        %3273 = vmatprep.subr.mxu0 %v603
        %3274 = vmatpush1.msra.mxu0 %v602
        %3275 = vmatprep.subr.mxu0 %v607
        %3276 = vmatpush1.msra.mxu0 %v606
        %3277 = vmatprep.subr.mxu0 0.0
        %3278 = vmatpush1.msra.mxu0 0.0
        %3279 = vmatprep.subr.mxu0 0.0
        %3280 = vmatpush1.msra.mxu0 0.0
        %3281 = vmatprep.subr.mxu0 0.0
        %3282 = vmatpush1.msra.mxu0 0.0
        %3283 = vmatprep.subr.mxu0 0.0
        %3284 = vmatpush1.msra.mxu0 0.0
        %3285 = vmatprep.subr.mxu0 0.0
        %3286 = vmatpush1.msra.mxu0 0.0
        %3287 = vmatprep.subr.mxu0 0.0
        %3288 = vmatpush1.msra.mxu0 0.0
        %3289 = vmatprep.subr.mxu0 0.0
        %3290 = vmatpush1.msra.mxu0 0.0
        %3291 = vmatprep.subr.mxu0 0.0
        %3292 = vmatpush1.msra.mxu0 0.0
        %3293 = vmatprep.subr.mxu0 0.0
        %3294 = vmatpush1.msra.mxu0 0.0
        %3295 = vmatprep.subr.mxu0 0.0
        %3296 = vmatpush1.msra.mxu0 0.0
        %3297 = vmatprep.subr.mxu0 0.0
        %3298 = vmatpush1.msra.mxu0 0.0
        %3299 = vmatprep.subr.mxu0 0.0
        %3300 = vmatpush1.msra.mxu0 0.0
        %3301 = vmatprep.subr.mxu0 0.0
        %3302 = vmatpush1.msra.mxu0 0.0
        %3303 = vmatprep.subr.mxu0 0.0
        %3304 = vmatpush1.msra.mxu0 0.0
        %3305 = vmatprep.subr.mxu0 0.0
        %3306 = vmatpush1.msra.mxu0 0.0
        %3307 = vmatprep.subr.mxu0 0.0
        %3308 = vmatpush1.msra.mxu0 0.0
        %3309 = vmatprep.mubr.f32.mxu0 0.0
        %3310 = vmatmul.mubr.f32.gmra.mrb[0].mxu0 %v3069
        %v3311 = vpop.f32.mrb[0].mxu0
        %v3312 = vadd.f32 0.0, %v3311
        %v3313 = vpop.f32.mrb[0].mxu0
        %v3314 = vadd.f32 0.0, %v3313
        %3315 = vdwg.mxu0
        %3316 = vmatprep.subr.mxu0 %v549
        %3317 = vmatpush1.msra.mxu0 %v548
        %3318 = vmatprep.subr.mxu0 %v553
        %3319 = vmatpush1.msra.mxu0 %v552
        %3320 = vmatprep.subr.mxu0 %v557
        %3321 = vmatpush1.msra.mxu0 %v556
        %3322 = vmatprep.subr.mxu0 %v561
        %3323 = vmatpush1.msra.mxu0 %v560
        %3324 = vmatprep.subr.mxu0 %v565
        %3325 = vmatpush1.msra.mxu0 %v564
        %3326 = vmatprep.subr.mxu0 %v569
        %3327 = vmatpush1.msra.mxu0 %v568
        %3328 = vmatprep.subr.mxu0 %v573
        %3329 = vmatpush1.msra.mxu0 %v572
        %3330 = vmatprep.subr.mxu0 %v577
        %3331 = vmatpush1.msra.mxu0 %v576
        %3332 = vmatprep.subr.mxu0 %v581
        %3333 = vmatpush1.msra.mxu0 %v580
        %3334 = vmatprep.subr.mxu0 %v585
        %3335 = vmatpush1.msra.mxu0 %v584
        %3336 = vmatprep.subr.mxu0 %v589
        %3337 = vmatpush1.msra.mxu0 %v588
        %3338 = vmatprep.subr.mxu0 %v593
        %3339 = vmatpush1.msra.mxu0 %v592
        %3340 = vmatprep.subr.mxu0 %v597
        %3341 = vmatpush1.msra.mxu0 %v596
        %3342 = vmatprep.subr.mxu0 %v601
        %3343 = vmatpush1.msra.mxu0 %v600
        %3344 = vmatprep.subr.mxu0 %v605
        %3345 = vmatpush1.msra.mxu0 %v604
        %3346 = vmatprep.subr.mxu0 %v609
        %3347 = vmatpush1.msra.mxu0 %v608
        %3348 = vmatprep.subr.mxu0 0.0
        %3349 = vmatpush1.msra.mxu0 0.0
        %3350 = vmatprep.subr.mxu0 0.0
        %3351 = vmatpush1.msra.mxu0 0.0
        %3352 = vmatprep.subr.mxu0 0.0
        %3353 = vmatpush1.msra.mxu0 0.0
        %3354 = vmatprep.subr.mxu0 0.0
        %3355 = vmatpush1.msra.mxu0 0.0
        %3356 = vmatprep.subr.mxu0 0.0
        %3357 = vmatpush1.msra.mxu0 0.0
        %3358 = vmatprep.subr.mxu0 0.0
        %3359 = vmatpush1.msra.mxu0 0.0
        %3360 = vmatprep.subr.mxu0 0.0
        %3361 = vmatpush1.msra.mxu0 0.0
        %3362 = vmatprep.subr.mxu0 0.0
        %3363 = vmatpush1.msra.mxu0 0.0
        %3364 = vmatprep.subr.mxu0 0.0
        %3365 = vmatpush1.msra.mxu0 0.0
        %3366 = vmatprep.subr.mxu0 0.0
        %3367 = vmatpush1.msra.mxu0 0.0
        %3368 = vmatprep.subr.mxu0 0.0
        %3369 = vmatpush1.msra.mxu0 0.0
        %3370 = vmatprep.subr.mxu0 0.0
        %3371 = vmatpush1.msra.mxu0 0.0
        %3372 = vmatprep.subr.mxu0 0.0
        %3373 = vmatpush1.msra.mxu0 0.0
        %3374 = vmatprep.subr.mxu0 0.0
        %3375 = vmatpush1.msra.mxu0 0.0
        %3376 = vmatprep.subr.mxu0 0.0
        %3377 = vmatpush1.msra.mxu0 0.0
        %3378 = vmatprep.subr.mxu0 0.0
        %3379 = vmatpush1.msra.mxu0 0.0
        %3380 = vmatprep.mubr.f32.mxu0 0.0
        %3381 = vmatmul.mubr.f32.gmra.mrb[0].mxu0 %v3069
        %v3382 = vpop.f32.mrb[0].mxu0
        %v3383 = vadd.f32 0.0, %v3382
        %v3384 = vpop.f32.mrb[0].mxu0
        %v3385 = vadd.f32 0.0, %v3384
        %3386 = vdwg.mxu0
        %3387 = vmatprep.subr.mxu0 %v483
        %3388 = vmatpush1.msra.mxu0 %v482
        %3389 = vmatprep.subr.mxu0 %v487
        %3390 = vmatpush1.msra.mxu0 %v486
        %3391 = vmatprep.subr.mxu0 %v491
        %3392 = vmatpush1.msra.mxu0 %v490
        %3393 = vmatprep.subr.mxu0 %v495
        %3394 = vmatpush1.msra.mxu0 %v494
        %3395 = vmatprep.subr.mxu0 %v499
        %3396 = vmatpush1.msra.mxu0 %v498
        %3397 = vmatprep.subr.mxu0 %v503
        %3398 = vmatpush1.msra.mxu0 %v502
        %3399 = vmatprep.subr.mxu0 %v507
        %3400 = vmatpush1.msra.mxu0 %v506
        %3401 = vmatprep.subr.mxu0 %v511
        %3402 = vmatpush1.msra.mxu0 %v510
        %3403 = vmatprep.subr.mxu0 %v515
        %3404 = vmatpush1.msra.mxu0 %v514
        %3405 = vmatprep.subr.mxu0 %v519
        %3406 = vmatpush1.msra.mxu0 %v518
        %3407 = vmatprep.subr.mxu0 %v523
        %3408 = vmatpush1.msra.mxu0 %v522
        %3409 = vmatprep.subr.mxu0 %v527
        %3410 = vmatpush1.msra.mxu0 %v526
        %3411 = vmatprep.subr.mxu0 %v531
        %3412 = vmatpush1.msra.mxu0 %v530
        %3413 = vmatprep.subr.mxu0 %v535
        %3414 = vmatpush1.msra.mxu0 %v534
        %3415 = vmatprep.subr.mxu0 %v539
        %3416 = vmatpush1.msra.mxu0 %v538
        %3417 = vmatprep.subr.mxu0 %v543
        %3418 = vmatpush1.msra.mxu0 %v542
        %3419 = vmatprep.subr.mxu0 0.0
        %3420 = vmatpush1.msra.mxu0 0.0
        %3421 = vmatprep.subr.mxu0 0.0
        %3422 = vmatpush1.msra.mxu0 0.0
        %3423 = vmatprep.subr.mxu0 0.0
        %3424 = vmatpush1.msra.mxu0 0.0
        %3425 = vmatprep.subr.mxu0 0.0
        %3426 = vmatpush1.msra.mxu0 0.0
        %3427 = vmatprep.subr.mxu0 0.0
        %3428 = vmatpush1.msra.mxu0 0.0
        %3429 = vmatprep.subr.mxu0 0.0
        %3430 = vmatpush1.msra.mxu0 0.0
        %3431 = vmatprep.subr.mxu0 0.0
        %3432 = vmatpush1.msra.mxu0 0.0
        %3433 = vmatprep.subr.mxu0 0.0
        %3434 = vmatpush1.msra.mxu0 0.0
        %3435 = vmatprep.subr.mxu0 0.0
        %3436 = vmatpush1.msra.mxu0 0.0
        %3437 = vmatprep.subr.mxu0 0.0
        %3438 = vmatpush1.msra.mxu0 0.0
        %3439 = vmatprep.subr.mxu0 0.0
        %3440 = vmatpush1.msra.mxu0 0.0
        %3441 = vmatprep.subr.mxu0 0.0
        %3442 = vmatpush1.msra.mxu0 0.0
        %3443 = vmatprep.subr.mxu0 0.0
        %3444 = vmatpush1.msra.mxu0 0.0
        %3445 = vmatprep.subr.mxu0 0.0
        %3446 = vmatpush1.msra.mxu0 0.0
        %3447 = vmatprep.subr.mxu0 0.0
        %3448 = vmatpush1.msra.mxu0 0.0
        %3449 = vmatprep.subr.mxu0 0.0
        %3450 = vmatpush1.msra.mxu0 0.0
        %3451 = vmatprep.mubr.f32.mxu0 0.0
        %3452 = vmatmul.mubr.f32.gmra.mrb[0].mxu0 %v3244
        %v3453 = vpop.f32.mrb[0].mxu0
        %v3454 = vadd.f32 %v3312, %v3453
        %v3455 = vpop.f32.mrb[0].mxu0
        %v3456 = vadd.f32 %v3314, %v3455
        %3457 = vdwg.mxu0
        %3458 = vmatprep.subr.mxu0 %v485
        %3459 = vmatpush1.msra.mxu0 %v484
        %3460 = vmatprep.subr.mxu0 %v489
        %3461 = vmatpush1.msra.mxu0 %v488
        %3462 = vmatprep.subr.mxu0 %v493
        %3463 = vmatpush1.msra.mxu0 %v492
        %3464 = vmatprep.subr.mxu0 %v497
        %3465 = vmatpush1.msra.mxu0 %v496
        %3466 = vmatprep.subr.mxu0 %v501
        %3467 = vmatpush1.msra.mxu0 %v500
        %3468 = vmatprep.subr.mxu0 %v505
        %3469 = vmatpush1.msra.mxu0 %v504
        %3470 = vmatprep.subr.mxu0 %v509
        %3471 = vmatpush1.msra.mxu0 %v508
        %3472 = vmatprep.subr.mxu0 %v513
        %3473 = vmatpush1.msra.mxu0 %v512
        %3474 = vmatprep.subr.mxu0 %v517
        %3475 = vmatpush1.msra.mxu0 %v516
        %3476 = vmatprep.subr.mxu0 %v521
        %3477 = vmatpush1.msra.mxu0 %v520
        %3478 = vmatprep.subr.mxu0 %v525
        %3479 = vmatpush1.msra.mxu0 %v524
        %3480 = vmatprep.subr.mxu0 %v529
        %3481 = vmatpush1.msra.mxu0 %v528
        %3482 = vmatprep.subr.mxu0 %v533
        %3483 = vmatpush1.msra.mxu0 %v532
        %3484 = vmatprep.subr.mxu0 %v537
        %3485 = vmatpush1.msra.mxu0 %v536
        %3486 = vmatprep.subr.mxu0 %v541
        %3487 = vmatpush1.msra.mxu0 %v540
        %3488 = vmatprep.subr.mxu0 %v545
        %3489 = vmatpush1.msra.mxu0 %v544
        %3490 = vmatprep.subr.mxu0 0.0
        %3491 = vmatpush1.msra.mxu0 0.0
        %3492 = vmatprep.subr.mxu0 0.0
        %3493 = vmatpush1.msra.mxu0 0.0
        %3494 = vmatprep.subr.mxu0 0.0
        %3495 = vmatpush1.msra.mxu0 0.0
        %3496 = vmatprep.subr.mxu0 0.0
        %3497 = vmatpush1.msra.mxu0 0.0
        %3498 = vmatprep.subr.mxu0 0.0
        %3499 = vmatpush1.msra.mxu0 0.0
        %3500 = vmatprep.subr.mxu0 0.0
        %3501 = vmatpush1.msra.mxu0 0.0
        %3502 = vmatprep.subr.mxu0 0.0
        %3503 = vmatpush1.msra.mxu0 0.0
        %3504 = vmatprep.subr.mxu0 0.0
        %3505 = vmatpush1.msra.mxu0 0.0
        %3506 = vmatprep.subr.mxu0 0.0
        %3507 = vmatpush1.msra.mxu0 0.0
        %3508 = vmatprep.subr.mxu0 0.0
        %3509 = vmatpush1.msra.mxu0 0.0
        %3510 = vmatprep.subr.mxu0 0.0
        %3511 = vmatpush1.msra.mxu0 0.0
        %3512 = vmatprep.subr.mxu0 0.0
        %3513 = vmatpush1.msra.mxu0 0.0
        %3514 = vmatprep.subr.mxu0 0.0
        %3515 = vmatpush1.msra.mxu0 0.0
        %3516 = vmatprep.subr.mxu0 0.0
        %3517 = vmatpush1.msra.mxu0 0.0
        %3518 = vmatprep.subr.mxu0 0.0
        %3519 = vmatpush1.msra.mxu0 0.0
        %3520 = vmatprep.subr.mxu0 0.0
        %3521 = vmatpush1.msra.mxu0 0.0
        %3522 = vmatprep.mubr.f32.mxu0 0.0
        %3523 = vmatmul.mubr.f32.gmra.mrb[0].mxu0 %v3244
        %v3524 = vpop.f32.mrb[0].mxu0
        %v3525 = vadd.f32 %v3383, %v3524
        %v3526 = vpop.f32.mrb[0].mxu0
        %v3527 = vadd.f32 %v3385, %v3526
        %3528 = vdwg.mxu0
        %v3529 = vadd.f32 %v3454, %v1077
        %v3530 = vadd.f32 %v3456, %v1081
        %v3531 = vadd.f32 %v3525, %v1085
        %v3532 = vadd.f32 %v3527, %v1089
        %v3533 = vxor.u32 %v3529, 2147483648
        %v3534 = vxor.u32 %v3530, 2147483648
        %v3535 = vxor.u32 %v3531, 2147483648
        %v3536 = vmul.f32 %v3533, 1.442695
        %v3537 = vpow.pop %v3536
        %v3538 = vmul.f32 %v3534, 1.442695
        %v3539 = vpow.pop %v3538
        %v3540 = vmul.f32 %v3535, 1.442695
        %v3541 = vpow.pop %v3540
        %v3542 = vadd.f32 %v3537, 1.0
        %v3543 = vadd.f32 %v3539, 1.0
        %v3544 = vadd.f32 %v3541, 1.0
        %v3545 = vrcp.pop %v3542
        %v3546 = vmul.f32 1.0, %v3545
        %v3547 = vrcp.pop %v3543
        %v3548 = vmul.f32 1.0, %v3547
        %v3549 = vrcp.pop %v3544
        %v3550 = vmul.f32 1.0, %v3549
        %v3551 = vtanh.pop %v3532
        %v3552 = vmul.f32 %v3548, %v3067
        %v3553 = vmul.f32 %v3546, %v3551
        %v3554 = vadd.f32 %v3552, %v3553
        %v3555 = vtanh.pop %v3554
        %v3556 = vmul.f32 %v3550, %v3555
        %s3557 = scalar_lea.vmem %s359, 192 [#allocation7]
        %v3558 = vld [vmem:[%s3557] sm:$0xff]
        %v3559 = vld [vmem:[%s3557 + $0x8] sm:$0xff]
        %v3560 = vld [vmem:[%s3557 + $0x10] sm:$0xff]
        %v3561 = vld [vmem:[%s3557 + $0x18] sm:$0xff]
        %3562 = vmatprep.subr.mxu0 %v419
        %3563 = vmatpush1.msra.mxu0 %v418
        %3564 = vmatprep.subr.mxu0 %v423
        %3565 = vmatpush1.msra.mxu0 %v422
        %3566 = vmatprep.subr.mxu0 %v427
        %3567 = vmatpush1.msra.mxu0 %v426
        %3568 = vmatprep.subr.mxu0 %v431
        %3569 = vmatpush1.msra.mxu0 %v430
        %3570 = vmatprep.subr.mxu0 %v435
        %3571 = vmatpush1.msra.mxu0 %v434
        %3572 = vmatprep.subr.mxu0 %v439
        %3573 = vmatpush1.msra.mxu0 %v438
        %3574 = vmatprep.subr.mxu0 %v443
        %3575 = vmatpush1.msra.mxu0 %v442
        %3576 = vmatprep.subr.mxu0 %v447
        %3577 = vmatpush1.msra.mxu0 %v446
        %3578 = vmatprep.subr.mxu0 %v451
        %3579 = vmatpush1.msra.mxu0 %v450
        %3580 = vmatprep.subr.mxu0 %v455
        %3581 = vmatpush1.msra.mxu0 %v454
        %3582 = vmatprep.subr.mxu0 %v459
        %3583 = vmatpush1.msra.mxu0 %v458
        %3584 = vmatprep.subr.mxu0 %v463
        %3585 = vmatpush1.msra.mxu0 %v462
        %3586 = vmatprep.subr.mxu0 %v467
        %3587 = vmatpush1.msra.mxu0 %v466
        %3588 = vmatprep.subr.mxu0 %v471
        %3589 = vmatpush1.msra.mxu0 %v470
        %3590 = vmatprep.subr.mxu0 %v475
        %3591 = vmatpush1.msra.mxu0 %v474
        %3592 = vmatprep.subr.mxu0 %v479
        %3593 = vmatpush1.msra.mxu0 %v478
        %3594 = vmatprep.subr.mxu0 0.0
        %3595 = vmatpush1.msra.mxu0 0.0
        %3596 = vmatprep.subr.mxu0 0.0
        %3597 = vmatpush1.msra.mxu0 0.0
        %3598 = vmatprep.subr.mxu0 0.0
        %3599 = vmatpush1.msra.mxu0 0.0
        %3600 = vmatprep.subr.mxu0 0.0
        %3601 = vmatpush1.msra.mxu0 0.0
        %3602 = vmatprep.subr.mxu0 0.0
        %3603 = vmatpush1.msra.mxu0 0.0
        %3604 = vmatprep.subr.mxu0 0.0
        %3605 = vmatpush1.msra.mxu0 0.0
        %3606 = vmatprep.subr.mxu0 0.0
        %3607 = vmatpush1.msra.mxu0 0.0
        %3608 = vmatprep.subr.mxu0 0.0
        %3609 = vmatpush1.msra.mxu0 0.0
        %3610 = vmatprep.subr.mxu0 0.0
        %3611 = vmatpush1.msra.mxu0 0.0
        %3612 = vmatprep.subr.mxu0 0.0
        %3613 = vmatpush1.msra.mxu0 0.0
        %3614 = vmatprep.subr.mxu0 0.0
        %3615 = vmatpush1.msra.mxu0 0.0
        %3616 = vmatprep.subr.mxu0 0.0
        %3617 = vmatpush1.msra.mxu0 0.0
        %3618 = vmatprep.subr.mxu0 0.0
        %3619 = vmatpush1.msra.mxu0 0.0
        %3620 = vmatprep.subr.mxu0 0.0
        %3621 = vmatpush1.msra.mxu0 0.0
        %3622 = vmatprep.subr.mxu0 0.0
        %3623 = vmatpush1.msra.mxu0 0.0
        %3624 = vmatprep.subr.mxu0 0.0
        %3625 = vmatpush1.msra.mxu0 0.0
        %3626 = vmatprep.mubr.f32.mxu0 0.0
        %3627 = vmatmul.mubr.f32.gmra.mrb[0].mxu0 %v3244
        %v3628 = vpop.f32.mrb[0].mxu0
        %v3629 = vadd.f32 0.0, %v3628
        %v3630 = vpop.f32.mrb[0].mxu0
        %v3631 = vadd.f32 0.0, %v3630
        %3632 = vdwg.mxu0
        %3633 = vmatprep.subr.mxu0 %v421
        %3634 = vmatpush1.msra.mxu0 %v420
        %3635 = vmatprep.subr.mxu0 %v425
        %3636 = vmatpush1.msra.mxu0 %v424
        %3637 = vmatprep.subr.mxu0 %v429
        %3638 = vmatpush1.msra.mxu0 %v428
        %3639 = vmatprep.subr.mxu0 %v433
        %3640 = vmatpush1.msra.mxu0 %v432
        %3641 = vmatprep.subr.mxu0 %v437
        %3642 = vmatpush1.msra.mxu0 %v436
        %3643 = vmatprep.subr.mxu0 %v441
        %3644 = vmatpush1.msra.mxu0 %v440
        %3645 = vmatprep.subr.mxu0 %v445
        %3646 = vmatpush1.msra.mxu0 %v444
        %3647 = vmatprep.subr.mxu0 %v449
        %3648 = vmatpush1.msra.mxu0 %v448
        %3649 = vmatprep.subr.mxu0 %v453
        %3650 = vmatpush1.msra.mxu0 %v452
        %3651 = vmatprep.subr.mxu0 %v457
        %3652 = vmatpush1.msra.mxu0 %v456
        %3653 = vmatprep.subr.mxu0 %v461
        %3654 = vmatpush1.msra.mxu0 %v460
        %3655 = vmatprep.subr.mxu0 %v465
        %3656 = vmatpush1.msra.mxu0 %v464
        %3657 = vmatprep.subr.mxu0 %v469
        %3658 = vmatpush1.msra.mxu0 %v468
        %3659 = vmatprep.subr.mxu0 %v473
        %3660 = vmatpush1.msra.mxu0 %v472
        %3661 = vmatprep.subr.mxu0 %v477
        %3662 = vmatpush1.msra.mxu0 %v476
        %3663 = vmatprep.subr.mxu0 %v481
        %3664 = vmatpush1.msra.mxu0 %v480
        %3665 = vmatprep.subr.mxu0 0.0
        %3666 = vmatpush1.msra.mxu0 0.0
        %3667 = vmatprep.subr.mxu0 0.0
        %3668 = vmatpush1.msra.mxu0 0.0
        %3669 = vmatprep.subr.mxu0 0.0
        %3670 = vmatpush1.msra.mxu0 0.0
        %3671 = vmatprep.subr.mxu0 0.0
        %3672 = vmatpush1.msra.mxu0 0.0
        %3673 = vmatprep.subr.mxu0 0.0
        %3674 = vmatpush1.msra.mxu0 0.0
        %3675 = vmatprep.subr.mxu0 0.0
        %3676 = vmatpush1.msra.mxu0 0.0
        %3677 = vmatprep.subr.mxu0 0.0
        %3678 = vmatpush1.msra.mxu0 0.0
        %3679 = vmatprep.subr.mxu0 0.0
        %3680 = vmatpush1.msra.mxu0 0.0
        %3681 = vmatprep.subr.mxu0 0.0
        %3682 = vmatpush1.msra.mxu0 0.0
        %3683 = vmatprep.subr.mxu0 0.0
        %3684 = vmatpush1.msra.mxu0 0.0
        %3685 = vmatprep.subr.mxu0 0.0
        %3686 = vmatpush1.msra.mxu0 0.0
        %3687 = vmatprep.subr.mxu0 0.0
        %3688 = vmatpush1.msra.mxu0 0.0
        %3689 = vmatprep.subr.mxu0 0.0
        %3690 = vmatpush1.msra.mxu0 0.0
        %3691 = vmatprep.subr.mxu0 0.0
        %3692 = vmatpush1.msra.mxu0 0.0
        %3693 = vmatprep.subr.mxu0 0.0
        %3694 = vmatpush1.msra.mxu0 0.0
        %3695 = vmatprep.subr.mxu0 0.0
        %3696 = vmatpush1.msra.mxu0 0.0
        %3697 = vmatprep.mubr.f32.mxu0 0.0
        %3698 = vmatmul.mubr.f32.gmra.mrb[0].mxu0 %v3244
        %v3699 = vpop.f32.mrb[0].mxu0
        %v3700 = vadd.f32 0.0, %v3699
        %v3701 = vpop.f32.mrb[0].mxu0
        %v3702 = vadd.f32 0.0, %v3701
        %3703 = vdwg.mxu0
        %v3704 = vadd.f32 %v3558, %v3629
        %v3705 = vadd.f32 %v3559, %v3631
        %v3706 = vadd.f32 %v3560, %v3700
        %v3707 = vadd.f32 %v3561, %v3702
        %v3708 = vxor.u32 %v3704, 2147483648
        %v3709 = vxor.u32 %v3705, 2147483648
        %v3710 = vxor.u32 %v3706, 2147483648
        %v3711 = vmul.f32 %v3708, 1.442695
        %v3712 = vpow.pop %v3711
        %v3713 = vmul.f32 %v3709, 1.442695
        %v3714 = vpow.pop %v3713
        %v3715 = vmul.f32 %v3710, 1.442695
        %v3716 = vpow.pop %v3715
        %v3717 = vadd.f32 %v3712, 1.0
        %v3718 = vadd.f32 %v3714, 1.0
        %v3719 = vadd.f32 %v3716, 1.0
        %v3720 = vrcp.pop %v3717
        %v3721 = vmul.f32 1.0, %v3720
        %v3722 = vrcp.pop %v3718
        %v3723 = vmul.f32 1.0, %v3722
        %v3724 = vrcp.pop %v3719
        %v3725 = vmul.f32 1.0, %v3724
        %v3726 = vtanh.pop %v3707
        %v3727 = vmul.f32 %v3723, %v3242
        %v3728 = vmul.f32 %v3721, %v3726
        %v3729 = vadd.f32 %v3727, %v3728
        %v3730 = vtanh.pop %v3729
        %v3731 = vmul.f32 %v3725, %v3730
        %3732 = vmatprep.subr.mxu0 %v547
        %3733 = vmatpush1.msra.mxu0 %v546
        %3734 = vmatprep.subr.mxu0 %v551
        %3735 = vmatpush1.msra.mxu0 %v550
        %3736 = vmatprep.subr.mxu0 %v555
        %3737 = vmatpush1.msra.mxu0 %v554
        %3738 = vmatprep.subr.mxu0 %v559
        %3739 = vmatpush1.msra.mxu0 %v558
        %3740 = vmatprep.subr.mxu0 %v563
        %3741 = vmatpush1.msra.mxu0 %v562
        %3742 = vmatprep.subr.mxu0 %v567
        %3743 = vmatpush1.msra.mxu0 %v566
        %3744 = vmatprep.subr.mxu0 %v571
        %3745 = vmatpush1.msra.mxu0 %v570
        %3746 = vmatprep.subr.mxu0 %v575
        %3747 = vmatpush1.msra.mxu0 %v574
        %3748 = vmatprep.subr.mxu0 %v579
        %3749 = vmatpush1.msra.mxu0 %v578
        %3750 = vmatprep.subr.mxu0 %v583
        %3751 = vmatpush1.msra.mxu0 %v582
        %3752 = vmatprep.subr.mxu0 %v587
        %3753 = vmatpush1.msra.mxu0 %v586
        %3754 = vmatprep.subr.mxu0 %v591
        %3755 = vmatpush1.msra.mxu0 %v590
        %3756 = vmatprep.subr.mxu0 %v595
        %3757 = vmatpush1.msra.mxu0 %v594
        %3758 = vmatprep.subr.mxu0 %v599
        %3759 = vmatpush1.msra.mxu0 %v598
        %3760 = vmatprep.subr.mxu0 %v603
        %3761 = vmatpush1.msra.mxu0 %v602
        %3762 = vmatprep.subr.mxu0 %v607
        %3763 = vmatpush1.msra.mxu0 %v606
        %3764 = vmatprep.subr.mxu0 0.0
        %3765 = vmatpush1.msra.mxu0 0.0
        %3766 = vmatprep.subr.mxu0 0.0
        %3767 = vmatpush1.msra.mxu0 0.0
        %3768 = vmatprep.subr.mxu0 0.0
        %3769 = vmatpush1.msra.mxu0 0.0
        %3770 = vmatprep.subr.mxu0 0.0
        %3771 = vmatpush1.msra.mxu0 0.0
        %3772 = vmatprep.subr.mxu0 0.0
        %3773 = vmatpush1.msra.mxu0 0.0
        %3774 = vmatprep.subr.mxu0 0.0
        %3775 = vmatpush1.msra.mxu0 0.0
        %3776 = vmatprep.subr.mxu0 0.0
        %3777 = vmatpush1.msra.mxu0 0.0
        %3778 = vmatprep.subr.mxu0 0.0
        %3779 = vmatpush1.msra.mxu0 0.0
        %3780 = vmatprep.subr.mxu0 0.0
        %3781 = vmatpush1.msra.mxu0 0.0
        %3782 = vmatprep.subr.mxu0 0.0
        %3783 = vmatpush1.msra.mxu0 0.0
        %3784 = vmatprep.subr.mxu0 0.0
        %3785 = vmatpush1.msra.mxu0 0.0
        %3786 = vmatprep.subr.mxu0 0.0
        %3787 = vmatpush1.msra.mxu0 0.0
        %3788 = vmatprep.subr.mxu0 0.0
        %3789 = vmatpush1.msra.mxu0 0.0
        %3790 = vmatprep.subr.mxu0 0.0
        %3791 = vmatpush1.msra.mxu0 0.0
        %3792 = vmatprep.subr.mxu0 0.0
        %3793 = vmatpush1.msra.mxu0 0.0
        %3794 = vmatprep.subr.mxu0 0.0
        %3795 = vmatpush1.msra.mxu0 0.0
        %3796 = vmatprep.mubr.f32.mxu0 0.0
        %3797 = vmatmul.mubr.f32.gmra.mrb[0].mxu0 %v3556
        %v3798 = vpop.f32.mrb[0].mxu0
        %v3799 = vadd.f32 0.0, %v3798
        %v3800 = vpop.f32.mrb[0].mxu0
        %v3801 = vadd.f32 0.0, %v3800
        %3802 = vdwg.mxu0
        %3803 = vmatprep.subr.mxu0 %v549
        %3804 = vmatpush1.msra.mxu0 %v548
        %3805 = vmatprep.subr.mxu0 %v553
        %3806 = vmatpush1.msra.mxu0 %v552
        %3807 = vmatprep.subr.mxu0 %v557
        %3808 = vmatpush1.msra.mxu0 %v556
        %3809 = vmatprep.subr.mxu0 %v561
        %3810 = vmatpush1.msra.mxu0 %v560
        %3811 = vmatprep.subr.mxu0 %v565
        %3812 = vmatpush1.msra.mxu0 %v564
        %3813 = vmatprep.subr.mxu0 %v569
        %3814 = vmatpush1.msra.mxu0 %v568
        %3815 = vmatprep.subr.mxu0 %v573
        %3816 = vmatpush1.msra.mxu0 %v572
        %3817 = vmatprep.subr.mxu0 %v577
        %3818 = vmatpush1.msra.mxu0 %v576
        %3819 = vmatprep.subr.mxu0 %v581
        %3820 = vmatpush1.msra.mxu0 %v580
        %3821 = vmatprep.subr.mxu0 %v585
        %3822 = vmatpush1.msra.mxu0 %v584
        %3823 = vmatprep.subr.mxu0 %v589
        %3824 = vmatpush1.msra.mxu0 %v588
        %3825 = vmatprep.subr.mxu0 %v593
        %3826 = vmatpush1.msra.mxu0 %v592
        %3827 = vmatprep.subr.mxu0 %v597
        %3828 = vmatpush1.msra.mxu0 %v596
        %3829 = vmatprep.subr.mxu0 %v601
        %3830 = vmatpush1.msra.mxu0 %v600
        %3831 = vmatprep.subr.mxu0 %v605
        %3832 = vmatpush1.msra.mxu0 %v604
        %3833 = vmatprep.subr.mxu0 %v609
        %3834 = vmatpush1.msra.mxu0 %v608
        %3835 = vmatprep.subr.mxu0 0.0
        %3836 = vmatpush1.msra.mxu0 0.0
        %3837 = vmatprep.subr.mxu0 0.0
        %3838 = vmatpush1.msra.mxu0 0.0
        %3839 = vmatprep.subr.mxu0 0.0
        %3840 = vmatpush1.msra.mxu0 0.0
        %3841 = vmatprep.subr.mxu0 0.0
        %3842 = vmatpush1.msra.mxu0 0.0
        %3843 = vmatprep.subr.mxu0 0.0
        %3844 = vmatpush1.msra.mxu0 0.0
        %3845 = vmatprep.subr.mxu0 0.0
        %3846 = vmatpush1.msra.mxu0 0.0
        %3847 = vmatprep.subr.mxu0 0.0
        %3848 = vmatpush1.msra.mxu0 0.0
        %3849 = vmatprep.subr.mxu0 0.0
        %3850 = vmatpush1.msra.mxu0 0.0
        %3851 = vmatprep.subr.mxu0 0.0
        %3852 = vmatpush1.msra.mxu0 0.0
        %3853 = vmatprep.subr.mxu0 0.0
        %3854 = vmatpush1.msra.mxu0 0.0
        %3855 = vmatprep.subr.mxu0 0.0
        %3856 = vmatpush1.msra.mxu0 0.0
        %3857 = vmatprep.subr.mxu0 0.0
        %3858 = vmatpush1.msra.mxu0 0.0
        %3859 = vmatprep.subr.mxu0 0.0
        %3860 = vmatpush1.msra.mxu0 0.0
        %3861 = vmatprep.subr.mxu0 0.0
        %3862 = vmatpush1.msra.mxu0 0.0
        %3863 = vmatprep.subr.mxu0 0.0
        %3864 = vmatpush1.msra.mxu0 0.0
        %3865 = vmatprep.subr.mxu0 0.0
        %3866 = vmatpush1.msra.mxu0 0.0
        %3867 = vmatprep.mubr.f32.mxu0 0.0
        %3868 = vmatmul.mubr.f32.gmra.mrb[0].mxu0 %v3556
        %v3869 = vpop.f32.mrb[0].mxu0
        %v3870 = vadd.f32 0.0, %v3869
        %v3871 = vpop.f32.mrb[0].mxu0
        %v3872 = vadd.f32 0.0, %v3871
        %3873 = vdwg.mxu0
        %3874 = vmatprep.subr.mxu0 %v483
        %3875 = vmatpush1.msra.mxu0 %v482
        %3876 = vmatprep.subr.mxu0 %v487
        %3877 = vmatpush1.msra.mxu0 %v486
        %3878 = vmatprep.subr.mxu0 %v491
        %3879 = vmatpush1.msra.mxu0 %v490
        %3880 = vmatprep.subr.mxu0 %v495
        %3881 = vmatpush1.msra.mxu0 %v494
        %3882 = vmatprep.subr.mxu0 %v499
        %3883 = vmatpush1.msra.mxu0 %v498
        %3884 = vmatprep.subr.mxu0 %v503
        %3885 = vmatpush1.msra.mxu0 %v502
        %3886 = vmatprep.subr.mxu0 %v507
        %3887 = vmatpush1.msra.mxu0 %v506
        %3888 = vmatprep.subr.mxu0 %v511
        %3889 = vmatpush1.msra.mxu0 %v510
        %3890 = vmatprep.subr.mxu0 %v515
        %3891 = vmatpush1.msra.mxu0 %v514
        %3892 = vmatprep.subr.mxu0 %v519
        %3893 = vmatpush1.msra.mxu0 %v518
        %3894 = vmatprep.subr.mxu0 %v523
        %3895 = vmatpush1.msra.mxu0 %v522
        %3896 = vmatprep.subr.mxu0 %v527
        %3897 = vmatpush1.msra.mxu0 %v526
        %3898 = vmatprep.subr.mxu0 %v531
        %3899 = vmatpush1.msra.mxu0 %v530
        %3900 = vmatprep.subr.mxu0 %v535
        %3901 = vmatpush1.msra.mxu0 %v534
        %3902 = vmatprep.subr.mxu0 %v539
        %3903 = vmatpush1.msra.mxu0 %v538
        %3904 = vmatprep.subr.mxu0 %v543
        %3905 = vmatpush1.msra.mxu0 %v542
        %3906 = vmatprep.subr.mxu0 0.0
        %3907 = vmatpush1.msra.mxu0 0.0
        %3908 = vmatprep.subr.mxu0 0.0
        %3909 = vmatpush1.msra.mxu0 0.0
        %3910 = vmatprep.subr.mxu0 0.0
        %3911 = vmatpush1.msra.mxu0 0.0
        %3912 = vmatprep.subr.mxu0 0.0
        %3913 = vmatpush1.msra.mxu0 0.0
        %3914 = vmatprep.subr.mxu0 0.0
        %3915 = vmatpush1.msra.mxu0 0.0
        %3916 = vmatprep.subr.mxu0 0.0
        %3917 = vmatpush1.msra.mxu0 0.0
        %3918 = vmatprep.subr.mxu0 0.0
        %3919 = vmatpush1.msra.mxu0 0.0
        %3920 = vmatprep.subr.mxu0 0.0
        %3921 = vmatpush1.msra.mxu0 0.0
        %3922 = vmatprep.subr.mxu0 0.0
        %3923 = vmatpush1.msra.mxu0 0.0
        %3924 = vmatprep.subr.mxu0 0.0
        %3925 = vmatpush1.msra.mxu0 0.0
        %3926 = vmatprep.subr.mxu0 0.0
        %3927 = vmatpush1.msra.mxu0 0.0
        %3928 = vmatprep.subr.mxu0 0.0
        %3929 = vmatpush1.msra.mxu0 0.0
        %3930 = vmatprep.subr.mxu0 0.0
        %3931 = vmatpush1.msra.mxu0 0.0
        %3932 = vmatprep.subr.mxu0 0.0
        %3933 = vmatpush1.msra.mxu0 0.0
        %3934 = vmatprep.subr.mxu0 0.0
        %3935 = vmatpush1.msra.mxu0 0.0
        %3936 = vmatprep.subr.mxu0 0.0
        %3937 = vmatpush1.msra.mxu0 0.0
        %3938 = vmatprep.mubr.f32.mxu0 0.0
        %3939 = vmatmul.mubr.f32.gmra.mrb[0].mxu0 %v3731
        %v3940 = vpop.f32.mrb[0].mxu0
        %v3941 = vadd.f32 %v3799, %v3940
        %v3942 = vpop.f32.mrb[0].mxu0
        %v3943 = vadd.f32 %v3801, %v3942
        %3944 = vdwg.mxu0
        %3945 = vmatprep.subr.mxu0 %v485
        %3946 = vmatpush1.msra.mxu0 %v484
        %3947 = vmatprep.subr.mxu0 %v489
        %3948 = vmatpush1.msra.mxu0 %v488
        %3949 = vmatprep.subr.mxu0 %v493
        %3950 = vmatpush1.msra.mxu0 %v492
        %3951 = vmatprep.subr.mxu0 %v497
        %3952 = vmatpush1.msra.mxu0 %v496
        %3953 = vmatprep.subr.mxu0 %v501
        %3954 = vmatpush1.msra.mxu0 %v500
        %3955 = vmatprep.subr.mxu0 %v505
        %3956 = vmatpush1.msra.mxu0 %v504
        %3957 = vmatprep.subr.mxu0 %v509
        %3958 = vmatpush1.msra.mxu0 %v508
        %3959 = vmatprep.subr.mxu0 %v513
        %3960 = vmatpush1.msra.mxu0 %v512
        %3961 = vmatprep.subr.mxu0 %v517
        %3962 = vmatpush1.msra.mxu0 %v516
        %3963 = vmatprep.subr.mxu0 %v521
        %3964 = vmatpush1.msra.mxu0 %v520
        %3965 = vmatprep.subr.mxu0 %v525
        %3966 = vmatpush1.msra.mxu0 %v524
        %3967 = vmatprep.subr.mxu0 %v529
        %3968 = vmatpush1.msra.mxu0 %v528
        %3969 = vmatprep.subr.mxu0 %v533
        %3970 = vmatpush1.msra.mxu0 %v532
        %3971 = vmatprep.subr.mxu0 %v537
        %3972 = vmatpush1.msra.mxu0 %v536
        %3973 = vmatprep.subr.mxu0 %v541
        %3974 = vmatpush1.msra.mxu0 %v540
        %3975 = vmatprep.subr.mxu0 %v545
        %3976 = vmatpush1.msra.mxu0 %v544
        %3977 = vmatprep.subr.mxu0 0.0
        %3978 = vmatpush1.msra.mxu0 0.0
        %3979 = vmatprep.subr.mxu0 0.0
        %3980 = vmatpush1.msra.mxu0 0.0
        %3981 = vmatprep.subr.mxu0 0.0
        %3982 = vmatpush1.msra.mxu0 0.0
        %3983 = vmatprep.subr.mxu0 0.0
        %3984 = vmatpush1.msra.mxu0 0.0
        %3985 = vmatprep.subr.mxu0 0.0
        %3986 = vmatpush1.msra.mxu0 0.0
        %3987 = vmatprep.subr.mxu0 0.0
        %3988 = vmatpush1.msra.mxu0 0.0
        %3989 = vmatprep.subr.mxu0 0.0
        %3990 = vmatpush1.msra.mxu0 0.0
        %3991 = vmatprep.subr.mxu0 0.0
        %3992 = vmatpush1.msra.mxu0 0.0
        %3993 = vmatprep.subr.mxu0 0.0
        %3994 = vmatpush1.msra.mxu0 0.0
        %3995 = vmatprep.subr.mxu0 0.0
        %3996 = vmatpush1.msra.mxu0 0.0
        %3997 = vmatprep.subr.mxu0 0.0
        %3998 = vmatpush1.msra.mxu0 0.0
        %3999 = vmatprep.subr.mxu0 0.0
        %4000 = vmatpush1.msra.mxu0 0.0
        %4001 = vmatprep.subr.mxu0 0.0
        %4002 = vmatpush1.msra.mxu0 0.0
        %4003 = vmatprep.subr.mxu0 0.0
        %4004 = vmatpush1.msra.mxu0 0.0
        %4005 = vmatprep.subr.mxu0 0.0
        %4006 = vmatpush1.msra.mxu0 0.0
        %4007 = vmatprep.subr.mxu0 0.0
        %4008 = vmatpush1.msra.mxu0 0.0
        %4009 = vmatprep.mubr.f32.mxu0 0.0
        %4010 = vmatmul.mubr.f32.gmra.mrb[0].mxu0 %v3731
        %v4011 = vpop.f32.mrb[0].mxu0
        %v4012 = vadd.f32 %v3870, %v4011
        %v4013 = vpop.f32.mrb[0].mxu0
        %v4014 = vadd.f32 %v3872, %v4013
        %4015 = vdwg.mxu0
        %v4016 = vadd.f32 %v3941, %v1077
        %v4017 = vadd.f32 %v3943, %v1081
        %v4018 = vadd.f32 %v4012, %v1085
        %v4019 = vadd.f32 %v4014, %v1089
        %v4020 = vxor.u32 %v4016, 2147483648
        %v4021 = vxor.u32 %v4017, 2147483648
        %v4022 = vxor.u32 %v4018, 2147483648
        %v4023 = vmul.f32 %v4020, 1.442695
        %v4024 = vpow.pop %v4023
        %v4025 = vmul.f32 %v4021, 1.442695
        %v4026 = vpow.pop %v4025
        %v4027 = vmul.f32 %v4022, 1.442695
        %v4028 = vpow.pop %v4027
        %v4029 = vadd.f32 %v4024, 1.0
        %v4030 = vadd.f32 %v4026, 1.0
        %v4031 = vadd.f32 %v4028, 1.0
        %v4032 = vrcp.pop %v4029
        %v4033 = vmul.f32 1.0, %v4032
        %v4034 = vrcp.pop %v4030
        %v4035 = vmul.f32 1.0, %v4034
        %v4036 = vrcp.pop %v4031
        %v4037 = vmul.f32 1.0, %v4036
        %v4038 = vtanh.pop %v4019
        %v4039 = vmul.f32 %v4035, %v3554
        %v4040 = vmul.f32 %v4033, %v4038
        %v4041 = vadd.f32 %v4039, %v4040
        %v4042 = vtanh.pop %v4041
        %v4043 = vmul.f32 %v4037, %v4042
        %s4044 = scalar_lea.vmem %s359, 224 [#allocation7]
        %v4045 = vld [vmem:[%s4044] sm:$0xff]
        %v4046 = vld [vmem:[%s4044 + $0x8] sm:$0xff]
        %v4047 = vld [vmem:[%s4044 + $0x10] sm:$0xff]
        %v4048 = vld [vmem:[%s4044 + $0x18] sm:$0xff]
        %4049 = vmatprep.subr.mxu0 %v419
        %4050 = vmatpush1.msra.mxu0 %v418
        %4051 = vmatprep.subr.mxu0 %v423
        %4052 = vmatpush1.msra.mxu0 %v422
        %4053 = vmatprep.subr.mxu0 %v427
        %4054 = vmatpush1.msra.mxu0 %v426
        %4055 = vmatprep.subr.mxu0 %v431
        %4056 = vmatpush1.msra.mxu0 %v430
        %4057 = vmatprep.subr.mxu0 %v435
        %4058 = vmatpush1.msra.mxu0 %v434
        %4059 = vmatprep.subr.mxu0 %v439
        %4060 = vmatpush1.msra.mxu0 %v438
        %4061 = vmatprep.subr.mxu0 %v443
        %4062 = vmatpush1.msra.mxu0 %v442
        %4063 = vmatprep.subr.mxu0 %v447
        %4064 = vmatpush1.msra.mxu0 %v446
        %4065 = vmatprep.subr.mxu0 %v451
        %4066 = vmatpush1.msra.mxu0 %v450
        %4067 = vmatprep.subr.mxu0 %v455
        %4068 = vmatpush1.msra.mxu0 %v454
        %4069 = vmatprep.subr.mxu0 %v459
        %4070 = vmatpush1.msra.mxu0 %v458
        %4071 = vmatprep.subr.mxu0 %v463
        %4072 = vmatpush1.msra.mxu0 %v462
        %4073 = vmatprep.subr.mxu0 %v467
        %4074 = vmatpush1.msra.mxu0 %v466
        %4075 = vmatprep.subr.mxu0 %v471
        %4076 = vmatpush1.msra.mxu0 %v470
        %4077 = vmatprep.subr.mxu0 %v475
        %4078 = vmatpush1.msra.mxu0 %v474
        %4079 = vmatprep.subr.mxu0 %v479
        %4080 = vmatpush1.msra.mxu0 %v478
        %4081 = vmatprep.subr.mxu0 0.0
        %4082 = vmatpush1.msra.mxu0 0.0
        %4083 = vmatprep.subr.mxu0 0.0
        %4084 = vmatpush1.msra.mxu0 0.0
        %4085 = vmatprep.subr.mxu0 0.0
        %4086 = vmatpush1.msra.mxu0 0.0
        %4087 = vmatprep.subr.mxu0 0.0
        %4088 = vmatpush1.msra.mxu0 0.0
        %4089 = vmatprep.subr.mxu0 0.0
        %4090 = vmatpush1.msra.mxu0 0.0
        %4091 = vmatprep.subr.mxu0 0.0
        %4092 = vmatpush1.msra.mxu0 0.0
        %4093 = vmatprep.subr.mxu0 0.0
        %4094 = vmatpush1.msra.mxu0 0.0
        %4095 = vmatprep.subr.mxu0 0.0
        %4096 = vmatpush1.msra.mxu0 0.0
        %4097 = vmatprep.subr.mxu0 0.0
        %4098 = vmatpush1.msra.mxu0 0.0
        %4099 = vmatprep.subr.mxu0 0.0
        %4100 = vmatpush1.msra.mxu0 0.0
        %4101 = vmatprep.subr.mxu0 0.0
        %4102 = vmatpush1.msra.mxu0 0.0
        %4103 = vmatprep.subr.mxu0 0.0
        %4104 = vmatpush1.msra.mxu0 0.0
        %4105 = vmatprep.subr.mxu0 0.0
        %4106 = vmatpush1.msra.mxu0 0.0
        %4107 = vmatprep.subr.mxu0 0.0
        %4108 = vmatpush1.msra.mxu0 0.0
        %4109 = vmatprep.subr.mxu0 0.0
        %4110 = vmatpush1.msra.mxu0 0.0
        %4111 = vmatprep.subr.mxu0 0.0
        %4112 = vmatpush1.msra.mxu0 0.0
        %4113 = vmatprep.mubr.f32.mxu0 0.0
        %4114 = vmatmul.mubr.f32.gmra.mrb[0].mxu0 %v3731
        %v4115 = vpop.f32.mrb[0].mxu0
        %v4116 = vadd.f32 0.0, %v4115
        %v4117 = vpop.f32.mrb[0].mxu0
        %v4118 = vadd.f32 0.0, %v4117
        %4119 = vdwg.mxu0
        %4120 = vmatprep.subr.mxu0 %v421
        %4121 = vmatpush1.msra.mxu0 %v420
        %4122 = vmatprep.subr.mxu0 %v425
        %4123 = vmatpush1.msra.mxu0 %v424
        %4124 = vmatprep.subr.mxu0 %v429
        %4125 = vmatpush1.msra.mxu0 %v428
        %4126 = vmatprep.subr.mxu0 %v433
        %4127 = vmatpush1.msra.mxu0 %v432
        %4128 = vmatprep.subr.mxu0 %v437
        %4129 = vmatpush1.msra.mxu0 %v436
        %4130 = vmatprep.subr.mxu0 %v441
        %4131 = vmatpush1.msra.mxu0 %v440
        %4132 = vmatprep.subr.mxu0 %v445
        %4133 = vmatpush1.msra.mxu0 %v444
        %4134 = vmatprep.subr.mxu0 %v449
        %4135 = vmatpush1.msra.mxu0 %v448
        %4136 = vmatprep.subr.mxu0 %v453
        %4137 = vmatpush1.msra.mxu0 %v452
        %4138 = vmatprep.subr.mxu0 %v457
        %4139 = vmatpush1.msra.mxu0 %v456
        %4140 = vmatprep.subr.mxu0 %v461
        %4141 = vmatpush1.msra.mxu0 %v460
        %4142 = vmatprep.subr.mxu0 %v465
        %4143 = vmatpush1.msra.mxu0 %v464
        %4144 = vmatprep.subr.mxu0 %v469
        %4145 = vmatpush1.msra.mxu0 %v468
        %4146 = vmatprep.subr.mxu0 %v473
        %4147 = vmatpush1.msra.mxu0 %v472
        %4148 = vmatprep.subr.mxu0 %v477
        %4149 = vmatpush1.msra.mxu0 %v476
        %4150 = vmatprep.subr.mxu0 %v481
        %4151 = vmatpush1.msra.mxu0 %v480
        %4152 = vmatprep.subr.mxu0 0.0
        %4153 = vmatpush1.msra.mxu0 0.0
        %4154 = vmatprep.subr.mxu0 0.0
        %4155 = vmatpush1.msra.mxu0 0.0
        %4156 = vmatprep.subr.mxu0 0.0
        %4157 = vmatpush1.msra.mxu0 0.0
        %4158 = vmatprep.subr.mxu0 0.0
        %4159 = vmatpush1.msra.mxu0 0.0
        %4160 = vmatprep.subr.mxu0 0.0
        %4161 = vmatpush1.msra.mxu0 0.0
        %4162 = vmatprep.subr.mxu0 0.0
        %4163 = vmatpush1.msra.mxu0 0.0
        %4164 = vmatprep.subr.mxu0 0.0
        %4165 = vmatpush1.msra.mxu0 0.0
        %4166 = vmatprep.subr.mxu0 0.0
        %4167 = vmatpush1.msra.mxu0 0.0
        %4168 = vmatprep.subr.mxu0 0.0
        %4169 = vmatpush1.msra.mxu0 0.0
        %4170 = vmatprep.subr.mxu0 0.0
        %4171 = vmatpush1.msra.mxu0 0.0
        %4172 = vmatprep.subr.mxu0 0.0
        %4173 = vmatpush1.msra.mxu0 0.0
        %4174 = vmatprep.subr.mxu0 0.0
        %4175 = vmatpush1.msra.mxu0 0.0
        %4176 = vmatprep.subr.mxu0 0.0
        %4177 = vmatpush1.msra.mxu0 0.0
        %4178 = vmatprep.subr.mxu0 0.0
        %4179 = vmatpush1.msra.mxu0 0.0
        %4180 = vmatprep.subr.mxu0 0.0
        %4181 = vmatpush1.msra.mxu0 0.0
        %4182 = vmatprep.subr.mxu0 0.0
        %4183 = vmatpush1.msra.mxu0 0.0
        %4184 = vmatprep.mubr.f32.mxu0 0.0
        %4185 = vmatmul.mubr.f32.gmra.mrb[0].mxu0 %v3731
        %v4186 = vpop.f32.mrb[0].mxu0
        %v4187 = vadd.f32 0.0, %v4186
        %v4188 = vpop.f32.mrb[0].mxu0
        %v4189 = vadd.f32 0.0, %v4188
        %4190 = vdwg.mxu0
        %v4191 = vadd.f32 %v4045, %v4116
        %v4192 = vadd.f32 %v4046, %v4118
        %v4193 = vadd.f32 %v4047, %v4187
        %v4194 = vadd.f32 %v4048, %v4189
        %v4195 = vxor.u32 %v4191, 2147483648
        %v4196 = vxor.u32 %v4192, 2147483648
        %v4197 = vxor.u32 %v4193, 2147483648
        %v4198 = vmul.f32 %v4195, 1.442695
        %v4199 = vpow.pop %v4198
        %v4200 = vmul.f32 %v4196, 1.442695
        %v4201 = vpow.pop %v4200
        %v4202 = vmul.f32 %v4197, 1.442695
        %v4203 = vpow.pop %v4202
        %v4204 = vadd.f32 %v4199, 1.0
        %v4205 = vadd.f32 %v4201, 1.0
        %v4206 = vadd.f32 %v4203, 1.0
        %v4207 = vrcp.pop %v4204
        %v4208 = vmul.f32 1.0, %v4207
        %v4209 = vrcp.pop %v4205
        %v4210 = vmul.f32 1.0, %v4209
        %v4211 = vrcp.pop %v4206
        %v4212 = vmul.f32 1.0, %v4211
        %v4213 = vtanh.pop %v4194
        %v4214 = vmul.f32 %v4210, %v3729
        %v4215 = vmul.f32 %v4208, %v4213
        %v4216 = vadd.f32 %v4214, %v4215
        %v4217 = vtanh.pop %v4216
        %v4218 = vmul.f32 %v4212, %v4217
        %4219 = vmatprep.subr.mxu0 %v547
        %4220 = vmatpush1.msra.mxu0 %v546
        %4221 = vmatprep.subr.mxu0 %v551
        %4222 = vmatpush1.msra.mxu0 %v550
        %4223 = vmatprep.subr.mxu0 %v555
        %4224 = vmatpush1.msra.mxu0 %v554
        %4225 = vmatprep.subr.mxu0 %v559
        %4226 = vmatpush1.msra.mxu0 %v558
        %4227 = vmatprep.subr.mxu0 %v563
        %4228 = vmatpush1.msra.mxu0 %v562
        %4229 = vmatprep.subr.mxu0 %v567
        %4230 = vmatpush1.msra.mxu0 %v566
        %4231 = vmatprep.subr.mxu0 %v571
        %4232 = vmatpush1.msra.mxu0 %v570
        %4233 = vmatprep.subr.mxu0 %v575
        %4234 = vmatpush1.msra.mxu0 %v574
        %4235 = vmatprep.subr.mxu0 %v579
        %4236 = vmatpush1.msra.mxu0 %v578
        %4237 = vmatprep.subr.mxu0 %v583
        %4238 = vmatpush1.msra.mxu0 %v582
        %4239 = vmatprep.subr.mxu0 %v587
        %4240 = vmatpush1.msra.mxu0 %v586
        %4241 = vmatprep.subr.mxu0 %v591
        %4242 = vmatpush1.msra.mxu0 %v590
        %4243 = vmatprep.subr.mxu0 %v595
        %4244 = vmatpush1.msra.mxu0 %v594
        %4245 = vmatprep.subr.mxu0 %v599
        %4246 = vmatpush1.msra.mxu0 %v598
        %4247 = vmatprep.subr.mxu0 %v603
        %4248 = vmatpush1.msra.mxu0 %v602
        %4249 = vmatprep.subr.mxu0 %v607
        %4250 = vmatpush1.msra.mxu0 %v606
        %4251 = vmatprep.subr.mxu0 0.0
        %4252 = vmatpush1.msra.mxu0 0.0
        %4253 = vmatprep.subr.mxu0 0.0
        %4254 = vmatpush1.msra.mxu0 0.0
        %4255 = vmatprep.subr.mxu0 0.0
        %4256 = vmatpush1.msra.mxu0 0.0
        %4257 = vmatprep.subr.mxu0 0.0
        %4258 = vmatpush1.msra.mxu0 0.0
        %4259 = vmatprep.subr.mxu0 0.0
        %4260 = vmatpush1.msra.mxu0 0.0
        %4261 = vmatprep.subr.mxu0 0.0
        %4262 = vmatpush1.msra.mxu0 0.0
        %4263 = vmatprep.subr.mxu0 0.0
        %4264 = vmatpush1.msra.mxu0 0.0
        %4265 = vmatprep.subr.mxu0 0.0
        %4266 = vmatpush1.msra.mxu0 0.0
        %4267 = vmatprep.subr.mxu0 0.0
        %4268 = vmatpush1.msra.mxu0 0.0
        %4269 = vmatprep.subr.mxu0 0.0
        %4270 = vmatpush1.msra.mxu0 0.0
        %4271 = vmatprep.subr.mxu0 0.0
        %4272 = vmatpush1.msra.mxu0 0.0
        %4273 = vmatprep.subr.mxu0 0.0
        %4274 = vmatpush1.msra.mxu0 0.0
        %4275 = vmatprep.subr.mxu0 0.0
        %4276 = vmatpush1.msra.mxu0 0.0
        %4277 = vmatprep.subr.mxu0 0.0
        %4278 = vmatpush1.msra.mxu0 0.0
        %4279 = vmatprep.subr.mxu0 0.0
        %4280 = vmatpush1.msra.mxu0 0.0
        %4281 = vmatprep.subr.mxu0 0.0
        %4282 = vmatpush1.msra.mxu0 0.0
        %4283 = vmatprep.mubr.f32.mxu0 0.0
        %4284 = vmatmul.mubr.f32.gmra.mrb[0].mxu0 %v4043
        %v4285 = vpop.f32.mrb[0].mxu0
        %v4286 = vadd.f32 0.0, %v4285
        %v4287 = vpop.f32.mrb[0].mxu0
        %v4288 = vadd.f32 0.0, %v4287
        %4289 = vdwg.mxu0
        %4290 = vmatprep.subr.mxu0 %v549
        %4291 = vmatpush1.msra.mxu0 %v548
        %4292 = vmatprep.subr.mxu0 %v553
        %4293 = vmatpush1.msra.mxu0 %v552
        %4294 = vmatprep.subr.mxu0 %v557
        %4295 = vmatpush1.msra.mxu0 %v556
        %4296 = vmatprep.subr.mxu0 %v561
        %4297 = vmatpush1.msra.mxu0 %v560
        %4298 = vmatprep.subr.mxu0 %v565
        %4299 = vmatpush1.msra.mxu0 %v564
        %4300 = vmatprep.subr.mxu0 %v569
        %4301 = vmatpush1.msra.mxu0 %v568
        %4302 = vmatprep.subr.mxu0 %v573
        %4303 = vmatpush1.msra.mxu0 %v572
        %4304 = vmatprep.subr.mxu0 %v577
        %4305 = vmatpush1.msra.mxu0 %v576
        %4306 = vmatprep.subr.mxu0 %v581
        %4307 = vmatpush1.msra.mxu0 %v580
        %4308 = vmatprep.subr.mxu0 %v585
        %4309 = vmatpush1.msra.mxu0 %v584
        %4310 = vmatprep.subr.mxu0 %v589
        %4311 = vmatpush1.msra.mxu0 %v588
        %4312 = vmatprep.subr.mxu0 %v593
        %4313 = vmatpush1.msra.mxu0 %v592
        %4314 = vmatprep.subr.mxu0 %v597
        %4315 = vmatpush1.msra.mxu0 %v596
        %4316 = vmatprep.subr.mxu0 %v601
        %4317 = vmatpush1.msra.mxu0 %v600
        %4318 = vmatprep.subr.mxu0 %v605
        %4319 = vmatpush1.msra.mxu0 %v604
        %4320 = vmatprep.subr.mxu0 %v609
        %4321 = vmatpush1.msra.mxu0 %v608
        %4322 = vmatprep.subr.mxu0 0.0
        %4323 = vmatpush1.msra.mxu0 0.0
        %4324 = vmatprep.subr.mxu0 0.0
        %4325 = vmatpush1.msra.mxu0 0.0
        %4326 = vmatprep.subr.mxu0 0.0
        %4327 = vmatpush1.msra.mxu0 0.0
        %4328 = vmatprep.subr.mxu0 0.0
        %4329 = vmatpush1.msra.mxu0 0.0
        %4330 = vmatprep.subr.mxu0 0.0
        %4331 = vmatpush1.msra.mxu0 0.0
        %4332 = vmatprep.subr.mxu0 0.0
        %4333 = vmatpush1.msra.mxu0 0.0
        %4334 = vmatprep.subr.mxu0 0.0
        %4335 = vmatpush1.msra.mxu0 0.0
        %4336 = vmatprep.subr.mxu0 0.0
        %4337 = vmatpush1.msra.mxu0 0.0
        %4338 = vmatprep.subr.mxu0 0.0
        %4339 = vmatpush1.msra.mxu0 0.0
        %4340 = vmatprep.subr.mxu0 0.0
        %4341 = vmatpush1.msra.mxu0 0.0
        %4342 = vmatprep.subr.mxu0 0.0
        %4343 = vmatpush1.msra.mxu0 0.0
        %4344 = vmatprep.subr.mxu0 0.0
        %4345 = vmatpush1.msra.mxu0 0.0
        %4346 = vmatprep.subr.mxu0 0.0
        %4347 = vmatpush1.msra.mxu0 0.0
        %4348 = vmatprep.subr.mxu0 0.0
        %4349 = vmatpush1.msra.mxu0 0.0
        %4350 = vmatprep.subr.mxu0 0.0
        %4351 = vmatpush1.msra.mxu0 0.0
        %4352 = vmatprep.subr.mxu0 0.0
        %4353 = vmatpush1.msra.mxu0 0.0
        %4354 = vmatprep.mubr.f32.mxu0 0.0
        %4355 = vmatmul.mubr.f32.gmra.mrb[0].mxu0 %v4043
        %v4356 = vpop.f32.mrb[0].mxu0
        %v4357 = vadd.f32 0.0, %v4356
        %v4358 = vpop.f32.mrb[0].mxu0
        %v4359 = vadd.f32 0.0, %v4358
        %4360 = vdwg.mxu0
        %4361 = vmatprep.subr.mxu0 %v483
        %4362 = vmatpush1.msra.mxu0 %v482
        %4363 = vmatprep.subr.mxu0 %v487
        %4364 = vmatpush1.msra.mxu0 %v486
        %4365 = vmatprep.subr.mxu0 %v491
        %4366 = vmatpush1.msra.mxu0 %v490
        %4367 = vmatprep.subr.mxu0 %v495
        %4368 = vmatpush1.msra.mxu0 %v494
        %4369 = vmatprep.subr.mxu0 %v499
        %4370 = vmatpush1.msra.mxu0 %v498
        %4371 = vmatprep.subr.mxu0 %v503
        %4372 = vmatpush1.msra.mxu0 %v502
        %4373 = vmatprep.subr.mxu0 %v507
        %4374 = vmatpush1.msra.mxu0 %v506
        %4375 = vmatprep.subr.mxu0 %v511
        %4376 = vmatpush1.msra.mxu0 %v510
        %4377 = vmatprep.subr.mxu0 %v515
        %4378 = vmatpush1.msra.mxu0 %v514
        %4379 = vmatprep.subr.mxu0 %v519
        %4380 = vmatpush1.msra.mxu0 %v518
        %4381 = vmatprep.subr.mxu0 %v523
        %4382 = vmatpush1.msra.mxu0 %v522
        %4383 = vmatprep.subr.mxu0 %v527
        %4384 = vmatpush1.msra.mxu0 %v526
        %4385 = vmatprep.subr.mxu0 %v531
        %4386 = vmatpush1.msra.mxu0 %v530
        %4387 = vmatprep.subr.mxu0 %v535
        %4388 = vmatpush1.msra.mxu0 %v534
        %4389 = vmatprep.subr.mxu0 %v539
        %4390 = vmatpush1.msra.mxu0 %v538
        %4391 = vmatprep.subr.mxu0 %v543
        %4392 = vmatpush1.msra.mxu0 %v542
        %4393 = vmatprep.subr.mxu0 0.0
        %4394 = vmatpush1.msra.mxu0 0.0
        %4395 = vmatprep.subr.mxu0 0.0
        %4396 = vmatpush1.msra.mxu0 0.0
        %4397 = vmatprep.subr.mxu0 0.0
        %4398 = vmatpush1.msra.mxu0 0.0
        %4399 = vmatprep.subr.mxu0 0.0
        %4400 = vmatpush1.msra.mxu0 0.0
        %4401 = vmatprep.subr.mxu0 0.0
        %4402 = vmatpush1.msra.mxu0 0.0
        %4403 = vmatprep.subr.mxu0 0.0
        %4404 = vmatpush1.msra.mxu0 0.0
        %4405 = vmatprep.subr.mxu0 0.0
        %4406 = vmatpush1.msra.mxu0 0.0
        %4407 = vmatprep.subr.mxu0 0.0
        %4408 = vmatpush1.msra.mxu0 0.0
        %4409 = vmatprep.subr.mxu0 0.0
        %4410 = vmatpush1.msra.mxu0 0.0
        %4411 = vmatprep.subr.mxu0 0.0
        %4412 = vmatpush1.msra.mxu0 0.0
        %4413 = vmatprep.subr.mxu0 0.0
        %4414 = vmatpush1.msra.mxu0 0.0
        %4415 = vmatprep.subr.mxu0 0.0
        %4416 = vmatpush1.msra.mxu0 0.0
        %4417 = vmatprep.subr.mxu0 0.0
        %4418 = vmatpush1.msra.mxu0 0.0
        %4419 = vmatprep.subr.mxu0 0.0
        %4420 = vmatpush1.msra.mxu0 0.0
        %4421 = vmatprep.subr.mxu0 0.0
        %4422 = vmatpush1.msra.mxu0 0.0
        %4423 = vmatprep.subr.mxu0 0.0
        %4424 = vmatpush1.msra.mxu0 0.0
        %4425 = vmatprep.mubr.f32.mxu0 0.0
        %4426 = vmatmul.mubr.f32.gmra.mrb[0].mxu0 %v4218
        %v4427 = vpop.f32.mrb[0].mxu0
        %v4428 = vadd.f32 %v4286, %v4427
        %v4429 = vpop.f32.mrb[0].mxu0
        %v4430 = vadd.f32 %v4288, %v4429
        %4431 = vdwg.mxu0
        %4432 = vmatprep.subr.mxu0 %v485
        %4433 = vmatpush1.msra.mxu0 %v484
        %4434 = vmatprep.subr.mxu0 %v489
        %4435 = vmatpush1.msra.mxu0 %v488
        %4436 = vmatprep.subr.mxu0 %v493
        %4437 = vmatpush1.msra.mxu0 %v492
        %4438 = vmatprep.subr.mxu0 %v497
        %4439 = vmatpush1.msra.mxu0 %v496
        %4440 = vmatprep.subr.mxu0 %v501
        %4441 = vmatpush1.msra.mxu0 %v500
        %4442 = vmatprep.subr.mxu0 %v505
        %4443 = vmatpush1.msra.mxu0 %v504
        %4444 = vmatprep.subr.mxu0 %v509
        %4445 = vmatpush1.msra.mxu0 %v508
        %4446 = vmatprep.subr.mxu0 %v513
        %4447 = vmatpush1.msra.mxu0 %v512
        %4448 = vmatprep.subr.mxu0 %v517
        %4449 = vmatpush1.msra.mxu0 %v516
        %4450 = vmatprep.subr.mxu0 %v521
        %4451 = vmatpush1.msra.mxu0 %v520
        %4452 = vmatprep.subr.mxu0 %v525
        %4453 = vmatpush1.msra.mxu0 %v524
        %4454 = vmatprep.subr.mxu0 %v529
        %4455 = vmatpush1.msra.mxu0 %v528
        %4456 = vmatprep.subr.mxu0 %v533
        %4457 = vmatpush1.msra.mxu0 %v532
        %4458 = vmatprep.subr.mxu0 %v537
        %4459 = vmatpush1.msra.mxu0 %v536
        %4460 = vmatprep.subr.mxu0 %v541
        %4461 = vmatpush1.msra.mxu0 %v540
        %4462 = vmatprep.subr.mxu0 %v545
        %4463 = vmatpush1.msra.mxu0 %v544
        %4464 = vmatprep.subr.mxu0 0.0
        %4465 = vmatpush1.msra.mxu0 0.0
        %4466 = vmatprep.subr.mxu0 0.0
        %4467 = vmatpush1.msra.mxu0 0.0
        %4468 = vmatprep.subr.mxu0 0.0
        %4469 = vmatpush1.msra.mxu0 0.0
        %4470 = vmatprep.subr.mxu0 0.0
        %4471 = vmatpush1.msra.mxu0 0.0
        %4472 = vmatprep.subr.mxu0 0.0
        %4473 = vmatpush1.msra.mxu0 0.0
        %4474 = vmatprep.subr.mxu0 0.0
        %4475 = vmatpush1.msra.mxu0 0.0
        %4476 = vmatprep.subr.mxu0 0.0
        %4477 = vmatpush1.msra.mxu0 0.0
        %4478 = vmatprep.subr.mxu0 0.0
        %4479 = vmatpush1.msra.mxu0 0.0
        %4480 = vmatprep.subr.mxu0 0.0
        %4481 = vmatpush1.msra.mxu0 0.0
        %4482 = vmatprep.subr.mxu0 0.0
        %4483 = vmatpush1.msra.mxu0 0.0
        %4484 = vmatprep.subr.mxu0 0.0
        %4485 = vmatpush1.msra.mxu0 0.0
        %4486 = vmatprep.subr.mxu0 0.0
        %4487 = vmatpush1.msra.mxu0 0.0
        %4488 = vmatprep.subr.mxu0 0.0
        %4489 = vmatpush1.msra.mxu0 0.0
        %4490 = vmatprep.subr.mxu0 0.0
        %4491 = vmatpush1.msra.mxu0 0.0
        %4492 = vmatprep.subr.mxu0 0.0
        %4493 = vmatpush1.msra.mxu0 0.0
        %4494 = vmatprep.subr.mxu0 0.0
        %4495 = vmatpush1.msra.mxu0 0.0
        %4496 = vmatprep.mubr.f32.mxu0 0.0
        %4497 = vmatmul.mubr.f32.gmra.mrb[0].mxu0 %v4218
        %v4498 = vpop.f32.mrb[0].mxu0
        %v4499 = vadd.f32 %v4357, %v4498
        %v4500 = vpop.f32.mrb[0].mxu0
        %v4501 = vadd.f32 %v4359, %v4500
        %4502 = vdwg.mxu0
        %v4503 = vadd.f32 %v4428, %v1077
        %v4504 = vadd.f32 %v4430, %v1081
        %v4505 = vadd.f32 %v4499, %v1085
        %v4506 = vadd.f32 %v4501, %v1089
        %v4507 = vxor.u32 %v4503, 2147483648
        %v4508 = vxor.u32 %v4504, 2147483648
        %v4509 = vxor.u32 %v4505, 2147483648
        %v4510 = vmul.f32 %v4507, 1.442695
        %v4511 = vpow.pop %v4510
        %v4512 = vmul.f32 %v4508, 1.442695
        %v4513 = vpow.pop %v4512
        %v4514 = vmul.f32 %v4509, 1.442695
        %v4515 = vpow.pop %v4514
        %v4516 = vadd.f32 %v4511, 1.0
        %v4517 = vadd.f32 %v4513, 1.0
        %v4518 = vadd.f32 %v4515, 1.0
        %v4519 = vrcp.pop %v4516
        %v4520 = vmul.f32 1.0, %v4519
        %v4521 = vrcp.pop %v4517
        %v4522 = vmul.f32 1.0, %v4521
        %v4523 = vrcp.pop %v4518
        %v4524 = vmul.f32 1.0, %v4523
        %v4525 = vtanh.pop %v4506
        %v4526 = vmul.f32 %v4522, %v4041
        %v4527 = vmul.f32 %v4520, %v4525
        %v4528 = vadd.f32 %v4526, %v4527
        %v4529 = vtanh.pop %v4528
        %v4530 = vmul.f32 %v4524, %v4529
        %4531 = vst [vmem:[#allocation2] sm:$0xff] %v4218
        %4532 = vst [vmem:[#allocation3] sm:$0xff] %v4216
        %4533 = vst [vmem:[#allocation4] sm:$0xff] %v4530
        %4534 = vst [vmem:[#allocation5] sm:$0xff] %v4528
        %p4535 = scmp.eq.s32.totalorder %s31, 1
        // Predicated region
        $region77: #{lstm_net_forward.1} parent=47 // pred_check
          %p4536 = pneg %p4535
        $region78: #{lstm_net_forward.1} parent=47 // pred_check_branch
          %4538 = sbr.rel (%p4536) target = $region80
        $region79: #{lstm_net_forward.1} parent=47 // pred_region
          %v4539 = vmax.f32 %v4530, 0.0
          %v4540 = vld [vmem:[#allocation16] sm:$0xff]
          %v4541 = vld [vmem:[#allocation16 + $0x8] sm:$0xff]
          %v4542 = vld [vmem:[#allocation16 + $0x10] sm:$0xff]
          %v4543 = vld [vmem:[#allocation16 + $0x18] sm:$0xff]
          %v4544 = vld [vmem:[#allocation16 + $0x20] sm:$0xff]
          %v4545 = vld [vmem:[#allocation16 + $0x28] sm:$0xff]
          %v4546 = vld [vmem:[#allocation16 + $0x30] sm:$0xff]
          %v4547 = vld [vmem:[#allocation16 + $0x38] sm:$0xff]
          %v4548 = vld [vmem:[#allocation16 + $0x40] sm:$0xff]
          %v4549 = vld [vmem:[#allocation16 + $0x48] sm:$0xff]
          %v4550 = vld [vmem:[#allocation16 + $0x50] sm:$0xff]
          %v4551 = vld [vmem:[#allocation16 + $0x58] sm:$0xff]
          %v4552 = vld [vmem:[#allocation16 + $0x60] sm:$0xff]
          %v4553 = vld [vmem:[#allocation16 + $0x68] sm:$0xff]
          %v4554 = vld [vmem:[#allocation16 + $0x70] sm:$0xff]
          %v4555 = vld [vmem:[#allocation16 + $0x78] sm:$0xff]
          %v4556 = vld [vmem:[#allocation6] sm:$0x1]
          %v4558 = vlaneseq
          %v4559 = vshrl.u32 %v4558, 7
          %v4560 = vsub.s32 0, %v4559
          %v4561 = vrot.slane %v4556, %v4560
          %4563 = vmatprep.subr.mxu0 0.0
          %4564 = vmatpush1.msra.mxu0 %v4540
          %4565 = vmatprep.subr.mxu0 0.0
          %4566 = vmatpush1.msra.mxu0 %v4541
          %4567 = vmatprep.subr.mxu0 0.0
          %4568 = vmatpush1.msra.mxu0 %v4542
          %4569 = vmatprep.subr.mxu0 0.0
          %4570 = vmatpush1.msra.mxu0 %v4543
          %4571 = vmatprep.subr.mxu0 0.0
          %4572 = vmatpush1.msra.mxu0 %v4544
          %4573 = vmatprep.subr.mxu0 0.0
          %4574 = vmatpush1.msra.mxu0 %v4545
          %4575 = vmatprep.subr.mxu0 0.0
          %4576 = vmatpush1.msra.mxu0 %v4546
          %4577 = vmatprep.subr.mxu0 0.0
          %4578 = vmatpush1.msra.mxu0 %v4547
          %4579 = vmatprep.subr.mxu0 0.0
          %4580 = vmatpush1.msra.mxu0 %v4548
          %4581 = vmatprep.subr.mxu0 0.0
          %4582 = vmatpush1.msra.mxu0 %v4549
          %4583 = vmatprep.subr.mxu0 0.0
          %4584 = vmatpush1.msra.mxu0 %v4550
          %4585 = vmatprep.subr.mxu0 0.0
          %4586 = vmatpush1.msra.mxu0 %v4551
          %4587 = vmatprep.subr.mxu0 0.0
          %4588 = vmatpush1.msra.mxu0 %v4552
          %4589 = vmatprep.subr.mxu0 0.0
          %4590 = vmatpush1.msra.mxu0 %v4553
          %4591 = vmatprep.subr.mxu0 0.0
          %4592 = vmatpush1.msra.mxu0 %v4554
          %4593 = vmatprep.subr.mxu0 0.0
          %4594 = vmatpush1.msra.mxu0 %v4555
          %4595 = vmatprep.subr.mxu0 0.0
          %4596 = vmatpush1.msra.mxu0 0.0
          %4597 = vmatprep.subr.mxu0 0.0
          %4598 = vmatpush1.msra.mxu0 0.0
          %4599 = vmatprep.subr.mxu0 0.0
          %4600 = vmatpush1.msra.mxu0 0.0
          %4601 = vmatprep.subr.mxu0 0.0
          %4602 = vmatpush1.msra.mxu0 0.0
          %4603 = vmatprep.subr.mxu0 0.0
          %4604 = vmatpush1.msra.mxu0 0.0
          %4605 = vmatprep.subr.mxu0 0.0
          %4606 = vmatpush1.msra.mxu0 0.0
          %4607 = vmatprep.subr.mxu0 0.0
          %4608 = vmatpush1.msra.mxu0 0.0
          %4609 = vmatprep.subr.mxu0 0.0
          %4610 = vmatpush1.msra.mxu0 0.0
          %4611 = vmatprep.subr.mxu0 0.0
          %4612 = vmatpush1.msra.mxu0 0.0
          %4613 = vmatprep.subr.mxu0 0.0
          %4614 = vmatpush1.msra.mxu0 0.0
          %4615 = vmatprep.subr.mxu0 0.0
          %4616 = vmatpush1.msra.mxu0 0.0
          %4617 = vmatprep.subr.mxu0 0.0
          %4618 = vmatpush1.msra.mxu0 0.0
          %4619 = vmatprep.subr.mxu0 0.0
          %4620 = vmatpush1.msra.mxu0 0.0
          %4621 = vmatprep.subr.mxu0 0.0
          %4622 = vmatpush1.msra.mxu0 0.0
          %4623 = vmatprep.subr.mxu0 0.0
          %4624 = vmatpush1.msra.mxu0 0.0
          %4625 = vmatprep.subr.mxu0 0.0
          %4626 = vmatpush1.msra.mxu0 0.0
          %4627 = vmatprep.mubr.f32.mxu0 0.0
          %4628 = vmatmul.mubr.f32.gmra.mrb[0].mxu0 %v4539
          %v4629 = vpop.f32.mrb[0].mxu0
          %v4630 = vadd.f32 %v4561, %v4629
          %v4631 = vpop.f32.mrb[0].mxu0
          %4632 = vdwg.mxu0
          %vm4633 = vcmask 7168
          %4634 = vst.msk [vmem:[#allocation18] sm:$0xff] %vm4633, %v4630
          %4635 = vst [vmem:[#allocation19] sm:$0xff] %v4218
          %s4636 = scalar_lea.vmem [#allocation19], 8
          %4637 = vst [vmem:[%s4636] sm:$0xff] %v4530
          %4638 = vst [vmem:[#allocation21] sm:$0xff] %v4216
          %s4639 = scalar_lea.vmem [#allocation21], 8
          %4640 = vst [vmem:[%s4639] sm:$0xff] %v4528
        $region80: #{lstm_net_forward.1} parent=47 // pred_fallthru
          _
        // Predicated region
        $region81: #{lstm_net_forward.1} parent=47 // pred_check
          %p4641 = pneg %p196
        $region82: #{lstm_net_forward.1} parent=47 // pred_check_branch
          %4643 = sbr.rel (%p4641) target = $region84
        $region83: #{lstm_net_forward.1} parent=47 // pred_region
          %s4645 = ssub.s32 128, 128
          %4646 = vsyncadd [#allocation9], %s4645
          %s4648 = sshll.u32 [#allocation18], 4
          %s4649 = int_to_ptr.vmem [resolvable:$true] %s4648
          %4651 = dma.vmem_to_hbm [thread:$0]  %s4649, 128, %s7, [#allocation9]
        $region84: #{lstm_net_forward.1} parent=47 // pred_fallthru
          _
        // Predicated region
        $region85: #{lstm_net_forward.1} parent=47 // pred_check
          %p4652 = pneg %p217
        $region86: #{lstm_net_forward.1} parent=47 // pred_check_branch
          %4654 = sbr.rel (%p4652) target = $region88
        $region87: #{lstm_net_forward.1} parent=47 // pred_region
          %s4656 = ssub.s32 256, 256
          %4657 = vsyncadd [#allocation20], %s4656
          %s4658 = sshll.u32 [#allocation19], 4
          %s4659 = int_to_ptr.vmem [resolvable:$true] %s4658
          %4664 = dma.vmem_to_hbm [thread:$0]  %s4659, 256, %s8, [#allocation20], 128, 128, 8
        $region88: #{lstm_net_forward.1} parent=47 // pred_fallthru
          _
        // Predicated region
        $region89: #{lstm_net_forward.1} parent=47 // pred_check
          %p4665 = pneg %p238
        $region90: #{lstm_net_forward.1} parent=47 // pred_check_branch
          %4667 = sbr.rel (%p4665) target = $region92
        $region91: #{lstm_net_forward.1} parent=47 // pred_region
          %s4669 = ssub.s32 256, 256
          %4670 = vsyncadd [#allocation20], %s4669
          %s4671 = sshll.u32 [#allocation21], 4
          %s4672 = int_to_ptr.vmem [resolvable:$true] %s4671
          %4677 = dma.vmem_to_hbm [thread:$0]  %s4672, 256, %s9, [#allocation20], 128, 128, 8
        $region92: #{lstm_net_forward.1} parent=47 // pred_fallthru
          _
        // Predicated region
        $region93: #{lstm_net_forward.1} parent=47 // pred_check
          %p4678 = pneg %p196
        $region94: #{lstm_net_forward.1} parent=47 // pred_check_branch
          %4680 = sbr.rel (%p4678) target = $region96
        $region95: #{lstm_net_forward.1} parent=47 // pred_region
          %4681 = dma.done [#allocation9], 128
        $region96: #{lstm_net_forward.1} parent=47 // pred_fallthru
          _
        // Predicated region
        $region97: #{lstm_net_forward.1} parent=47 // pred_check
          %p4682 = pneg %p217
        $region98: #{lstm_net_forward.1} parent=47 // pred_check_branch
          %4684 = sbr.rel (%p4682) target = $region100
        $region99: #{lstm_net_forward.1} parent=47 // pred_region
          %4685 = dma.done [#allocation20], 256
        $region100: #{lstm_net_forward.1} parent=47 // pred_fallthru
          _
        // Predicated region
        $region101: #{lstm_net_forward.1} parent=47 // pred_check
          %p4686 = pneg %p238
        $region102: #{lstm_net_forward.1} parent=47 // pred_check_branch
          %4688 = sbr.rel (%p4686) target = $region104
        $region103: #{lstm_net_forward.1} parent=47 // pred_region
          %4689 = dma.done [#allocation20], 256
        $region104: #{lstm_net_forward.1} parent=47 // pred_fallthru
          _
      $region48: #{lstm_net_forward.1} parent=5 // pred_fallthru
        _
      %p4690 = scmp.le.s32.totalorder 2, %s26
      // Predicated region
      $region105: #{lstm_net_forward.1} parent=5 // pred_check
        %p4691 = pneg %p4690
      $region106: #{lstm_net_forward.1} parent=5 // pred_check_branch
        %4693 = sbr.rel (%p4691) target = $region108
      $region107: #{lstm_net_forward.1} parent=5 // pred_region
        %s4694 = ssub.s32 %s26, 2
      $region108: #{lstm_net_forward.1} parent=5 // pred_fallthru
        _
    $region6: #{lstm_net_forward.1} parent=1 // loop_footer
      %s30 = sadd.s32 1, %s26
    $region7: #{lstm_net_forward.1} parent=1 // loop_footer_branch
      %25 = sbr.rel target = $region3
    $region8: #{lstm_net_forward.1} parent=1 // loop_exit
      _
    %4695 = vsyncpa [#allocation8], 1
    %s4696 = scalar_lea.sflag [#allocation8], 1
    %4697 = vsyncpa %s4696, 1
    %4698 = vsyncpa [#allocation11], 1
    %4699 = vsyncpa [#allocation14], 1
    %4700 = vsyncpa [#allocation17], 1
    %4701 = vsyncpa [#allocation9], 1
    %s4702 = scalar_lea.sflag [#allocation9], 1
    %4703 = vsyncpa %s4702, 1
    %4704 = vsyncpa [#allocation20], 1

</llo_original>
